<compile_context>
chip_gen: v6e
topology: v6e:2x2x1
jax: 0.10.0
libtpu: 0.0.40
codegen_flags: <defaults>
</compile_context>

<pallas_src>
import functools

import jax
import jax.numpy as jnp
import numpy as np
from jax.experimental import pallas as pl
from jax.experimental.pallas import tpu as pltpu


def _se_kernel(x_ref, w1_ref, b1_ref, w2_ref, b2_ref, f1t_ref, f2_ref,
               o_ref, xc1_ref, xc2_ref, *, H, W, C, K):
    """Per-image SE block in channels-major (C, H*W) layout.

    x_ref  : (1, C, H*W) f32   one image per grid step
    w1_ref : (C, K*K*C)  bf16  conv1 weights, taps stacked along contraction
    b1_ref : (C, 1)      f32
    w2_ref : (C, K*K*C)  bf16
    b2_ref : (C, 1)      f32
    f1t_ref: (C, C//r)   f32   fc1 weight transposed to (in, out)
    f2_ref : (C, C//r)   f32   fc2 weight in PyTorch (out, in) layout
    o_ref  : (1, C, H*W) f32
    xc1_ref: (K*K*C, Q1) bf16  VMEM im2col scratch for conv1
    xc2_ref: (K*K*C, Q2) bf16  VMEM im2col scratch for conv2
    """
    H1, W1 = H - K + 1, W - K + 1          # after conv1
    H2, W2 = H1 - K + 1, W1 - K + 1        # after conv2
    Q1 = (H1 - 1) * W + W1                 # flattened conv1 rows needed
    Q2 = (H2 - 1) * W + W2                 # flattened conv2 rows produced
    inv_area = 1.0 / float(H2 * W2)

    x = x_ref[0]                           # (C, H*W) f32, lane-dense
    xb = x.astype(jnp.bfloat16)

    # ---- conv1: im2col into VMEM (sublane index = tap*C + c_in), then a
    # single stacked MXU matmul (C, 25C) @ (25C, Q1), f32 accumulation.
    for kh in range(K):
        for kw in range(K):
            t = kh * K + kw
            off = kh * W + kw              # full-width shift trick
            xc1_ref[t * C:(t + 1) * C, :] = xb[:, off:off + Q1]
    out1 = jnp.dot(w1_ref[...], xc1_ref[...],
                   preferred_element_type=jnp.float32)            # (C, Q1)
    a1 = jnp.maximum(out1 + b1_ref[...], 0.0).astype(jnp.bfloat16)

    # ---- conv2: same stacked-matmul structure over the conv1 activations.
    for kh in range(K):
        for kw in range(K):
            t = kh * K + kw
            off = kh * W + kw
            xc2_ref[t * C:(t + 1) * C, :] = a1[:, off:off + Q2]
    out2 = jnp.dot(w2_ref[...], xc2_ref[...],
                   preferred_element_type=jnp.float32) + b2_ref[...]  # (C, Q2)

    # ---- global average pool over the valid (H2, W2) window.  The full-width
    # trick leaves wrapped garbage in columns with (q mod W) >= W2; those
    # columns never feed valid outputs and are masked out of the mean.
    q_idx = jax.lax.broadcasted_iota(jnp.int32, (1, Q2), 1)
    valid = (q_idx % W) < W2
    pooled = jnp.sum(jnp.where(valid, out2, 0.0), axis=1,
                     keepdims=True) * inv_area                    # (C, 1) f32

    # ---- SE MLP on the VPU (C//r is tiny): Linear -> ReLU -> Linear -> Sigmoid.
    h = jnp.maximum(jnp.sum(f1t_ref[...] * pooled, axis=0, keepdims=True), 0.0)
    g = jax.nn.sigmoid(jnp.sum(f2_ref[...] * h, axis=1, keepdims=True))  # (C,1)

    # ---- rescale the ORIGINAL f32 input; store is lane-dense (H*W lanes).
    o_ref[0] = (x * g).astype(o_ref.dtype)


def se_layer(x_nchw, kernel_params, K=5):
    """x_nchw: (B, C, H, W) float32; kernel_params already in kernel layout."""
    w1s, b1c, w2s, b2c, f1t, f2k = kernel_params
    B, C, H, W = x_nchw.shape
    HW = H * W
    H1, W1 = H - K + 1, W - K + 1
    H2, W2 = H1 - K + 1, W1 - K + 1
    Q1 = (H1 - 1) * W + W1
    Q2 = (H2 - 1) * W + W2

    x_flat = x_nchw.reshape(B, C, HW)      # contiguous reshape, no transpose

    kernel = functools.partial(_se_kernel, H=H, W=W, C=C, K=K)
    out_flat = pl.pallas_call(
        kernel,
        out_shape=jax.ShapeDtypeStruct((B, C, HW), x_nchw.dtype),
        grid_spec=pltpu.PrefetchScalarGridSpec(
            num_scalar_prefetch=0,
            grid=(B,),
            in_specs=[
                pl.BlockSpec((1, C, HW), lambda b: (b, 0, 0)),        # x
                pl.BlockSpec((C, K * K * C), lambda b: (0, 0)),       # w1 (resident)
                pl.BlockSpec((C, 1), lambda b: (0, 0)),               # b1
                pl.BlockSpec((C, K * K * C), lambda b: (0, 0)),       # w2 (resident)
                pl.BlockSpec((C, 1), lambda b: (0, 0)),               # b2
                pl.BlockSpec(f1t.shape, lambda b: (0, 0)),            # fc1^T
                pl.BlockSpec(f2k.shape, lambda b: (0, 0)),            # fc2
            ],
            out_specs=pl.BlockSpec((1, C, HW), lambda b: (b, 0, 0)),
            scratch_shapes=[
                pltpu.VMEM((K * K * C, Q1), jnp.bfloat16),            # im2col conv1
                pltpu.VMEM((K * K * C, Q2), jnp.bfloat16),            # im2col conv2
            ],
        ),
        compiler_params=pltpu.CompilerParams(
            dimension_semantics=("parallel",),
            vmem_limit_bytes=32 * 1024 * 1024,
        ),
    )(x_flat, w1s, b1c, w2s, b2c, f1t, f2k)

    return out_flat.reshape(B, C, H, W)


def se_reference_f32(x, torch_params):
    """Exact f32 (HIGHEST) pure-JAX reference of the PyTorch module."""
    w1_t, b1, w2_t, b2, f1_t, f2_t = torch_params
    hp = jax.lax.Precision.HIGHEST

    def conv(inp, w, b):
        out = jax.lax.conv_general_dilated(
            inp, w, (1, 1), 'VALID',
            dimension_numbers=('NCHW', 'OIHW', 'NCHW'), precision=hp)
        return out + b.reshape(1, -1, 1, 1)

    x1 = jnp.maximum(conv(x, w1_t, b1), 0.0)
    x1 = conv(x1, w2_t, b2)
    y = jnp.mean(x1, axis=(2, 3))
    h = jnp.maximum(jnp.matmul(y, f1_t.T, precision=hp), 0.0)
    g = jax.nn.sigmoid(jnp.matmul(h, f2_t.T, precision=hp))
    return x * g[:, :, None, None]


def se_reference_bf16(x, torch_params):
    """Reference matching the kernel's numerics (bf16 conv inputs, f32 accum)."""
    w1_t, b1, w2_t, b2, f1_t, f2_t = torch_params
    hp = jax.lax.Precision.HIGHEST

    def conv_bf16(inp, w, b):
        out = jax.lax.conv_general_dilated(
            inp.astype(jnp.bfloat16), w.astype(jnp.bfloat16), (1, 1), 'VALID',
            dimension_numbers=('NCHW', 'OIHW', 'NCHW'),
            preferred_element_type=jnp.float32)
        return out + b.reshape(1, -1, 1, 1)

    x1 = jnp.maximum(conv_bf16(x, w1_t, b1), 0.0)
    x1 = conv_bf16(x1, w2_t, b2)
    y = jnp.mean(x1, axis=(2, 3))
    h = jnp.maximum(jnp.matmul(y, f1_t.T, precision=hp), 0.0)   # MLP in exact f32
    g = jax.nn.sigmoid(jnp.matmul(h, f2_t.T, precision=hp))
    return x * g[:, :, None, None]


if __name__ == "__main__":
    B, C, H, W = 2, 32, 16, 16
    K, reduction = 5, 16
    Ch = C // reduction

    key = jax.random.PRNGKey(0)
    ks = jax.random.split(key, 7)
    x = jax.random.normal(ks[0], (B, C, H, W), jnp.float32)

    # Deterministic synthetic parameters in PyTorch layouts (OIHW convs,
    # (out,in) linears), mirroring default uniform init bounds.
    kc = 1.0 / (C * K * K) ** 0.5
    w1_t = jax.random.uniform(ks[1], (C, C, K, K), jnp.float32, -kc, kc)
    b1 = jax.random.uniform(ks[2], (C,), jnp.float32, -kc, kc)
    w2_t = jax.random.uniform(ks[3], (C, C, K, K), jnp.float32, -kc, kc)
    b2 = jax.random.uniform(ks[4], (C,), jnp.float32, -kc, kc)
    f1_t = jax.random.uniform(ks[5], (Ch, C), jnp.float32,
                              -1.0 / C ** 0.5, 1.0 / C ** 0.5)
    f2_t = jax.random.uniform(ks[6], (C, Ch), jnp.float32,
                              -1.0 / Ch ** 0.5, 1.0 / Ch ** 0.5)
    torch_params = (w1_t, b1, w2_t, b2, f1_t, f2_t)

    # Kernel layouts: conv weights (C_out, (kh*K+kw)*C + c_in) in bf16,
    # biases (C, 1), fc1 transposed to (in, out), fc2 kept as (out, in).
    kernel_params = (
        jnp.transpose(w1_t, (0, 2, 3, 1)).reshape(C, K * K * C).astype(jnp.bfloat16),
        b1.reshape(C, 1),
        jnp.transpose(w2_t, (0, 2, 3, 1)).reshape(C, K * K * C).astype(jnp.bfloat16),
        b2.reshape(C, 1),
        f1_t.T,        # (C, Ch)
        f2_t,          # (C, Ch)
    )

    out = jax.block_until_ready(se_layer(x, kernel_params, K=K))
    ref_bf16 = jax.block_until_ready(se_reference_bf16(x, torch_params))
    ref_f32 = jax.block_until_ready(se_reference_f32(x, torch_params))

    assert out.shape == x.shape and out.dtype == x.dtype
    # Structural check against a numerics-matched (bf16 matmul, f32 accum) reference.
    np.testing.assert_allclose(np.asarray(out), np.asarray(ref_bf16),
                               rtol=2e-3, atol=2e-3)
    # Accuracy check against the exact-f32 PyTorch-equivalent math.
    np.testing.assert_allclose(np.asarray(out), np.asarray(ref_f32),
                               rtol=2e-2, atol=2e-2)
    print("KERNEL_OK")
</pallas_src>

<mosaic_0001>
module attributes {stable_mosaic.version = 11 : i64} {
  func.func @_se_kernel(%arg0: i32, %arg1: memref<1x32x256xf32, #tpu.memory_space<vmem>>, %arg2: memref<32x800xbf16, #tpu.memory_space<vmem>>, %arg3: memref<32x1xf32, #tpu.memory_space<vmem>>, %arg4: memref<32x800xbf16, #tpu.memory_space<vmem>>, %arg5: memref<32x1xf32, #tpu.memory_space<vmem>>, %arg6: memref<32x2xf32, #tpu.memory_space<vmem>>, %arg7: memref<32x2xf32, #tpu.memory_space<vmem>>, %arg8: memref<1x32x256xf32, #tpu.memory_space<vmem>>, %arg9: memref<800x188xbf16, #tpu.memory_space<vmem>>, %arg10: memref<800x120xbf16, #tpu.memory_space<vmem>>) attributes {dimension_semantics = [#tpu.dimension_semantics<parallel>], iteration_bounds = array<i64: 2>, scalar_prefetch = 0 : i64, scratch_operands = 2 : i64, tpu.core_type = #tpu.core_type<tc>, window_params = [{transform_indices = @transform_0, window_bounds = array<i64: 1, 32, 256>}, {pipeline_mode = #tpu.pipeline_mode<synchronous>, transform_indices = @transform_1, window_bounds = array<i64: 32, 800>}, {pipeline_mode = #tpu.pipeline_mode<synchronous>, transform_indices = @transform_2, window_bounds = array<i64: 32, 1>}, {pipeline_mode = #tpu.pipeline_mode<synchronous>, transform_indices = @transform_3, window_bounds = array<i64: 32, 800>}, {pipeline_mode = #tpu.pipeline_mode<synchronous>, transform_indices = @transform_4, window_bounds = array<i64: 32, 1>}, {pipeline_mode = #tpu.pipeline_mode<synchronous>, transform_indices = @transform_5, window_bounds = array<i64: 32, 2>}, {pipeline_mode = #tpu.pipeline_mode<synchronous>, transform_indices = @transform_6, window_bounds = array<i64: 32, 2>}, {transform_indices = @transform_7, window_bounds = array<i64: 1, 32, 256>}]} {
    %c0 = arith.constant 0 : index
    %c0_0 = arith.constant 0 : index
    %c0_1 = arith.constant 0 : index
    %0 = vector.load %arg1[%c0, %c0_0, %c0_1] : memref<1x32x256xf32, #tpu.memory_space<vmem>>, vector<1x32x256xf32>
    %1 = vector.shape_cast %0 : vector<1x32x256xf32> to vector<32x256xf32>
    %2 = arith.truncf %1 : vector<32x256xf32> to vector<32x256xbf16>
    %3 = vector.extract_strided_slice %2 {offsets = [0, 0], sizes = [32, 188], strides = [1, 1]} : vector<32x256xbf16> to vector<32x188xbf16>
    %c0_2 = arith.constant 0 : index
    %c0_3 = arith.constant 0 : index
    %4 = vector.load %arg9[%c0_2, %c0_3] : memref<800x188xbf16, #tpu.memory_space<vmem>>, vector<32x188xbf16>
    tpu.vector_store %arg9[%c0_2, %c0_3], %3 {strides = array<i32>} : memref<800x188xbf16, #tpu.memory_space<vmem>>, vector<32x188xbf16>,
    %5 = vector.extract_strided_slice %2 {offsets = [0, 1], sizes = [32, 188], strides = [1, 1]} : vector<32x256xbf16> to vector<32x188xbf16>
    %c32 = arith.constant 32 : index
    %c0_4 = arith.constant 0 : index
    %6 = vector.load %arg9[%c32, %c0_4] : memref<800x188xbf16, #tpu.memory_space<vmem>>, vector<32x188xbf16>
    tpu.vector_store %arg9[%c32, %c0_4], %5 {strides = array<i32>} : memref<800x188xbf16, #tpu.memory_space<vmem>>, vector<32x188xbf16>,
    %7 = vector.extract_strided_slice %2 {offsets = [0, 2], sizes = [32, 188], strides = [1, 1]} : vector<32x256xbf16> to vector<32x188xbf16>
    %c64 = arith.constant 64 : index
    %c0_5 = arith.constant 0 : index
    %8 = vector.load %arg9[%c64, %c0_5] : memref<800x188xbf16, #tpu.memory_space<vmem>>, vector<32x188xbf16>
    tpu.vector_store %arg9[%c64, %c0_5], %7 {strides = array<i32>} : memref<800x188xbf16, #tpu.memory_space<vmem>>, vector<32x188xbf16>,
    %9 = vector.extract_strided_slice %2 {offsets = [0, 3], sizes = [32, 188], strides = [1, 1]} : vector<32x256xbf16> to vector<32x188xbf16>
    %c96 = arith.constant 96 : index
    %c0_6 = arith.constant 0 : index
    %10 = vector.load %arg9[%c96, %c0_6] : memref<800x188xbf16, #tpu.memory_space<vmem>>, vector<32x188xbf16>
    tpu.vector_store %arg9[%c96, %c0_6], %9 {strides = array<i32>} : memref<800x188xbf16, #tpu.memory_space<vmem>>, vector<32x188xbf16>,
    %11 = vector.extract_strided_slice %2 {offsets = [0, 4], sizes = [32, 188], strides = [1, 1]} : vector<32x256xbf16> to vector<32x188xbf16>
    %c128 = arith.constant 128 : index
    %c0_7 = arith.constant 0 : index
    %12 = vector.load %arg9[%c128, %c0_7] : memref<800x188xbf16, #tpu.memory_space<vmem>>, vector<32x188xbf16>
    tpu.vector_store %arg9[%c128, %c0_7], %11 {strides = array<i32>} : memref<800x188xbf16, #tpu.memory_space<vmem>>, vector<32x188xbf16>,
    %13 = vector.extract_strided_slice %2 {offsets = [0, 16], sizes = [32, 188], strides = [1, 1]} : vector<32x256xbf16> to vector<32x188xbf16>
    %c160 = arith.constant 160 : index
    %c0_8 = arith.constant 0 : index
    %14 = vector.load %arg9[%c160, %c0_8] : memref<800x188xbf16, #tpu.memory_space<vmem>>, vector<32x188xbf16>
    tpu.vector_store %arg9[%c160, %c0_8], %13 {strides = array<i32>} : memref<800x188xbf16, #tpu.memory_space<vmem>>, vector<32x188xbf16>,
    %15 = vector.extract_strided_slice %2 {offsets = [0, 17], sizes = [32, 188], strides = [1, 1]} : vector<32x256xbf16> to vector<32x188xbf16>
    %c192 = arith.constant 192 : index
    %c0_9 = arith.constant 0 : index
    %16 = vector.load %arg9[%c192, %c0_9] : memref<800x188xbf16, #tpu.memory_space<vmem>>, vector<32x188xbf16>
    tpu.vector_store %arg9[%c192, %c0_9], %15 {strides = array<i32>} : memref<800x188xbf16, #tpu.memory_space<vmem>>, vector<32x188xbf16>,
    %17 = vector.extract_strided_slice %2 {offsets = [0, 18], sizes = [32, 188], strides = [1, 1]} : vector<32x256xbf16> to vector<32x188xbf16>
    %c224 = arith.constant 224 : index
    %c0_10 = arith.constant 0 : index
    %18 = vector.load %arg9[%c224, %c0_10] : memref<800x188xbf16, #tpu.memory_space<vmem>>, vector<32x188xbf16>
    tpu.vector_store %arg9[%c224, %c0_10], %17 {strides = array<i32>} : memref<800x188xbf16, #tpu.memory_space<vmem>>, vector<32x188xbf16>,
    %19 = vector.extract_strided_slice %2 {offsets = [0, 19], sizes = [32, 188], strides = [1, 1]} : vector<32x256xbf16> to vector<32x188xbf16>
    %c256 = arith.constant 256 : index
    %c0_11 = arith.constant 0 : index
    %20 = vector.load %arg9[%c256, %c0_11] : memref<800x188xbf16, #tpu.memory_space<vmem>>, vector<32x188xbf16>
    tpu.vector_store %arg9[%c256, %c0_11], %19 {strides = array<i32>} : memref<800x188xbf16, #tpu.memory_space<vmem>>, vector<32x188xbf16>,
    %21 = vector.extract_strided_slice %2 {offsets = [0, 20], sizes = [32, 188], strides = [1, 1]} : vector<32x256xbf16> to vector<32x188xbf16>
    %c288 = arith.constant 288 : index
    %c0_12 = arith.constant 0 : index
    %22 = vector.load %arg9[%c288, %c0_12] : memref<800x188xbf16, #tpu.memory_space<vmem>>, vector<32x188xbf16>
    tpu.vector_store %arg9[%c288, %c0_12], %21 {strides = array<i32>} : memref<800x188xbf16, #tpu.memory_space<vmem>>, vector<32x188xbf16>,
    %23 = vector.extract_strided_slice %2 {offsets = [0, 32], sizes = [32, 188], strides = [1, 1]} : vector<32x256xbf16> to vector<32x188xbf16>
    %c320 = arith.constant 320 : index
    %c0_13 = arith.constant 0 : index
    %24 = vector.load %arg9[%c320, %c0_13] : memref<800x188xbf16, #tpu.memory_space<vmem>>, vector<32x188xbf16>
    tpu.vector_store %arg9[%c320, %c0_13], %23 {strides = array<i32>} : memref<800x188xbf16, #tpu.memory_space<vmem>>, vector<32x188xbf16>,
    %25 = vector.extract_strided_slice %2 {offsets = [0, 33], sizes = [32, 188], strides = [1, 1]} : vector<32x256xbf16> to vector<32x188xbf16>
    %c352 = arith.constant 352 : index
    %c0_14 = arith.constant 0 : index
    %26 = vector.load %arg9[%c352, %c0_14] : memref<800x188xbf16, #tpu.memory_space<vmem>>, vector<32x188xbf16>
    tpu.vector_store %arg9[%c352, %c0_14], %25 {strides = array<i32>} : memref<800x188xbf16, #tpu.memory_space<vmem>>, vector<32x188xbf16>,
    %27 = vector.extract_strided_slice %2 {offsets = [0, 34], sizes = [32, 188], strides = [1, 1]} : vector<32x256xbf16> to vector<32x188xbf16>
    %c384 = arith.constant 384 : index
    %c0_15 = arith.constant 0 : index
    %28 = vector.load %arg9[%c384, %c0_15] : memref<800x188xbf16, #tpu.memory_space<vmem>>, vector<32x188xbf16>
    tpu.vector_store %arg9[%c384, %c0_15], %27 {strides = array<i32>} : memref<800x188xbf16, #tpu.memory_space<vmem>>, vector<32x188xbf16>,
    %29 = vector.extract_strided_slice %2 {offsets = [0, 35], sizes = [32, 188], strides = [1, 1]} : vector<32x256xbf16> to vector<32x188xbf16>
    %c416 = arith.constant 416 : index
    %c0_16 = arith.constant 0 : index
    %30 = vector.load %arg9[%c416, %c0_16] : memref<800x188xbf16, #tpu.memory_space<vmem>>, vector<32x188xbf16>
    tpu.vector_store %arg9[%c416, %c0_16], %29 {strides = array<i32>} : memref<800x188xbf16, #tpu.memory_space<vmem>>, vector<32x188xbf16>,
    %31 = vector.extract_strided_slice %2 {offsets = [0, 36], sizes = [32, 188], strides = [1, 1]} : vector<32x256xbf16> to vector<32x188xbf16>
    %c448 = arith.constant 448 : index
    %c0_17 = arith.constant 0 : index
    %32 = vector.load %arg9[%c448, %c0_17] : memref<800x188xbf16, #tpu.memory_space<vmem>>, vector<32x188xbf16>
    tpu.vector_store %arg9[%c448, %c0_17], %31 {strides = array<i32>} : memref<800x188xbf16, #tpu.memory_space<vmem>>, vector<32x188xbf16>,
    %33 = vector.extract_strided_slice %2 {offsets = [0, 48], sizes = [32, 188], strides = [1, 1]} : vector<32x256xbf16> to vector<32x188xbf16>
    %c480 = arith.constant 480 : index
    %c0_18 = arith.constant 0 : index
    %34 = vector.load %arg9[%c480, %c0_18] : memref<800x188xbf16, #tpu.memory_space<vmem>>, vector<32x188xbf16>
    tpu.vector_store %arg9[%c480, %c0_18], %33 {strides = array<i32>} : memref<800x188xbf16, #tpu.memory_space<vmem>>, vector<32x188xbf16>,
    %35 = vector.extract_strided_slice %2 {offsets = [0, 49], sizes = [32, 188], strides = [1, 1]} : vector<32x256xbf16> to vector<32x188xbf16>
    %c512 = arith.constant 512 : index
    %c0_19 = arith.constant 0 : index
    %36 = vector.load %arg9[%c512, %c0_19] : memref<800x188xbf16, #tpu.memory_space<vmem>>, vector<32x188xbf16>
    tpu.vector_store %arg9[%c512, %c0_19], %35 {strides = array<i32>} : memref<800x188xbf16, #tpu.memory_space<vmem>>, vector<32x188xbf16>,
    %37 = vector.extract_strided_slice %2 {offsets = [0, 50], sizes = [32, 188], strides = [1, 1]} : vector<32x256xbf16> to vector<32x188xbf16>
    %c544 = arith.constant 544 : index
    %c0_20 = arith.constant 0 : index
    %38 = vector.load %arg9[%c544, %c0_20] : memref<800x188xbf16, #tpu.memory_space<vmem>>, vector<32x188xbf16>
    tpu.vector_store %arg9[%c544, %c0_20], %37 {strides = array<i32>} : memref<800x188xbf16, #tpu.memory_space<vmem>>, vector<32x188xbf16>,
    %39 = vector.extract_strided_slice %2 {offsets = [0, 51], sizes = [32, 188], strides = [1, 1]} : vector<32x256xbf16> to vector<32x188xbf16>
    %c576 = arith.constant 576 : index
    %c0_21 = arith.constant 0 : index
    %40 = vector.load %arg9[%c576, %c0_21] : memref<800x188xbf16, #tpu.memory_space<vmem>>, vector<32x188xbf16>
    tpu.vector_store %arg9[%c576, %c0_21], %39 {strides = array<i32>} : memref<800x188xbf16, #tpu.memory_space<vmem>>, vector<32x188xbf16>,
    %41 = vector.extract_strided_slice %2 {offsets = [0, 52], sizes = [32, 188], strides = [1, 1]} : vector<32x256xbf16> to vector<32x188xbf16>
    %c608 = arith.constant 608 : index
    %c0_22 = arith.constant 0 : index
    %42 = vector.load %arg9[%c608, %c0_22] : memref<800x188xbf16, #tpu.memory_space<vmem>>, vector<32x188xbf16>
    tpu.vector_store %arg9[%c608, %c0_22], %41 {strides = array<i32>} : memref<800x188xbf16, #tpu.memory_space<vmem>>, vector<32x188xbf16>,
    %43 = vector.extract_strided_slice %2 {offsets = [0, 64], sizes = [32, 188], strides = [1, 1]} : vector<32x256xbf16> to vector<32x188xbf16>
    %c640 = arith.constant 640 : index
    %c0_23 = arith.constant 0 : index
    %44 = vector.load %arg9[%c640, %c0_23] : memref<800x188xbf16, #tpu.memory_space<vmem>>, vector<32x188xbf16>
    tpu.vector_store %arg9[%c640, %c0_23], %43 {strides = array<i32>} : memref<800x188xbf16, #tpu.memory_space<vmem>>, vector<32x188xbf16>,
    %45 = vector.extract_strided_slice %2 {offsets = [0, 65], sizes = [32, 188], strides = [1, 1]} : vector<32x256xbf16> to vector<32x188xbf16>
    %c672 = arith.constant 672 : index
    %c0_24 = arith.constant 0 : index
    %46 = vector.load %arg9[%c672, %c0_24] : memref<800x188xbf16, #tpu.memory_space<vmem>>, vector<32x188xbf16>
    tpu.vector_store %arg9[%c672, %c0_24], %45 {strides = array<i32>} : memref<800x188xbf16, #tpu.memory_space<vmem>>, vector<32x188xbf16>,
    %47 = vector.extract_strided_slice %2 {offsets = [0, 66], sizes = [32, 188], strides = [1, 1]} : vector<32x256xbf16> to vector<32x188xbf16>
    %c704 = arith.constant 704 : index
    %c0_25 = arith.constant 0 : index
    %48 = vector.load %arg9[%c704, %c0_25] : memref<800x188xbf16, #tpu.memory_space<vmem>>, vector<32x188xbf16>
    tpu.vector_store %arg9[%c704, %c0_25], %47 {strides = array<i32>} : memref<800x188xbf16, #tpu.memory_space<vmem>>, vector<32x188xbf16>,
    %49 = vector.extract_strided_slice %2 {offsets = [0, 67], sizes = [32, 188], strides = [1, 1]} : vector<32x256xbf16> to vector<32x188xbf16>
    %c736 = arith.constant 736 : index
    %c0_26 = arith.constant 0 : index
    %50 = vector.load %arg9[%c736, %c0_26] : memref<800x188xbf16, #tpu.memory_space<vmem>>, vector<32x188xbf16>
    tpu.vector_store %arg9[%c736, %c0_26], %49 {strides = array<i32>} : memref<800x188xbf16, #tpu.memory_space<vmem>>, vector<32x188xbf16>,
    %51 = vector.extract_strided_slice %2 {offsets = [0, 68], sizes = [32, 188], strides = [1, 1]} : vector<32x256xbf16> to vector<32x188xbf16>
    %c768 = arith.constant 768 : index
    %c0_27 = arith.constant 0 : index
    %52 = vector.load %arg9[%c768, %c0_27] : memref<800x188xbf16, #tpu.memory_space<vmem>>, vector<32x188xbf16>
    tpu.vector_store %arg9[%c768, %c0_27], %51 {strides = array<i32>} : memref<800x188xbf16, #tpu.memory_space<vmem>>, vector<32x188xbf16>,
    %c0_28 = arith.constant 0 : index
    %c0_29 = arith.constant 0 : index
    %53 = vector.load %arg2[%c0_28, %c0_29] : memref<32x800xbf16, #tpu.memory_space<vmem>>, vector<32x800xbf16>
    %c0_30 = arith.constant 0 : index
    %c0_31 = arith.constant 0 : index
    %54 = vector.load %arg9[%c0_30, %c0_31] : memref<800x188xbf16, #tpu.memory_space<vmem>>, vector<800x188xbf16>
    %cst = arith.constant dense<0.000000e+00> : vector<32x188xf32>
    %55 = tpu.matmul %53, %54, %cst {dimension_numbers = #tpu.dot_dimension_numbers<[1], [0], [0], [1], [0, 0, 1, 1], [], []>} : vector<32x800xbf16>, vector<800x188xbf16>, vector<32x188xf32> -> vector<32x188xf32>
    %c0_32 = arith.constant 0 : index
    %c0_33 = arith.constant 0 : index
    %56 = vector.load %arg3[%c0_32, %c0_33] : memref<32x1xf32, #tpu.memory_space<vmem>>, vector<32x1xf32>
    %57 = vector.broadcast %56 : vector<32x1xf32> to vector<32x188xf32>
    %58 = arith.addf %55, %57 : vector<32x188xf32>
    %cst_34 = arith.constant 0.000000e+00 : f32
    %59 = vector.broadcast %cst_34 : f32 to vector<32x188xf32>
    %60 = arith.maximumf %58, %59 : vector<32x188xf32>
    %61 = arith.truncf %60 : vector<32x188xf32> to vector<32x188xbf16>
    %62 = vector.extract_strided_slice %61 {offsets = [0, 0], sizes = [32, 120], strides = [1, 1]} : vector<32x188xbf16> to vector<32x120xbf16>
    %c0_35 = arith.constant 0 : index
    %c0_36 = arith.constant 0 : index
    %63 = vector.load %arg10[%c0_35, %c0_36] : memref<800x120xbf16, #tpu.memory_space<vmem>>, vector<32x120xbf16>
    tpu.vector_store %arg10[%c0_35, %c0_36], %62 {strides = array<i32>} : memref<800x120xbf16, #tpu.memory_space<vmem>>, vector<32x120xbf16>,
    %64 = vector.extract_strided_slice %61 {offsets = [0, 1], sizes = [32, 120], strides = [1, 1]} : vector<32x188xbf16> to vector<32x120xbf16>
    %c32_37 = arith.constant 32 : index
    %c0_38 = arith.constant 0 : index
    %65 = vector.load %arg10[%c32_37, %c0_38] : memref<800x120xbf16, #tpu.memory_space<vmem>>, vector<32x120xbf16>
    tpu.vector_store %arg10[%c32_37, %c0_38], %64 {strides = array<i32>} : memref<800x120xbf16, #tpu.memory_space<vmem>>, vector<32x120xbf16>,
    %66 = vector.extract_strided_slice %61 {offsets = [0, 2], sizes = [32, 120], strides = [1, 1]} : vector<32x188xbf16> to vector<32x120xbf16>
    %c64_39 = arith.constant 64 : index
    %c0_40 = arith.constant 0 : index
    %67 = vector.load %arg10[%c64_39, %c0_40] : memref<800x120xbf16, #tpu.memory_space<vmem>>, vector<32x120xbf16>
    tpu.vector_store %arg10[%c64_39, %c0_40], %66 {strides = array<i32>} : memref<800x120xbf16, #tpu.memory_space<vmem>>, vector<32x120xbf16>,
    %68 = vector.extract_strided_slice %61 {offsets = [0, 3], sizes = [32, 120], strides = [1, 1]} : vector<32x188xbf16> to vector<32x120xbf16>
    %c96_41 = arith.constant 96 : index
    %c0_42 = arith.constant 0 : index
    %69 = vector.load %arg10[%c96_41, %c0_42] : memref<800x120xbf16, #tpu.memory_space<vmem>>, vector<32x120xbf16>
    tpu.vector_store %arg10[%c96_41, %c0_42], %68 {strides = array<i32>} : memref<800x120xbf16, #tpu.memory_space<vmem>>, vector<32x120xbf16>,
    %70 = vector.extract_strided_slice %61 {offsets = [0, 4], sizes = [32, 120], strides = [1, 1]} : vector<32x188xbf16> to vector<32x120xbf16>
    %c128_43 = arith.constant 128 : index
    %c0_44 = arith.constant 0 : index
    %71 = vector.load %arg10[%c128_43, %c0_44] : memref<800x120xbf16, #tpu.memory_space<vmem>>, vector<32x120xbf16>
    tpu.vector_store %arg10[%c128_43, %c0_44], %70 {strides = array<i32>} : memref<800x120xbf16, #tpu.memory_space<vmem>>, vector<32x120xbf16>,
    %72 = vector.extract_strided_slice %61 {offsets = [0, 16], sizes = [32, 120], strides = [1, 1]} : vector<32x188xbf16> to vector<32x120xbf16>
    %c160_45 = arith.constant 160 : index
    %c0_46 = arith.constant 0 : index
    %73 = vector.load %arg10[%c160_45, %c0_46] : memref<800x120xbf16, #tpu.memory_space<vmem>>, vector<32x120xbf16>
    tpu.vector_store %arg10[%c160_45, %c0_46], %72 {strides = array<i32>} : memref<800x120xbf16, #tpu.memory_space<vmem>>, vector<32x120xbf16>,
    %74 = vector.extract_strided_slice %61 {offsets = [0, 17], sizes = [32, 120], strides = [1, 1]} : vector<32x188xbf16> to vector<32x120xbf16>
    %c192_47 = arith.constant 192 : index
    %c0_48 = arith.constant 0 : index
    %75 = vector.load %arg10[%c192_47, %c0_48] : memref<800x120xbf16, #tpu.memory_space<vmem>>, vector<32x120xbf16>
    tpu.vector_store %arg10[%c192_47, %c0_48], %74 {strides = array<i32>} : memref<800x120xbf16, #tpu.memory_space<vmem>>, vector<32x120xbf16>,
    %76 = vector.extract_strided_slice %61 {offsets = [0, 18], sizes = [32, 120], strides = [1, 1]} : vector<32x188xbf16> to vector<32x120xbf16>
    %c224_49 = arith.constant 224 : index
    %c0_50 = arith.constant 0 : index
    %77 = vector.load %arg10[%c224_49, %c0_50] : memref<800x120xbf16, #tpu.memory_space<vmem>>, vector<32x120xbf16>
    tpu.vector_store %arg10[%c224_49, %c0_50], %76 {strides = array<i32>} : memref<800x120xbf16, #tpu.memory_space<vmem>>, vector<32x120xbf16>,
    %78 = vector.extract_strided_slice %61 {offsets = [0, 19], sizes = [32, 120], strides = [1, 1]} : vector<32x188xbf16> to vector<32x120xbf16>
    %c256_51 = arith.constant 256 : index
    %c0_52 = arith.constant 0 : index
    %79 = vector.load %arg10[%c256_51, %c0_52] : memref<800x120xbf16, #tpu.memory_space<vmem>>, vector<32x120xbf16>
    tpu.vector_store %arg10[%c256_51, %c0_52], %78 {strides = array<i32>} : memref<800x120xbf16, #tpu.memory_space<vmem>>, vector<32x120xbf16>,
    %80 = vector.extract_strided_slice %61 {offsets = [0, 20], sizes = [32, 120], strides = [1, 1]} : vector<32x188xbf16> to vector<32x120xbf16>
    %c288_53 = arith.constant 288 : index
    %c0_54 = arith.constant 0 : index
    %81 = vector.load %arg10[%c288_53, %c0_54] : memref<800x120xbf16, #tpu.memory_space<vmem>>, vector<32x120xbf16>
    tpu.vector_store %arg10[%c288_53, %c0_54], %80 {strides = array<i32>} : memref<800x120xbf16, #tpu.memory_space<vmem>>, vector<32x120xbf16>,
    %82 = vector.extract_strided_slice %61 {offsets = [0, 32], sizes = [32, 120], strides = [1, 1]} : vector<32x188xbf16> to vector<32x120xbf16>
    %c320_55 = arith.constant 320 : index
    %c0_56 = arith.constant 0 : index
    %83 = vector.load %arg10[%c320_55, %c0_56] : memref<800x120xbf16, #tpu.memory_space<vmem>>, vector<32x120xbf16>
    tpu.vector_store %arg10[%c320_55, %c0_56], %82 {strides = array<i32>} : memref<800x120xbf16, #tpu.memory_space<vmem>>, vector<32x120xbf16>,
    %84 = vector.extract_strided_slice %61 {offsets = [0, 33], sizes = [32, 120], strides = [1, 1]} : vector<32x188xbf16> to vector<32x120xbf16>
    %c352_57 = arith.constant 352 : index
    %c0_58 = arith.constant 0 : index
    %85 = vector.load %arg10[%c352_57, %c0_58] : memref<800x120xbf16, #tpu.memory_space<vmem>>, vector<32x120xbf16>
    tpu.vector_store %arg10[%c352_57, %c0_58], %84 {strides = array<i32>} : memref<800x120xbf16, #tpu.memory_space<vmem>>, vector<32x120xbf16>,
    %86 = vector.extract_strided_slice %61 {offsets = [0, 34], sizes = [32, 120], strides = [1, 1]} : vector<32x188xbf16> to vector<32x120xbf16>
    %c384_59 = arith.constant 384 : index
    %c0_60 = arith.constant 0 : index
    %87 = vector.load %arg10[%c384_59, %c0_60] : memref<800x120xbf16, #tpu.memory_space<vmem>>, vector<32x120xbf16>
    tpu.vector_store %arg10[%c384_59, %c0_60], %86 {strides = array<i32>} : memref<800x120xbf16, #tpu.memory_space<vmem>>, vector<32x120xbf16>,
    %88 = vector.extract_strided_slice %61 {offsets = [0, 35], sizes = [32, 120], strides = [1, 1]} : vector<32x188xbf16> to vector<32x120xbf16>
    %c416_61 = arith.constant 416 : index
    %c0_62 = arith.constant 0 : index
    %89 = vector.load %arg10[%c416_61, %c0_62] : memref<800x120xbf16, #tpu.memory_space<vmem>>, vector<32x120xbf16>
    tpu.vector_store %arg10[%c416_61, %c0_62], %88 {strides = array<i32>} : memref<800x120xbf16, #tpu.memory_space<vmem>>, vector<32x120xbf16>,
    %90 = vector.extract_strided_slice %61 {offsets = [0, 36], sizes = [32, 120], strides = [1, 1]} : vector<32x188xbf16> to vector<32x120xbf16>
    %c448_63 = arith.constant 448 : index
    %c0_64 = arith.constant 0 : index
    %91 = vector.load %arg10[%c448_63, %c0_64] : memref<800x120xbf16, #tpu.memory_space<vmem>>, vector<32x120xbf16>
    tpu.vector_store %arg10[%c448_63, %c0_64], %90 {strides = array<i32>} : memref<800x120xbf16, #tpu.memory_space<vmem>>, vector<32x120xbf16>,
    %92 = vector.extract_strided_slice %61 {offsets = [0, 48], sizes = [32, 120], strides = [1, 1]} : vector<32x188xbf16> to vector<32x120xbf16>
    %c480_65 = arith.constant 480 : index
    %c0_66 = arith.constant 0 : index
    %93 = vector.load %arg10[%c480_65, %c0_66] : memref<800x120xbf16, #tpu.memory_space<vmem>>, vector<32x120xbf16>
    tpu.vector_store %arg10[%c480_65, %c0_66], %92 {strides = array<i32>} : memref<800x120xbf16, #tpu.memory_space<vmem>>, vector<32x120xbf16>,
    %94 = vector.extract_strided_slice %61 {offsets = [0, 49], sizes = [32, 120], strides = [1, 1]} : vector<32x188xbf16> to vector<32x120xbf16>
    %c512_67 = arith.constant 512 : index
    %c0_68 = arith.constant 0 : index
    %95 = vector.load %arg10[%c512_67, %c0_68] : memref<800x120xbf16, #tpu.memory_space<vmem>>, vector<32x120xbf16>
    tpu.vector_store %arg10[%c512_67, %c0_68], %94 {strides = array<i32>} : memref<800x120xbf16, #tpu.memory_space<vmem>>, vector<32x120xbf16>,
    %96 = vector.extract_strided_slice %61 {offsets = [0, 50], sizes = [32, 120], strides = [1, 1]} : vector<32x188xbf16> to vector<32x120xbf16>
    %c544_69 = arith.constant 544 : index
    %c0_70 = arith.constant 0 : index
    %97 = vector.load %arg10[%c544_69, %c0_70] : memref<800x120xbf16, #tpu.memory_space<vmem>>, vector<32x120xbf16>
    tpu.vector_store %arg10[%c544_69, %c0_70], %96 {strides = array<i32>} : memref<800x120xbf16, #tpu.memory_space<vmem>>, vector<32x120xbf16>,
    %98 = vector.extract_strided_slice %61 {offsets = [0, 51], sizes = [32, 120], strides = [1, 1]} : vector<32x188xbf16> to vector<32x120xbf16>
    %c576_71 = arith.constant 576 : index
    %c0_72 = arith.constant 0 : index
    %99 = vector.load %arg10[%c576_71, %c0_72] : memref<800x120xbf16, #tpu.memory_space<vmem>>, vector<32x120xbf16>
    tpu.vector_store %arg10[%c576_71, %c0_72], %98 {strides = array<i32>} : memref<800x120xbf16, #tpu.memory_space<vmem>>, vector<32x120xbf16>,
    %100 = vector.extract_strided_slice %61 {offsets = [0, 52], sizes = [32, 120], strides = [1, 1]} : vector<32x188xbf16> to vector<32x120xbf16>
    %c608_73 = arith.constant 608 : index
    %c0_74 = arith.constant 0 : index
    %101 = vector.load %arg10[%c608_73, %c0_74] : memref<800x120xbf16, #tpu.memory_space<vmem>>, vector<32x120xbf16>
    tpu.vector_store %arg10[%c608_73, %c0_74], %100 {strides = array<i32>} : memref<800x120xbf16, #tpu.memory_space<vmem>>, vector<32x120xbf16>,
    %102 = vector.extract_strided_slice %61 {offsets = [0, 64], sizes = [32, 120], strides = [1, 1]} : vector<32x188xbf16> to vector<32x120xbf16>
    %c640_75 = arith.constant 640 : index
    %c0_76 = arith.constant 0 : index
    %103 = vector.load %arg10[%c640_75, %c0_76] : memref<800x120xbf16, #tpu.memory_space<vmem>>, vector<32x120xbf16>
    tpu.vector_store %arg10[%c640_75, %c0_76], %102 {strides = array<i32>} : memref<800x120xbf16, #tpu.memory_space<vmem>>, vector<32x120xbf16>,
    %104 = vector.extract_strided_slice %61 {offsets = [0, 65], sizes = [32, 120], strides = [1, 1]} : vector<32x188xbf16> to vector<32x120xbf16>
    %c672_77 = arith.constant 672 : index
    %c0_78 = arith.constant 0 : index
    %105 = vector.load %arg10[%c672_77, %c0_78] : memref<800x120xbf16, #tpu.memory_space<vmem>>, vector<32x120xbf16>
    tpu.vector_store %arg10[%c672_77, %c0_78], %104 {strides = array<i32>} : memref<800x120xbf16, #tpu.memory_space<vmem>>, vector<32x120xbf16>,
    %106 = vector.extract_strided_slice %61 {offsets = [0, 66], sizes = [32, 120], strides = [1, 1]} : vector<32x188xbf16> to vector<32x120xbf16>
    %c704_79 = arith.constant 704 : index
    %c0_80 = arith.constant 0 : index
    %107 = vector.load %arg10[%c704_79, %c0_80] : memref<800x120xbf16, #tpu.memory_space<vmem>>, vector<32x120xbf16>
    tpu.vector_store %arg10[%c704_79, %c0_80], %106 {strides = array<i32>} : memref<800x120xbf16, #tpu.memory_space<vmem>>, vector<32x120xbf16>,
    %108 = vector.extract_strided_slice %61 {offsets = [0, 67], sizes = [32, 120], strides = [1, 1]} : vector<32x188xbf16> to vector<32x120xbf16>
    %c736_81 = arith.constant 736 : index
    %c0_82 = arith.constant 0 : index
    %109 = vector.load %arg10[%c736_81, %c0_82] : memref<800x120xbf16, #tpu.memory_space<vmem>>, vector<32x120xbf16>
    tpu.vector_store %arg10[%c736_81, %c0_82], %108 {strides = array<i32>} : memref<800x120xbf16, #tpu.memory_space<vmem>>, vector<32x120xbf16>,
    %110 = vector.extract_strided_slice %61 {offsets = [0, 68], sizes = [32, 120], strides = [1, 1]} : vector<32x188xbf16> to vector<32x120xbf16>
    %c768_83 = arith.constant 768 : index
    %c0_84 = arith.constant 0 : index
    %111 = vector.load %arg10[%c768_83, %c0_84] : memref<800x120xbf16, #tpu.memory_space<vmem>>, vector<32x120xbf16>
    tpu.vector_store %arg10[%c768_83, %c0_84], %110 {strides = array<i32>} : memref<800x120xbf16, #tpu.memory_space<vmem>>, vector<32x120xbf16>,
    %c0_85 = arith.constant 0 : index
    %c0_86 = arith.constant 0 : index
    %112 = vector.load %arg4[%c0_85, %c0_86] : memref<32x800xbf16, #tpu.memory_space<vmem>>, vector<32x800xbf16>
    %c0_87 = arith.constant 0 : index
    %c0_88 = arith.constant 0 : index
    %113 = vector.load %arg10[%c0_87, %c0_88] : memref<800x120xbf16, #tpu.memory_space<vmem>>, vector<800x120xbf16>
    %cst_89 = arith.constant dense<0.000000e+00> : vector<32x120xf32>
    %114 = tpu.matmul %112, %113, %cst_89 {dimension_numbers = #tpu.dot_dimension_numbers<[1], [0], [0], [1], [0, 0, 1, 1], [], []>} : vector<32x800xbf16>, vector<800x120xbf16>, vector<32x120xf32> -> vector<32x120xf32>
    %c0_90 = arith.constant 0 : index
    %c0_91 = arith.constant 0 : index
    %115 = vector.load %arg5[%c0_90, %c0_91] : memref<32x1xf32, #tpu.memory_space<vmem>>, vector<32x1xf32>
    %116 = vector.broadcast %115 : vector<32x1xf32> to vector<32x120xf32>
    %117 = arith.addf %114, %116 : vector<32x120xf32>
    %118 = tpu.iota {dimensions = array<i32: 1>} : vector<1x120xi32>
    %c16_i32 = arith.constant 16 : i32
    %c0_i32 = arith.constant 0 : i32
    %119 = arith.cmpi eq, %c16_i32, %c0_i32 : i32
    %c1_i32 = arith.constant 1 : i32
    %120 = arith.select %119, %c1_i32, %c16_i32 : i32
    %121 = vector.broadcast %120 : i32 to vector<1x120xi32>
    %122 = arith.remsi %118, %121 : vector<1x120xi32>
    %c0_i32_92 = arith.constant 0 : i32
    %123 = vector.broadcast %c0_i32_92 : i32 to vector<1x120xi32>
    %124 = arith.cmpi ne, %122, %123 : vector<1x120xi32>
    %c0_i32_93 = arith.constant 0 : i32
    %125 = vector.broadcast %c0_i32_93 : i32 to vector<1x120xi32>
    %126 = arith.cmpi slt, %122, %125 : vector<1x120xi32>
    %c0_i32_94 = arith.constant 0 : i32
    %127 = arith.cmpi slt, %120, %c0_i32_94 : i32
    %128 = vector.broadcast %127 : i1 to vector<1x120xi1>
    %129 = vector.broadcast %128 : vector<1x120xi1> to vector<1x120xi1>
    %130 = arith.xori %126, %129 : vector<1x120xi1>
    %131 = arith.andi %130, %124 : vector<1x120xi1>
    %132 = vector.broadcast %120 : i32 to vector<1x120xi32>
    %133 = arith.addi %122, %132 : vector<1x120xi32>
    %134 = arith.select %131, %133, %122 : vector<1x120xi1>, vector<1x120xi32>
    %c8_i32 = arith.constant 8 : i32
    %135 = vector.broadcast %c8_i32 : i32 to vector<1x120xi32>
    %136 = arith.cmpi slt, %134, %135 : vector<1x120xi32>
    %cst_95 = arith.constant 0.000000e+00 : f32
    %137 = vector.shape_cast %136 : vector<1x120xi1> to vector<1x120xi1>
    %138 = vector.broadcast %137 : vector<1x120xi1> to vector<32x120xi1>
    %139 = vector.broadcast %cst_95 : f32 to vector<32x120xf32>
    %140 = arith.select %138, %117, %139 : vector<32x120xi1>, vector<32x120xf32>
    %cst_96 = arith.constant dense<0.000000e+00> : vector<32xf32>
    %141 = vector.multi_reduction <add>, %140, %cst_96 [1] : vector<32x120xf32> to vector<32xf32>
    %142 = vector.shape_cast %141 : vector<32xf32> to vector<32x1xf32>
    %cst_97 = arith.constant 1.562500e-02 : f32
    %143 = vector.broadcast %cst_97 : f32 to vector<32x1xf32>
    %144 = arith.mulf %142, %143 : vector<32x1xf32>
    %c0_98 = arith.constant 0 : index
    %c0_99 = arith.constant 0 : index
    %145 = vector.load %arg6[%c0_98, %c0_99] : memref<32x2xf32, #tpu.memory_space<vmem>>, vector<32x2xf32>
    %146 = vector.broadcast %144 : vector<32x1xf32> to vector<32x2xf32>
    %147 = arith.mulf %145, %146 : vector<32x2xf32>
    %cst_100 = arith.constant dense<0.000000e+00> : vector<2xf32>
    %148 = vector.multi_reduction <add>, %147, %cst_100 [0] : vector<32x2xf32> to vector<2xf32>
    %149 = vector.shape_cast %148 : vector<2xf32> to vector<1x2xf32>
    %cst_101 = arith.constant 0.000000e+00 : f32
    %150 = vector.broadcast %cst_101 : f32 to vector<1x2xf32>
    %151 = arith.maximumf %149, %150 : vector<1x2xf32>
    %c0_102 = arith.constant 0 : index
    %c0_103 = arith.constant 0 : index
    %152 = vector.load %arg7[%c0_102, %c0_103] : memref<32x2xf32, #tpu.memory_space<vmem>>, vector<32x2xf32>
    %153 = vector.broadcast %151 : vector<1x2xf32> to vector<32x2xf32>
    %154 = arith.mulf %152, %153 : vector<32x2xf32>
    %cst_104 = arith.constant dense<0.000000e+00> : vector<32xf32>
    %155 = vector.multi_reduction <add>, %154, %cst_104 [1] : vector<32x2xf32> to vector<32xf32>
    %156 = vector.shape_cast %155 : vector<32xf32> to vector<32x1xf32>
    %157 = arith.negf %156 : vector<32x1xf32>
    %158 = math.exp %157 : vector<32x1xf32>
    %cst_105 = arith.constant 1.000000e+00 : f32
    %159 = vector.broadcast %cst_105 : f32 to vector<32x1xf32>
    %160 = arith.addf %159, %158 : vector<32x1xf32>
    %161 = arith.divf %159, %160 : vector<32x1xf32>
    %162 = vector.broadcast %161 : vector<32x1xf32> to vector<32x256xf32>
    %163 = arith.mulf %1, %162 : vector<32x256xf32>
    %c0_106 = arith.constant 0 : index
    %c0_107 = arith.constant 0 : index
    %c0_108 = arith.constant 0 : index
    %164 = vector.load %arg8[%c0_106, %c0_107, %c0_108] : memref<1x32x256xf32, #tpu.memory_space<vmem>>, vector<1x32x256xf32>
    %165 = vector.shape_cast %164 : vector<1x32x256xf32> to vector<32x256xf32>
    %166 = vector.shape_cast %163 : vector<32x256xf32> to vector<1x32x256xf32>
    tpu.vector_store %arg8[%c0_106, %c0_107, %c0_108], %166 {strides = array<i32>} : memref<1x32x256xf32, #tpu.memory_space<vmem>>, vector<1x32x256xf32>,
    return
  }
  func.func @transform_0(%arg0: i32) -> (i32, i32, i32) {
    %c0_i32 = arith.constant 0 : i32
    %c0_i32_0 = arith.constant 0 : i32
    %c0_i32_1 = arith.constant 0 : i32
    return %arg0, %c0_i32, %c0_i32_0 : i32, i32, i32
  }
  func.func @transform_1(%arg0: i32) -> (i32, i32) {
    %c0_i32 = arith.constant 0 : i32
    %c0_i32_0 = arith.constant 0 : i32
    %c0_i32_1 = arith.constant 0 : i32
    return %c0_i32, %c0_i32_0 : i32, i32
  }
  func.func @transform_2(%arg0: i32) -> (i32, i32) {
    %c0_i32 = arith.constant 0 : i32
    %c0_i32_0 = arith.constant 0 : i32
    %c0_i32_1 = arith.constant 0 : i32
    return %c0_i32, %c0_i32_0 : i32, i32
  }
  func.func @transform_3(%arg0: i32) -> (i32, i32) {
    %c0_i32 = arith.constant 0 : i32
    %c0_i32_0 = arith.constant 0 : i32
    %c0_i32_1 = arith.constant 0 : i32
    return %c0_i32, %c0_i32_0 : i32, i32
  }
  func.func @transform_4(%arg0: i32) -> (i32, i32) {
    %c0_i32 = arith.constant 0 : i32
    %c0_i32_0 = arith.constant 0 : i32
    %c0_i32_1 = arith.constant 0 : i32
    return %c0_i32, %c0_i32_0 : i32, i32
  }
  func.func @transform_5(%arg0: i32) -> (i32, i32) {
    %c0_i32 = arith.constant 0 : i32
    %c0_i32_0 = arith.constant 0 : i32
    %c0_i32_1 = arith.constant 0 : i32
    return %c0_i32, %c0_i32_0 : i32, i32
  }
  func.func @transform_6(%arg0: i32) -> (i32, i32) {
    %c0_i32 = arith.constant 0 : i32
    %c0_i32_0 = arith.constant 0 : i32
    %c0_i32_1 = arith.constant 0 : i32
    return %c0_i32, %c0_i32_0 : i32, i32
  }
  func.func @transform_7(%arg0: i32) -> (i32, i32, i32) {
    %c0_i32 = arith.constant 0 : i32
    %c0_i32_0 = arith.constant 0 : i32
    %c0_i32_1 = arith.constant 0 : i32
    return %arg0, %c0_i32, %c0_i32_0 : i32, i32, i32
  }
}

</mosaic_0001>

<llo_original>
// kernel: tpu_custom_call.1
$region0: #{tpu_custom_call.1}
  #allocation0 [shape = 'u32[]', space=smem, size = 0x4, offset = 0x4, fixed_abs, tag = 'smem constant byte address 0x4 - core index']
  #allocation1 [shape = 'u32[144,128]{1,0:T(1,128)}', space=vmem, size = 0x12000, scoped, tag = 'internal scratch']
  #allocation2 [shape = 'bf16[800,188]{1,0:T(8,128)(2,1)}', space=vmem, size = 0x64000, scoped, tag = 'scratch operand']
  #allocation3 [shape = 'bf16[800,120]{1,0:T(8,128)(2,1)}', space=vmem, size = 0x32000, scoped, tag = 'scratch operand']
  %s0 = inlined_call_operand.vmem [shape: f32[2,32,256], index: 0, kind: input, shape index: {}]
  %s1 = inlined_call_operand.hbm [shape: bf16[32,800], index: 1, kind: input, shape index: {}]
  %s2 = inlined_call_operand.vmem [shape: f32[32,1], index: 2, kind: input, shape index: {}]
  %s3 = inlined_call_operand.hbm [shape: bf16[32,800], index: 3, kind: input, shape index: {}]
  %s4 = inlined_call_operand.vmem [shape: f32[32,1], index: 4, kind: input, shape index: {}]
  %s5 = inlined_call_operand.vmem [shape: f32[32,2], index: 5, kind: input, shape index: {}]
  %s6 = inlined_call_operand.vmem [shape: f32[32,2], index: 6, kind: input, shape index: {}]
  %s7 = inlined_call_operand.hbm [shape: f32[2,32,256], index: 7, kind: output, shape index: {}]
  %s8 = sld [smem:[#allocation0]]
  $region69: #{tpu_custom_call.1} parent=0
    _
  %s10 = ssub.s32 1, %s8
  %s11 = scalar_select 0, %s10, %s8
  $region1: #{tpu_custom_call.1} parent=0
    #allocation4 [shape = 'u8[57344]{0}', space=vmem, size = 0xe000, scoped, tag = 'input window, operand 1, single buffered']
    #allocation5 [shape = 's32[2]{0}', space=sflag, size = 0x8, scoped, tag = 'scoped memory for tpu_custom_call.1']
    #allocation6 [shape = 's32[2]{0}', space=sflag, size = 0x8, scoped, tag = 'scoped memory for tpu_custom_call.1']
    #allocation7 [shape = 'u8[57344]{0}', space=vmem, size = 0xe000, scoped, tag = 'input window, operand 3, single buffered']
    #allocation8 [shape = 's32[1]{0}', space=sflag, size = 0x4, scoped, tag = 'scoped memory for tpu_custom_call.1']
    #allocation9 [shape = 'u8[65536]{0}', space=vmem, size = 0x10000, scoped, tag = 'output window, operand 0']
    %12 = vsyncpa [#allocation5], 0
    %13 = vsyncpa [#allocation8], 0
    %14 = vsyncpa [#allocation6], 0
    %s15 = scalar_lea.sflag [#allocation6], 1
    %16 = vsyncpa %s15, 0
    loop: start=0, step=1, limit=4
    $region2: #{tpu_custom_call.1} parent=1 // loop_pre_header
      _
    $region3: #{tpu_custom_call.1} parent=1 // loop_header
      %s18 = sphi 0, %s22
      %p19 = scmp.ge.s32.totalorder %s18, 4
      %s28 = sphi 0, %s30
      %s31 = sphi 0, %s28
      %s32 = sphi 0, %s31
      %s48 = sphi 0, %s32
      %s52 = sphi 0, %s52
      %s54 = sphi 0, %s52
      %s55 = sphi 0, %s54
      %s69 = sphi 0, %s55
      %s73 = sphi 0, %s73
      %s75 = sphi 0, %s73
      %s76 = sphi 0, %s75
      %s90 = sphi 0, %s76
      %s94 = sphi 0, %s94
      %s96 = sphi 0, %s94
      %s97 = sphi 0, %s96
      %s111 = sphi 0, %s97
      %s115 = sphi 0, %s115
      %s117 = sphi 0, %s115
      %s118 = sphi 0, %s117
      %s132 = sphi 0, %s118
      %s136 = sphi 0, %s136
      %s138 = sphi 0, %s136
      %s139 = sphi 0, %s138
      %s153 = sphi 0, %s139
      %s157 = sphi 0, %s157
      %s159 = sphi 0, %s157
      %s160 = sphi 0, %s159
      %s174 = sphi 0, %s160
      %s180 = sphi 0, %s182
      %s183 = sphi 0, %s180
      %s184 = sphi 0, %s183
      %s200 = sphi 0, %s184
    $region4: #{tpu_custom_call.1} parent=1 // loop_header_branch
      %21 = sbr.rel (%p19) target = $region8
    $region5: #{tpu_custom_call.1} parent=1 // loop_body
      %s23 = ssub.s32 %s18, 1
      %s24 = ssub.s32 %s18, 2
      %s25 = sadd.s32 %s18, 1
      %s26 = ssub.s32 %s18, %s25
      %p27 = scmp.eq.s32.totalorder %s26, 0
      %s29 = sadd.s32 %s28, 1
      %s30 = scalar_select %p27, %s28, %s29
      %p33 = pneg %p27
      %p34 = scmp.eq.s32.totalorder %s18, 1
      %p35 = por %p33, %p34
      %p36 = scmp.ne.s32.totalorder %s28, %s31
      %p37 = scmp.eq.s32.totalorder %s18, 0
      %p38 = por %p36, %p37
      %p39 = scmp.ne.s32.totalorder %s28, %s31
      %p40 = scmp.eq.s32.totalorder %s23, 1
      %p41 = por %p39, %p40
      %p42 = scmp.ne.s32.totalorder %s31, %s32
      %p43 = scmp.eq.s32.totalorder %s23, 0
      %p44 = por %p42, %p43
      %p45 = scmp.ne.s32.totalorder %s31, %s32
      %p46 = scmp.eq.s32.totalorder %s24, 1
      %p47 = por %p45, %p46
      %p49 = scmp.ne.s32.totalorder %s32, %s48
      %p50 = scmp.eq.s32.totalorder %s24, 0
      %p51 = por %p49, %p50
      %s53 = sadd.s32 %s52, 1
      %p56 = scmp.eq.s32.totalorder %s18, 1
      %p57 = scmp.ne.s32.totalorder %s52, %s54
      %p58 = scmp.eq.s32.totalorder %s18, 0
      %p59 = por %p57, %p58
      %p60 = scmp.ne.s32.totalorder %s52, %s54
      %p61 = scmp.eq.s32.totalorder %s23, 1
      %p62 = por %p60, %p61
      %p63 = scmp.ne.s32.totalorder %s54, %s55
      %p64 = scmp.eq.s32.totalorder %s23, 0
      %p65 = por %p63, %p64
      %p66 = scmp.ne.s32.totalorder %s54, %s55
      %p67 = scmp.eq.s32.totalorder %s24, 1
      %p68 = por %p66, %p67
      %p70 = scmp.ne.s32.totalorder %s55, %s69
      %p71 = scmp.eq.s32.totalorder %s24, 0
      %p72 = por %p70, %p71
      %s74 = sadd.s32 %s73, 1
      %p77 = scmp.eq.s32.totalorder %s18, 1
      %p78 = scmp.ne.s32.totalorder %s73, %s75
      %p79 = scmp.eq.s32.totalorder %s18, 0
      %p80 = por %p78, %p79
      %p81 = scmp.ne.s32.totalorder %s73, %s75
      %p82 = scmp.eq.s32.totalorder %s23, 1
      %p83 = por %p81, %p82
      %p84 = scmp.ne.s32.totalorder %s75, %s76
      %p85 = scmp.eq.s32.totalorder %s23, 0
      %p86 = por %p84, %p85
      %p87 = scmp.ne.s32.totalorder %s75, %s76
      %p88 = scmp.eq.s32.totalorder %s24, 1
      %p89 = por %p87, %p88
      %p91 = scmp.ne.s32.totalorder %s76, %s90
      %p92 = scmp.eq.s32.totalorder %s24, 0
      %p93 = por %p91, %p92
      %s95 = sadd.s32 %s94, 1
      %p98 = scmp.eq.s32.totalorder %s18, 1
      %p99 = scmp.ne.s32.totalorder %s94, %s96
      %p100 = scmp.eq.s32.totalorder %s18, 0
      %p101 = por %p99, %p100
      %p102 = scmp.ne.s32.totalorder %s94, %s96
      %p103 = scmp.eq.s32.totalorder %s23, 1
      %p104 = por %p102, %p103
      %p105 = scmp.ne.s32.totalorder %s96, %s97
      %p106 = scmp.eq.s32.totalorder %s23, 0
      %p107 = por %p105, %p106
      %p108 = scmp.ne.s32.totalorder %s96, %s97
      %p109 = scmp.eq.s32.totalorder %s24, 1
      %p110 = por %p108, %p109
      %p112 = scmp.ne.s32.totalorder %s97, %s111
      %p113 = scmp.eq.s32.totalorder %s24, 0
      %p114 = por %p112, %p113
      %s116 = sadd.s32 %s115, 1
      %p119 = scmp.eq.s32.totalorder %s18, 1
      %p120 = scmp.ne.s32.totalorder %s115, %s117
      %p121 = scmp.eq.s32.totalorder %s18, 0
      %p122 = por %p120, %p121
      %p123 = scmp.ne.s32.totalorder %s115, %s117
      %p124 = scmp.eq.s32.totalorder %s23, 1
      %p125 = por %p123, %p124
      %p126 = scmp.ne.s32.totalorder %s117, %s118
      %p127 = scmp.eq.s32.totalorder %s23, 0
      %p128 = por %p126, %p127
      %p129 = scmp.ne.s32.totalorder %s117, %s118
      %p130 = scmp.eq.s32.totalorder %s24, 1
      %p131 = por %p129, %p130
      %p133 = scmp.ne.s32.totalorder %s118, %s132
      %p134 = scmp.eq.s32.totalorder %s24, 0
      %p135 = por %p133, %p134
      %s137 = sadd.s32 %s136, 1
      %p140 = scmp.eq.s32.totalorder %s18, 1
      %p141 = scmp.ne.s32.totalorder %s136, %s138
      %p142 = scmp.eq.s32.totalorder %s18, 0
      %p143 = por %p141, %p142
      %p144 = scmp.ne.s32.totalorder %s136, %s138
      %p145 = scmp.eq.s32.totalorder %s23, 1
      %p146 = por %p144, %p145
      %p147 = scmp.ne.s32.totalorder %s138, %s139
      %p148 = scmp.eq.s32.totalorder %s23, 0
      %p149 = por %p147, %p148
      %p150 = scmp.ne.s32.totalorder %s138, %s139
      %p151 = scmp.eq.s32.totalorder %s24, 1
      %p152 = por %p150, %p151
      %p154 = scmp.ne.s32.totalorder %s139, %s153
      %p155 = scmp.eq.s32.totalorder %s24, 0
      %p156 = por %p154, %p155
      %s158 = sadd.s32 %s157, 1
      %p161 = scmp.eq.s32.totalorder %s18, 1
      %p162 = scmp.ne.s32.totalorder %s157, %s159
      %p163 = scmp.eq.s32.totalorder %s18, 0
      %p164 = por %p162, %p163
      %p165 = scmp.ne.s32.totalorder %s157, %s159
      %p166 = scmp.eq.s32.totalorder %s23, 1
      %p167 = por %p165, %p166
      %p168 = scmp.ne.s32.totalorder %s159, %s160
      %p169 = scmp.eq.s32.totalorder %s23, 0
      %p170 = por %p168, %p169
      %p171 = scmp.ne.s32.totalorder %s159, %s160
      %p172 = scmp.eq.s32.totalorder %s24, 1
      %p173 = por %p171, %p172
      %p175 = scmp.ne.s32.totalorder %s160, %s174
      %p176 = scmp.eq.s32.totalorder %s24, 0
      %p177 = por %p175, %p176
      %s178 = ssub.s32 %s18, %s25
      %p179 = scmp.eq.s32.totalorder %s178, 0
      %s181 = sadd.s32 %s180, 1
      %s182 = scalar_select %p179, %s180, %s181
      %p185 = pneg %p179
      %p186 = scmp.eq.s32.totalorder %s18, 1
      %p187 = por %p185, %p186
      %p188 = scmp.ne.s32.totalorder %s180, %s183
      %p189 = scmp.eq.s32.totalorder %s18, 0
      %p190 = por %p188, %p189
      %p191 = scmp.ne.s32.totalorder %s180, %s183
      %p192 = scmp.eq.s32.totalorder %s23, 1
      %p193 = por %p191, %p192
      %p194 = scmp.ne.s32.totalorder %s183, %s184
      %p195 = scmp.eq.s32.totalorder %s23, 0
      %p196 = por %p194, %p195
      %p197 = scmp.ne.s32.totalorder %s183, %s184
      %p198 = scmp.eq.s32.totalorder %s24, 1
      %p199 = por %p197, %p198
      %p201 = scmp.ne.s32.totalorder %s184, %s200
      %p202 = scmp.eq.s32.totalorder %s24, 0
      %p203 = por %p201, %p202
      %p204 = scmp.le.s32.totalorder 1, %s18
      %p205 = scmp.lt.s32.totalorder %s18, 3
      %p206 = pnand %p204, %p205
      %p207 = pneg %p206
      // Predicated region
      $region9: #{tpu_custom_call.1} parent=5 // pred_check
        _
      $region10: #{tpu_custom_call.1} parent=5 // pred_check_branch
        %209 = sbr.rel (%p206) target = $region12
      $region11: #{tpu_custom_call.1} parent=5 // pred_region
        %s210 = ssub.s32 %s18, 1
        // Predicated region
        $region13: #{tpu_custom_call.1} parent=11 // pred_check
          %p211 = pneg %p65
        $region14: #{tpu_custom_call.1} parent=11 // pred_check_branch
          %213 = sbr.rel (%p211) target = $region16
        $region15: #{tpu_custom_call.1} parent=11 // pred_region
          %s215 = ssub.s32 1792, 1792
          %216 = vsyncadd [#allocation5], %s215
          %s217 = sshll.u32 [#allocation4], 4
          %s218 = int_to_ptr.vmem [resolvable:$true] %s217
          %223 = dma.hbm_to_vmem [thread:$0]  %s1, 1792, %s218, [#allocation5], 448, 448, 28
        $region16: #{tpu_custom_call.1} parent=11 // pred_fallthru
          _
        // Predicated region
        $region17: #{tpu_custom_call.1} parent=11 // pred_check
          %p224 = pneg %p86
        $region18: #{tpu_custom_call.1} parent=11 // pred_check_branch
          %226 = sbr.rel (%p224) target = $region20
        $region19: #{tpu_custom_call.1} parent=11 // pred_region
          _
        $region20: #{tpu_custom_call.1} parent=11 // pred_fallthru
          _
        // Predicated region
        $region21: #{tpu_custom_call.1} parent=11 // pred_check
          %p227 = pneg %p107
        $region22: #{tpu_custom_call.1} parent=11 // pred_check_branch
          %229 = sbr.rel (%p227) target = $region24
        $region23: #{tpu_custom_call.1} parent=11 // pred_region
          %s231 = ssub.s32 1792, 1792
          %232 = vsyncadd [#allocation8], %s231
          %s233 = sshll.u32 [#allocation7], 4
          %s234 = int_to_ptr.vmem [resolvable:$true] %s233
          %239 = dma.hbm_to_vmem [thread:$0]  %s3, 1792, %s234, [#allocation8], 448, 448, 28
        $region24: #{tpu_custom_call.1} parent=11 // pred_fallthru
          _
        // Predicated region
        $region25: #{tpu_custom_call.1} parent=11 // pred_check
          %p240 = pneg %p128
        $region26: #{tpu_custom_call.1} parent=11 // pred_check_branch
          %242 = sbr.rel (%p240) target = $region28
        $region27: #{tpu_custom_call.1} parent=11 // pred_region
          _
        $region28: #{tpu_custom_call.1} parent=11 // pred_fallthru
          _
        // Predicated region
        $region29: #{tpu_custom_call.1} parent=11 // pred_check
          %p243 = pneg %p149
        $region30: #{tpu_custom_call.1} parent=11 // pred_check_branch
          %245 = sbr.rel (%p243) target = $region32
        $region31: #{tpu_custom_call.1} parent=11 // pred_region
          _
        $region32: #{tpu_custom_call.1} parent=11 // pred_fallthru
          _
        // Predicated region
        $region33: #{tpu_custom_call.1} parent=11 // pred_check
          %p246 = pneg %p170
        $region34: #{tpu_custom_call.1} parent=11 // pred_check_branch
          %248 = sbr.rel (%p246) target = $region36
        $region35: #{tpu_custom_call.1} parent=11 // pred_region
          _
        $region36: #{tpu_custom_call.1} parent=11 // pred_fallthru
          _
      $region12: #{tpu_custom_call.1} parent=5 // pred_fallthru
        _
      %p249 = scmp.lt.s32.totalorder %s18, 2
      // Predicated region
      $region37: #{tpu_custom_call.1} parent=5 // pred_check
        %p250 = pneg %p249
      $region38: #{tpu_custom_call.1} parent=5 // pred_check_branch
        %252 = sbr.rel (%p250) target = $region40
      $region39: #{tpu_custom_call.1} parent=5 // pred_region
        // Predicated region
        $region41: #{tpu_custom_call.1} parent=39 // pred_check
          %p253 = pneg %p38
        $region42: #{tpu_custom_call.1} parent=39 // pred_check_branch
          %255 = sbr.rel (%p253) target = $region44
        $region43: #{tpu_custom_call.1} parent=39 // pred_region
          %p256 = scmp.lt.s32.totalorder %s18, 1
          %s257 = scalar_select %p256, %s18, 1
          %s258 = smul.addr %s257, 8
          %s259 = smul.addr %s258, 8
          %s260 = scalar_lea.vmem %s0, %s259
        $region44: #{tpu_custom_call.1} parent=39 // pred_fallthru
          _
      $region40: #{tpu_custom_call.1} parent=5 // pred_fallthru
        _
      %p261 = scmp.le.s32.totalorder 1, %s18
      %p262 = scmp.lt.s32.totalorder %s18, 3
      %p263 = pnand %p261, %p262
      %p264 = pneg %p263
      // Predicated region
      $region45: #{tpu_custom_call.1} parent=5 // pred_check
        _
      $region46: #{tpu_custom_call.1} parent=5 // pred_check_branch
        %266 = sbr.rel (%p263) target = $region48
      $region47: #{tpu_custom_call.1} parent=5 // pred_region
        %s267 = ssub.s32 %s18, 1
        // Predicated region
        $region49: #{tpu_custom_call.1} parent=47 // pred_check
          %p268 = pneg %p65
        $region50: #{tpu_custom_call.1} parent=47 // pred_check_branch
          %270 = sbr.rel (%p268) target = $region52
        $region51: #{tpu_custom_call.1} parent=47 // pred_region
          %271 = dma.done [#allocation5], 1792
        $region52: #{tpu_custom_call.1} parent=47 // pred_fallthru
          _
        // Predicated region
        $region53: #{tpu_custom_call.1} parent=47 // pred_check
          %p272 = pneg %p107
        $region54: #{tpu_custom_call.1} parent=47 // pred_check_branch
          %274 = sbr.rel (%p272) target = $region56
        $region55: #{tpu_custom_call.1} parent=47 // pred_region
          %275 = dma.done [#allocation8], 1792
        $region56: #{tpu_custom_call.1} parent=47 // pred_fallthru
          _
        %p276 = scmp.lt.s32.totalorder %s23, 1
        %s277 = scalar_select %p276, %s23, 1
        %s278 = smul.addr %s277, 8
        %s279 = smul.addr %s278, 8
        %s280 = scalar_lea.vmem %s0, %s279
        %p281 = pneg %p44
        %p282 = pneg %p41
        %p283 = pneg %p65
        %p284 = pneg %p62
        %p285 = pneg %p86
        %p286 = pneg %p83
        %p287 = pneg %p107
        %p288 = pneg %p104
        %p289 = pneg %p128
        %p290 = pneg %p125
        %p291 = pneg %p149
        %p292 = pneg %p146
        %p293 = pneg %p170
        %p294 = pneg %p167
        %p295 = pneg %p196
        %p296 = pneg %p193
        %s297 = sand.u32 %s183, 1
        %s298 = scalar_lea.sflag [#allocation6], %s297
        %s299 = sand.u32 %s183, 1
        %s300 = smul.addr %s299, 64
        %s301 = scalar_lea.vmem [#allocation9], %s300
        %p302 = scmp.lt.s32.totalorder %s23, 1
        %s303 = scalar_select %p302, %s23, 1
        %s304 = smul.addr %s303, 8
        %s305 = smul.addr %s304, 8
        %s306 = scalar_lea.vmem %s0, %s305
        %v308 = vld [vmem:[%s306] sm:$0xff]
        %v309 = vld [vmem:[%s306 + $0x8] sm:$0xff]
        %v310 = vld [vmem:[%s306 + $0x10] sm:$0xff]
        %v311 = vld [vmem:[%s306 + $0x18] sm:$0xff]
        %v312 = vld [vmem:[%s306 + $0x20] sm:$0xff]
        %v313 = vld [vmem:[%s306 + $0x28] sm:$0xff]
        %v314 = vld [vmem:[%s306 + $0x30] sm:$0xff]
        %v315 = vld [vmem:[%s306 + $0x38] sm:$0xff]
        %v316 = vpack.c.bf16 %v310, %v308
        %v317 = vpack.c.bf16 %v311, %v309
        %v318 = vpack.c.bf16 %v314, %v312
        %v319 = vpack.c.bf16 %v315, %v313
        %v324 = vunpack.c.l.b16 %v316
        %v325 = vunpack.c.l.b16 %v317
        %v326 = vunpack.c.h.b16 %v316
        %v327 = vunpack.c.h.b16 %v317
        %v328 = vunpack.c.l.b16 %v318
        %v329 = vunpack.c.l.b16 %v319
        %v330 = vunpack.c.h.b16 %v318
        %v331 = vunpack.c.h.b16 %v319
        %v332 = vpack.c.b16 %v325, %v324
        %v333 = vpack.c.b16 %v327, %v326
        %v334 = vpack.c.b16 %v329, %v328
        %v335 = vpack.c.b16 %v331, %v330
        %vm340 = vcmask 1043456
        %vm341 = vcmask 490500
        %vm342 = vmor %vm341, %vm340
        %343 = vst.msk [vmem:[#allocation2] sm:$0xff] %vm342, %v332
        %344 = vst.msk [vmem:[#allocation2 + $0x8] sm:$0xff] %vm342, %v333
        %345 = vst.msk [vmem:[#allocation2 + $0x10] sm:$0xff] %vm342, %v334
        %346 = vst.msk [vmem:[#allocation2 + $0x18] sm:$0xff] %vm342, %v335
        %347 = vrot.lane.b32.xlu0 %v332, 127
        %v348 = vpop.permute.xlu0 %347
        %349 = vrot.lane.b32.xlu0 %v333, 127
        %v350 = vpop.permute.xlu0 %349
        %351 = vrot.lane.b32.xlu0 %v334, 127
        %v352 = vpop.permute.xlu0 %351
        %353 = vrot.lane.b32.xlu0 %v335, 127
        %v354 = vpop.permute.xlu0 %353
        %v355 = vrot.slane %v348, 4
        %v356 = vrot.slane %v350, 4
        %v357 = vrot.slane %v352, 4
        %v358 = vrot.slane %v354, 4
        %vm359 = vcmask 1039360
        %v360 = vsel %vm359, %v348, %v355
        %v361 = vsel %vm359, %v350, %v356
        %v362 = vsel %vm359, %v352, %v357
        %v363 = vsel %vm359, %v354, %v358
        %368 = vst.msk [vmem:[#allocation2 + $0x20] sm:$0xff] %vm342, %v360
        %369 = vst.msk [vmem:[#allocation2 + $0x28] sm:$0xff] %vm342, %v361
        %370 = vst.msk [vmem:[#allocation2 + $0x30] sm:$0xff] %vm342, %v362
        %371 = vst.msk [vmem:[#allocation2 + $0x38] sm:$0xff] %vm342, %v363
        %372 = vrot.lane.b32.xlu0 %v332, 126
        %v373 = vpop.permute.xlu0 %372
        %374 = vrot.lane.b32.xlu0 %v333, 126
        %v375 = vpop.permute.xlu0 %374
        %376 = vrot.lane.b32.xlu0 %v334, 126
        %v377 = vpop.permute.xlu0 %376
        %378 = vrot.lane.b32.xlu0 %v335, 126
        %v379 = vpop.permute.xlu0 %378
        %v380 = vrot.slane %v373, 4
        %v381 = vrot.slane %v375, 4
        %v382 = vrot.slane %v377, 4
        %v383 = vrot.slane %v379, 4
        %vm384 = vcmask 1031168
        %v385 = vsel %vm384, %v373, %v380
        %v386 = vsel %vm384, %v375, %v381
        %v387 = vsel %vm384, %v377, %v382
        %v388 = vsel %vm384, %v379, %v383
        %393 = vst.msk [vmem:[#allocation2 + $0x40] sm:$0xff] %vm342, %v385
        %394 = vst.msk [vmem:[#allocation2 + $0x48] sm:$0xff] %vm342, %v386
        %395 = vst.msk [vmem:[#allocation2 + $0x50] sm:$0xff] %vm342, %v387
        %396 = vst.msk [vmem:[#allocation2 + $0x58] sm:$0xff] %vm342, %v388
        %397 = vrot.lane.b32.xlu0 %v332, 125
        %v398 = vpop.permute.xlu0 %397
        %399 = vrot.lane.b32.xlu0 %v333, 125
        %v400 = vpop.permute.xlu0 %399
        %401 = vrot.lane.b32.xlu0 %v334, 125
        %v402 = vpop.permute.xlu0 %401
        %403 = vrot.lane.b32.xlu0 %v335, 125
        %v404 = vpop.permute.xlu0 %403
        %v405 = vrot.slane %v398, 4
        %v406 = vrot.slane %v400, 4
        %v407 = vrot.slane %v402, 4
        %v408 = vrot.slane %v404, 4
        %vm409 = vcmask 1022976
        %v410 = vsel %vm409, %v398, %v405
        %v411 = vsel %vm409, %v400, %v406
        %v412 = vsel %vm409, %v402, %v407
        %v413 = vsel %vm409, %v404, %v408
        %418 = vst.msk [vmem:[#allocation2 + $0x60] sm:$0xff] %vm342, %v410
        %419 = vst.msk [vmem:[#allocation2 + $0x68] sm:$0xff] %vm342, %v411
        %420 = vst.msk [vmem:[#allocation2 + $0x70] sm:$0xff] %vm342, %v412
        %421 = vst.msk [vmem:[#allocation2 + $0x78] sm:$0xff] %vm342, %v413
        %422 = vrot.lane.b32.xlu0 %v332, 124
        %v423 = vpop.permute.xlu0 %422
        %424 = vrot.lane.b32.xlu0 %v333, 124
        %v425 = vpop.permute.xlu0 %424
        %426 = vrot.lane.b32.xlu0 %v334, 124
        %v427 = vpop.permute.xlu0 %426
        %428 = vrot.lane.b32.xlu0 %v335, 124
        %v429 = vpop.permute.xlu0 %428
        %v430 = vrot.slane %v423, 4
        %v431 = vrot.slane %v425, 4
        %v432 = vrot.slane %v427, 4
        %v433 = vrot.slane %v429, 4
        %vm434 = vcmask 1014784
        %v435 = vsel %vm434, %v423, %v430
        %v436 = vsel %vm434, %v425, %v431
        %v437 = vsel %vm434, %v427, %v432
        %v438 = vsel %vm434, %v429, %v433
        %443 = vst.msk [vmem:[#allocation2 + $0x80] sm:$0xff] %vm342, %v435
        %444 = vst.msk [vmem:[#allocation2 + $0x88] sm:$0xff] %vm342, %v436
        %445 = vst.msk [vmem:[#allocation2 + $0x90] sm:$0xff] %vm342, %v437
        %446 = vst.msk [vmem:[#allocation2 + $0x98] sm:$0xff] %vm342, %v438
        %447 = vrot.lane.b32.xlu0 %v332, 112
        %v448 = vpop.permute.xlu0 %447
        %449 = vrot.lane.b32.xlu0 %v333, 112
        %v450 = vpop.permute.xlu0 %449
        %451 = vrot.lane.b32.xlu0 %v334, 112
        %v452 = vpop.permute.xlu0 %451
        %453 = vrot.lane.b32.xlu0 %v335, 112
        %v454 = vpop.permute.xlu0 %453
        %v455 = vrot.slane %v448, 4
        %v456 = vrot.slane %v450, 4
        %v457 = vrot.slane %v452, 4
        %v458 = vrot.slane %v454, 4
        %vm459 = vcmask 916480
        %v460 = vsel %vm459, %v448, %v455
        %v461 = vsel %vm459, %v450, %v456
        %v462 = vsel %vm459, %v452, %v457
        %v463 = vsel %vm459, %v454, %v458
        %468 = vst.msk [vmem:[#allocation2 + $0xa0] sm:$0xff] %vm342, %v460
        %469 = vst.msk [vmem:[#allocation2 + $0xa8] sm:$0xff] %vm342, %v461
        %470 = vst.msk [vmem:[#allocation2 + $0xb0] sm:$0xff] %vm342, %v462
        %471 = vst.msk [vmem:[#allocation2 + $0xb8] sm:$0xff] %vm342, %v463
        %472 = vrot.lane.b32.xlu0 %v332, 111
        %v473 = vpop.permute.xlu0 %472
        %474 = vrot.lane.b32.xlu0 %v333, 111
        %v475 = vpop.permute.xlu0 %474
        %476 = vrot.lane.b32.xlu0 %v334, 111
        %v477 = vpop.permute.xlu0 %476
        %478 = vrot.lane.b32.xlu0 %v335, 111
        %v479 = vpop.permute.xlu0 %478
        %v480 = vrot.slane %v473, 4
        %v481 = vrot.slane %v475, 4
        %v482 = vrot.slane %v477, 4
        %v483 = vrot.slane %v479, 4
        %vm484 = vcmask 908288
        %v485 = vsel %vm484, %v473, %v480
        %v486 = vsel %vm484, %v475, %v481
        %v487 = vsel %vm484, %v477, %v482
        %v488 = vsel %vm484, %v479, %v483
        %493 = vst.msk [vmem:[#allocation2 + $0xc0] sm:$0xff] %vm342, %v485
        %494 = vst.msk [vmem:[#allocation2 + $0xc8] sm:$0xff] %vm342, %v486
        %495 = vst.msk [vmem:[#allocation2 + $0xd0] sm:$0xff] %vm342, %v487
        %496 = vst.msk [vmem:[#allocation2 + $0xd8] sm:$0xff] %vm342, %v488
        %497 = vrot.lane.b32.xlu0 %v332, 110
        %v498 = vpop.permute.xlu0 %497
        %499 = vrot.lane.b32.xlu0 %v333, 110
        %v500 = vpop.permute.xlu0 %499
        %501 = vrot.lane.b32.xlu0 %v334, 110
        %v502 = vpop.permute.xlu0 %501
        %503 = vrot.lane.b32.xlu0 %v335, 110
        %v504 = vpop.permute.xlu0 %503
        %v505 = vrot.slane %v498, 4
        %v506 = vrot.slane %v500, 4
        %v507 = vrot.slane %v502, 4
        %v508 = vrot.slane %v504, 4
        %vm509 = vcmask 900096
        %v510 = vsel %vm509, %v498, %v505
        %v511 = vsel %vm509, %v500, %v506
        %v512 = vsel %vm509, %v502, %v507
        %v513 = vsel %vm509, %v504, %v508
        %518 = vst.msk [vmem:[#allocation2 + $0xe0] sm:$0xff] %vm342, %v510
        %519 = vst.msk [vmem:[#allocation2 + $0xe8] sm:$0xff] %vm342, %v511
        %520 = vst.msk [vmem:[#allocation2 + $0xf0] sm:$0xff] %vm342, %v512
        %521 = vst.msk [vmem:[#allocation2 + $0xf8] sm:$0xff] %vm342, %v513
        %522 = vrot.lane.b32.xlu0 %v332, 109
        %v523 = vpop.permute.xlu0 %522
        %524 = vrot.lane.b32.xlu0 %v333, 109
        %v525 = vpop.permute.xlu0 %524
        %526 = vrot.lane.b32.xlu0 %v334, 109
        %v527 = vpop.permute.xlu0 %526
        %528 = vrot.lane.b32.xlu0 %v335, 109
        %v529 = vpop.permute.xlu0 %528
        %v530 = vrot.slane %v523, 4
        %v531 = vrot.slane %v525, 4
        %v532 = vrot.slane %v527, 4
        %v533 = vrot.slane %v529, 4
        %vm534 = vcmask 891904
        %v535 = vsel %vm534, %v523, %v530
        %v536 = vsel %vm534, %v525, %v531
        %v537 = vsel %vm534, %v527, %v532
        %v538 = vsel %vm534, %v529, %v533
        %543 = vst.msk [vmem:[#allocation2 + $0x100] sm:$0xff] %vm342, %v535
        %544 = vst.msk [vmem:[#allocation2 + $0x108] sm:$0xff] %vm342, %v536
        %545 = vst.msk [vmem:[#allocation2 + $0x110] sm:$0xff] %vm342, %v537
        %546 = vst.msk [vmem:[#allocation2 + $0x118] sm:$0xff] %vm342, %v538
        %547 = vrot.lane.b32.xlu0 %v332, 108
        %v548 = vpop.permute.xlu0 %547
        %549 = vrot.lane.b32.xlu0 %v333, 108
        %v550 = vpop.permute.xlu0 %549
        %551 = vrot.lane.b32.xlu0 %v334, 108
        %v552 = vpop.permute.xlu0 %551
        %553 = vrot.lane.b32.xlu0 %v335, 108
        %v554 = vpop.permute.xlu0 %553
        %v555 = vrot.slane %v548, 4
        %v556 = vrot.slane %v550, 4
        %v557 = vrot.slane %v552, 4
        %v558 = vrot.slane %v554, 4
        %vm559 = vcmask 883712
        %v560 = vsel %vm559, %v548, %v555
        %v561 = vsel %vm559, %v550, %v556
        %v562 = vsel %vm559, %v552, %v557
        %v563 = vsel %vm559, %v554, %v558
        %568 = vst.msk [vmem:[#allocation2 + $0x120] sm:$0xff] %vm342, %v560
        %569 = vst.msk [vmem:[#allocation2 + $0x128] sm:$0xff] %vm342, %v561
        %570 = vst.msk [vmem:[#allocation2 + $0x130] sm:$0xff] %vm342, %v562
        %571 = vst.msk [vmem:[#allocation2 + $0x138] sm:$0xff] %vm342, %v563
        %572 = vrot.lane.b32.xlu0 %v332, 96
        %v573 = vpop.permute.xlu0 %572
        %574 = vrot.lane.b32.xlu0 %v333, 96
        %v575 = vpop.permute.xlu0 %574
        %576 = vrot.lane.b32.xlu0 %v334, 96
        %v577 = vpop.permute.xlu0 %576
        %578 = vrot.lane.b32.xlu0 %v335, 96
        %v579 = vpop.permute.xlu0 %578
        %v580 = vrot.slane %v573, 4
        %v581 = vrot.slane %v575, 4
        %v582 = vrot.slane %v577, 4
        %v583 = vrot.slane %v579, 4
        %vm584 = vcmask 785408
        %v585 = vsel %vm584, %v573, %v580
        %v586 = vsel %vm584, %v575, %v581
        %v587 = vsel %vm584, %v577, %v582
        %v588 = vsel %vm584, %v579, %v583
        %593 = vst.msk [vmem:[#allocation2 + $0x140] sm:$0xff] %vm342, %v585
        %594 = vst.msk [vmem:[#allocation2 + $0x148] sm:$0xff] %vm342, %v586
        %595 = vst.msk [vmem:[#allocation2 + $0x150] sm:$0xff] %vm342, %v587
        %596 = vst.msk [vmem:[#allocation2 + $0x158] sm:$0xff] %vm342, %v588
        %597 = vrot.lane.b32.xlu0 %v332, 95
        %v598 = vpop.permute.xlu0 %597
        %599 = vrot.lane.b32.xlu0 %v333, 95
        %v600 = vpop.permute.xlu0 %599
        %601 = vrot.lane.b32.xlu0 %v334, 95
        %v602 = vpop.permute.xlu0 %601
        %603 = vrot.lane.b32.xlu0 %v335, 95
        %v604 = vpop.permute.xlu0 %603
        %v605 = vrot.slane %v598, 4
        %v606 = vrot.slane %v600, 4
        %v607 = vrot.slane %v602, 4
        %v608 = vrot.slane %v604, 4
        %vm609 = vcmask 777216
        %v610 = vsel %vm609, %v598, %v605
        %v611 = vsel %vm609, %v600, %v606
        %v612 = vsel %vm609, %v602, %v607
        %v613 = vsel %vm609, %v604, %v608
        %618 = vst.msk [vmem:[#allocation2 + $0x160] sm:$0xff] %vm342, %v610
        %619 = vst.msk [vmem:[#allocation2 + $0x168] sm:$0xff] %vm342, %v611
        %620 = vst.msk [vmem:[#allocation2 + $0x170] sm:$0xff] %vm342, %v612
        %621 = vst.msk [vmem:[#allocation2 + $0x178] sm:$0xff] %vm342, %v613
        %622 = vrot.lane.b32.xlu0 %v332, 94
        %v623 = vpop.permute.xlu0 %622
        %624 = vrot.lane.b32.xlu0 %v333, 94
        %v625 = vpop.permute.xlu0 %624
        %626 = vrot.lane.b32.xlu0 %v334, 94
        %v627 = vpop.permute.xlu0 %626
        %628 = vrot.lane.b32.xlu0 %v335, 94
        %v629 = vpop.permute.xlu0 %628
        %v630 = vrot.slane %v623, 4
        %v631 = vrot.slane %v625, 4
        %v632 = vrot.slane %v627, 4
        %v633 = vrot.slane %v629, 4
        %vm634 = vcmask 769024
        %v635 = vsel %vm634, %v623, %v630
        %v636 = vsel %vm634, %v625, %v631
        %v637 = vsel %vm634, %v627, %v632
        %v638 = vsel %vm634, %v629, %v633
        %643 = vst.msk [vmem:[#allocation2 + $0x180] sm:$0xff] %vm342, %v635
        %644 = vst.msk [vmem:[#allocation2 + $0x188] sm:$0xff] %vm342, %v636
        %645 = vst.msk [vmem:[#allocation2 + $0x190] sm:$0xff] %vm342, %v637
        %646 = vst.msk [vmem:[#allocation2 + $0x198] sm:$0xff] %vm342, %v638
        %647 = vrot.lane.b32.xlu0 %v332, 93
        %v648 = vpop.permute.xlu0 %647
        %649 = vrot.lane.b32.xlu0 %v333, 93
        %v650 = vpop.permute.xlu0 %649
        %651 = vrot.lane.b32.xlu0 %v334, 93
        %v652 = vpop.permute.xlu0 %651
        %653 = vrot.lane.b32.xlu0 %v335, 93
        %v654 = vpop.permute.xlu0 %653
        %v655 = vrot.slane %v648, 4
        %v656 = vrot.slane %v650, 4
        %v657 = vrot.slane %v652, 4
        %v658 = vrot.slane %v654, 4
        %vm659 = vcmask 760832
        %v660 = vsel %vm659, %v648, %v655
        %v661 = vsel %vm659, %v650, %v656
        %v662 = vsel %vm659, %v652, %v657
        %v663 = vsel %vm659, %v654, %v658
        %668 = vst.msk [vmem:[#allocation2 + $0x1a0] sm:$0xff] %vm342, %v660
        %669 = vst.msk [vmem:[#allocation2 + $0x1a8] sm:$0xff] %vm342, %v661
        %670 = vst.msk [vmem:[#allocation2 + $0x1b0] sm:$0xff] %vm342, %v662
        %671 = vst.msk [vmem:[#allocation2 + $0x1b8] sm:$0xff] %vm342, %v663
        %672 = vrot.lane.b32.xlu0 %v332, 92
        %v673 = vpop.permute.xlu0 %672
        %674 = vrot.lane.b32.xlu0 %v333, 92
        %v675 = vpop.permute.xlu0 %674
        %676 = vrot.lane.b32.xlu0 %v334, 92
        %v677 = vpop.permute.xlu0 %676
        %678 = vrot.lane.b32.xlu0 %v335, 92
        %v679 = vpop.permute.xlu0 %678
        %v680 = vrot.slane %v673, 4
        %v681 = vrot.slane %v675, 4
        %v682 = vrot.slane %v677, 4
        %v683 = vrot.slane %v679, 4
        %vm684 = vcmask 752640
        %v685 = vsel %vm684, %v673, %v680
        %v686 = vsel %vm684, %v675, %v681
        %v687 = vsel %vm684, %v677, %v682
        %v688 = vsel %vm684, %v679, %v683
        %693 = vst.msk [vmem:[#allocation2 + $0x1c0] sm:$0xff] %vm342, %v685
        %694 = vst.msk [vmem:[#allocation2 + $0x1c8] sm:$0xff] %vm342, %v686
        %695 = vst.msk [vmem:[#allocation2 + $0x1d0] sm:$0xff] %vm342, %v687
        %696 = vst.msk [vmem:[#allocation2 + $0x1d8] sm:$0xff] %vm342, %v688
        %697 = vrot.lane.b32.xlu0 %v332, 80
        %v698 = vpop.permute.xlu0 %697
        %699 = vrot.lane.b32.xlu0 %v333, 80
        %v700 = vpop.permute.xlu0 %699
        %701 = vrot.lane.b32.xlu0 %v334, 80
        %v702 = vpop.permute.xlu0 %701
        %703 = vrot.lane.b32.xlu0 %v335, 80
        %v704 = vpop.permute.xlu0 %703
        %v705 = vrot.slane %v698, 4
        %v706 = vrot.slane %v700, 4
        %v707 = vrot.slane %v702, 4
        %v708 = vrot.slane %v704, 4
        %vm709 = vcmask 654336
        %v710 = vsel %vm709, %v698, %v705
        %v711 = vsel %vm709, %v700, %v706
        %v712 = vsel %vm709, %v702, %v707
        %v713 = vsel %vm709, %v704, %v708
        %718 = vst.msk [vmem:[#allocation2 + $0x1e0] sm:$0xff] %vm342, %v710
        %719 = vst.msk [vmem:[#allocation2 + $0x1e8] sm:$0xff] %vm342, %v711
        %720 = vst.msk [vmem:[#allocation2 + $0x1f0] sm:$0xff] %vm342, %v712
        %721 = vst.msk [vmem:[#allocation2 + $0x1f8] sm:$0xff] %vm342, %v713
        %722 = vrot.lane.b32.xlu0 %v332, 79
        %v723 = vpop.permute.xlu0 %722
        %724 = vrot.lane.b32.xlu0 %v333, 79
        %v725 = vpop.permute.xlu0 %724
        %726 = vrot.lane.b32.xlu0 %v334, 79
        %v727 = vpop.permute.xlu0 %726
        %728 = vrot.lane.b32.xlu0 %v335, 79
        %v729 = vpop.permute.xlu0 %728
        %v730 = vrot.slane %v723, 4
        %v731 = vrot.slane %v725, 4
        %v732 = vrot.slane %v727, 4
        %v733 = vrot.slane %v729, 4
        %vm734 = vcmask 646144
        %v735 = vsel %vm734, %v723, %v730
        %v736 = vsel %vm734, %v725, %v731
        %v737 = vsel %vm734, %v727, %v732
        %v738 = vsel %vm734, %v729, %v733
        %743 = vst.msk [vmem:[#allocation2 + $0x200] sm:$0xff] %vm342, %v735
        %744 = vst.msk [vmem:[#allocation2 + $0x208] sm:$0xff] %vm342, %v736
        %745 = vst.msk [vmem:[#allocation2 + $0x210] sm:$0xff] %vm342, %v737
        %746 = vst.msk [vmem:[#allocation2 + $0x218] sm:$0xff] %vm342, %v738
        %747 = vrot.lane.b32.xlu0 %v332, 78
        %v748 = vpop.permute.xlu0 %747
        %749 = vrot.lane.b32.xlu0 %v333, 78
        %v750 = vpop.permute.xlu0 %749
        %751 = vrot.lane.b32.xlu0 %v334, 78
        %v752 = vpop.permute.xlu0 %751
        %753 = vrot.lane.b32.xlu0 %v335, 78
        %v754 = vpop.permute.xlu0 %753
        %v755 = vrot.slane %v748, 4
        %v756 = vrot.slane %v750, 4
        %v757 = vrot.slane %v752, 4
        %v758 = vrot.slane %v754, 4
        %vm759 = vcmask 637952
        %v760 = vsel %vm759, %v748, %v755
        %v761 = vsel %vm759, %v750, %v756
        %v762 = vsel %vm759, %v752, %v757
        %v763 = vsel %vm759, %v754, %v758
        %768 = vst.msk [vmem:[#allocation2 + $0x220] sm:$0xff] %vm342, %v760
        %769 = vst.msk [vmem:[#allocation2 + $0x228] sm:$0xff] %vm342, %v761
        %770 = vst.msk [vmem:[#allocation2 + $0x230] sm:$0xff] %vm342, %v762
        %771 = vst.msk [vmem:[#allocation2 + $0x238] sm:$0xff] %vm342, %v763
        %772 = vrot.lane.b32.xlu0 %v332, 77
        %v773 = vpop.permute.xlu0 %772
        %774 = vrot.lane.b32.xlu0 %v333, 77
        %v775 = vpop.permute.xlu0 %774
        %776 = vrot.lane.b32.xlu0 %v334, 77
        %v777 = vpop.permute.xlu0 %776
        %778 = vrot.lane.b32.xlu0 %v335, 77
        %v779 = vpop.permute.xlu0 %778
        %v780 = vrot.slane %v773, 4
        %v781 = vrot.slane %v775, 4
        %v782 = vrot.slane %v777, 4
        %v783 = vrot.slane %v779, 4
        %vm784 = vcmask 629760
        %v785 = vsel %vm784, %v773, %v780
        %v786 = vsel %vm784, %v775, %v781
        %v787 = vsel %vm784, %v777, %v782
        %v788 = vsel %vm784, %v779, %v783
        %793 = vst.msk [vmem:[#allocation2 + $0x240] sm:$0xff] %vm342, %v785
        %794 = vst.msk [vmem:[#allocation2 + $0x248] sm:$0xff] %vm342, %v786
        %795 = vst.msk [vmem:[#allocation2 + $0x250] sm:$0xff] %vm342, %v787
        %796 = vst.msk [vmem:[#allocation2 + $0x258] sm:$0xff] %vm342, %v788
        %797 = vrot.lane.b32.xlu0 %v332, 76
        %v798 = vpop.permute.xlu0 %797
        %799 = vrot.lane.b32.xlu0 %v333, 76
        %v800 = vpop.permute.xlu0 %799
        %801 = vrot.lane.b32.xlu0 %v334, 76
        %v802 = vpop.permute.xlu0 %801
        %803 = vrot.lane.b32.xlu0 %v335, 76
        %v804 = vpop.permute.xlu0 %803
        %v805 = vrot.slane %v798, 4
        %v806 = vrot.slane %v800, 4
        %v807 = vrot.slane %v802, 4
        %v808 = vrot.slane %v804, 4
        %vm809 = vcmask 621568
        %v810 = vsel %vm809, %v798, %v805
        %v811 = vsel %vm809, %v800, %v806
        %v812 = vsel %vm809, %v802, %v807
        %v813 = vsel %vm809, %v804, %v808
        %818 = vst.msk [vmem:[#allocation2 + $0x260] sm:$0xff] %vm342, %v810
        %819 = vst.msk [vmem:[#allocation2 + $0x268] sm:$0xff] %vm342, %v811
        %820 = vst.msk [vmem:[#allocation2 + $0x270] sm:$0xff] %vm342, %v812
        %821 = vst.msk [vmem:[#allocation2 + $0x278] sm:$0xff] %vm342, %v813
        %822 = vrot.lane.b32.xlu0 %v332, 64
        %v823 = vpop.permute.xlu0 %822
        %824 = vrot.lane.b32.xlu0 %v333, 64
        %v825 = vpop.permute.xlu0 %824
        %826 = vrot.lane.b32.xlu0 %v334, 64
        %v827 = vpop.permute.xlu0 %826
        %828 = vrot.lane.b32.xlu0 %v335, 64
        %v829 = vpop.permute.xlu0 %828
        %v830 = vrot.slane %v823, 4
        %v831 = vrot.slane %v825, 4
        %v832 = vrot.slane %v827, 4
        %v833 = vrot.slane %v829, 4
        %vm834 = vcmask 523264
        %v835 = vsel %vm834, %v823, %v830
        %v836 = vsel %vm834, %v825, %v831
        %v837 = vsel %vm834, %v827, %v832
        %v838 = vsel %vm834, %v829, %v833
        %843 = vst.msk [vmem:[#allocation2 + $0x280] sm:$0xff] %vm342, %v835
        %844 = vst.msk [vmem:[#allocation2 + $0x288] sm:$0xff] %vm342, %v836
        %845 = vst.msk [vmem:[#allocation2 + $0x290] sm:$0xff] %vm342, %v837
        %846 = vst.msk [vmem:[#allocation2 + $0x298] sm:$0xff] %vm342, %v838
        %847 = vrot.lane.b32.xlu0 %v332, 63
        %v848 = vpop.permute.xlu0 %847
        %849 = vrot.lane.b32.xlu0 %v333, 63
        %v850 = vpop.permute.xlu0 %849
        %851 = vrot.lane.b32.xlu0 %v334, 63
        %v852 = vpop.permute.xlu0 %851
        %853 = vrot.lane.b32.xlu0 %v335, 63
        %v854 = vpop.permute.xlu0 %853
        %v855 = vrot.slane %v848, 4
        %v856 = vrot.slane %v850, 4
        %v857 = vrot.slane %v852, 4
        %v858 = vrot.slane %v854, 4
        %vm859 = vcmask 515072
        %v860 = vsel %vm859, %v848, %v855
        %v861 = vsel %vm859, %v850, %v856
        %v862 = vsel %vm859, %v852, %v857
        %v863 = vsel %vm859, %v854, %v858
        %868 = vst.msk [vmem:[#allocation2 + $0x2a0] sm:$0xff] %vm342, %v860
        %869 = vst.msk [vmem:[#allocation2 + $0x2a8] sm:$0xff] %vm342, %v861
        %870 = vst.msk [vmem:[#allocation2 + $0x2b0] sm:$0xff] %vm342, %v862
        %871 = vst.msk [vmem:[#allocation2 + $0x2b8] sm:$0xff] %vm342, %v863
        %872 = vrot.lane.b32.xlu0 %v332, 62
        %v873 = vpop.permute.xlu0 %872
        %874 = vrot.lane.b32.xlu0 %v333, 62
        %v875 = vpop.permute.xlu0 %874
        %876 = vrot.lane.b32.xlu0 %v334, 62
        %v877 = vpop.permute.xlu0 %876
        %878 = vrot.lane.b32.xlu0 %v335, 62
        %v879 = vpop.permute.xlu0 %878
        %v880 = vrot.slane %v873, 4
        %v881 = vrot.slane %v875, 4
        %v882 = vrot.slane %v877, 4
        %v883 = vrot.slane %v879, 4
        %vm884 = vcmask 506880
        %v885 = vsel %vm884, %v873, %v880
        %v886 = vsel %vm884, %v875, %v881
        %v887 = vsel %vm884, %v877, %v882
        %v888 = vsel %vm884, %v879, %v883
        %893 = vst.msk [vmem:[#allocation2 + $0x2c0] sm:$0xff] %vm342, %v885
        %894 = vst.msk [vmem:[#allocation2 + $0x2c8] sm:$0xff] %vm342, %v886
        %895 = vst.msk [vmem:[#allocation2 + $0x2d0] sm:$0xff] %vm342, %v887
        %896 = vst.msk [vmem:[#allocation2 + $0x2d8] sm:$0xff] %vm342, %v888
        %897 = vrot.lane.b32.xlu0 %v332, 61
        %v898 = vpop.permute.xlu0 %897
        %899 = vrot.lane.b32.xlu0 %v333, 61
        %v900 = vpop.permute.xlu0 %899
        %901 = vrot.lane.b32.xlu0 %v334, 61
        %v902 = vpop.permute.xlu0 %901
        %903 = vrot.lane.b32.xlu0 %v335, 61
        %v904 = vpop.permute.xlu0 %903
        %v905 = vrot.slane %v898, 4
        %v906 = vrot.slane %v900, 4
        %v907 = vrot.slane %v902, 4
        %v908 = vrot.slane %v904, 4
        %vm909 = vcmask 498688
        %v910 = vsel %vm909, %v898, %v905
        %v911 = vsel %vm909, %v900, %v906
        %v912 = vsel %vm909, %v902, %v907
        %v913 = vsel %vm909, %v904, %v908
        %918 = vst.msk [vmem:[#allocation2 + $0x2e0] sm:$0xff] %vm342, %v910
        %919 = vst.msk [vmem:[#allocation2 + $0x2e8] sm:$0xff] %vm342, %v911
        %920 = vst.msk [vmem:[#allocation2 + $0x2f0] sm:$0xff] %vm342, %v912
        %921 = vst.msk [vmem:[#allocation2 + $0x2f8] sm:$0xff] %vm342, %v913
        %922 = vrot.lane.b32.xlu0 %v332, 60
        %v923 = vpop.permute.xlu0 %922
        %924 = vrot.lane.b32.xlu0 %v333, 60
        %v925 = vpop.permute.xlu0 %924
        %926 = vrot.lane.b32.xlu0 %v334, 60
        %v927 = vpop.permute.xlu0 %926
        %928 = vrot.lane.b32.xlu0 %v335, 60
        %v929 = vpop.permute.xlu0 %928
        %v930 = vrot.slane %v923, 4
        %v931 = vrot.slane %v925, 4
        %v932 = vrot.slane %v927, 4
        %v933 = vrot.slane %v929, 4
        %vm934 = vcmask 490496
        %v935 = vsel %vm934, %v923, %v930
        %v936 = vsel %vm934, %v925, %v931
        %v937 = vsel %vm934, %v927, %v932
        %v938 = vsel %vm934, %v929, %v933
        %943 = vst.msk [vmem:[#allocation2 + $0x300] sm:$0xff] %vm342, %v935
        %944 = vst.msk [vmem:[#allocation2 + $0x308] sm:$0xff] %vm342, %v936
        %945 = vst.msk [vmem:[#allocation2 + $0x310] sm:$0xff] %vm342, %v937
        %946 = vst.msk [vmem:[#allocation2 + $0x318] sm:$0xff] %vm342, %v938
        %v947 = vld [vmem:[#allocation4] sm:$0xff]
        %v948 = vld [vmem:[#allocation4 + $0x8] sm:$0xff]
        %v949 = vld [vmem:[#allocation4 + $0x10] sm:$0xff]
        %v950 = vld [vmem:[#allocation4 + $0x18] sm:$0xf]
        %v951 = vld [vmem:[#allocation4 + $0x1c] sm:$0xff]
        %v952 = vld [vmem:[#allocation4 + $0x24] sm:$0xff]
        %v953 = vld [vmem:[#allocation4 + $0x2c] sm:$0xff]
        %v954 = vld [vmem:[#allocation4 + $0x34] sm:$0xf]
        %v955 = vld [vmem:[#allocation4 + $0x38] sm:$0xff]
        %v956 = vld [vmem:[#allocation4 + $0x40] sm:$0xff]
        %v957 = vld [vmem:[#allocation4 + $0x48] sm:$0xff]
        %v958 = vld [vmem:[#allocation4 + $0x50] sm:$0xf]
        %v959 = vld [vmem:[#allocation4 + $0x54] sm:$0xff]
        %v960 = vld [vmem:[#allocation4 + $0x5c] sm:$0xff]
        %v961 = vld [vmem:[#allocation4 + $0x64] sm:$0xff]
        %v962 = vld [vmem:[#allocation4 + $0x6c] sm:$0xf]
        %v963 = vld [vmem:[#allocation2] sm:$0xff]
        %v964 = vld [vmem:[#allocation2 + $0x8] sm:$0xff]
        %v965 = vld [vmem:[#allocation2 + $0x10] sm:$0xff]
        %v966 = vld [vmem:[#allocation2 + $0x18] sm:$0xff]
        %v967 = vld [vmem:[#allocation2 + $0x20] sm:$0xff]
        %v968 = vld [vmem:[#allocation2 + $0x28] sm:$0xff]
        %v969 = vld [vmem:[#allocation2 + $0x30] sm:$0xff]
        %v970 = vld [vmem:[#allocation2 + $0x38] sm:$0xff]
        %v971 = vld [vmem:[#allocation2 + $0x40] sm:$0xff]
        %v972 = vld [vmem:[#allocation2 + $0x48] sm:$0xff]
        %v973 = vld [vmem:[#allocation2 + $0x50] sm:$0xff]
        %v974 = vld [vmem:[#allocation2 + $0x58] sm:$0xff]
        %v975 = vld [vmem:[#allocation2 + $0x60] sm:$0xff]
        %v976 = vld [vmem:[#allocation2 + $0x68] sm:$0xff]
        %v977 = vld [vmem:[#allocation2 + $0x70] sm:$0xff]
        %v978 = vld [vmem:[#allocation2 + $0x78] sm:$0xff]
        %v979 = vld [vmem:[#allocation2 + $0x80] sm:$0xff]
        %v980 = vld [vmem:[#allocation2 + $0x88] sm:$0xff]
        %v981 = vld [vmem:[#allocation2 + $0x90] sm:$0xff]
        %v982 = vld [vmem:[#allocation2 + $0x98] sm:$0xff]
        %v983 = vld [vmem:[#allocation2 + $0xa0] sm:$0xff]
        %v984 = vld [vmem:[#allocation2 + $0xa8] sm:$0xff]
        %v985 = vld [vmem:[#allocation2 + $0xb0] sm:$0xff]
        %v986 = vld [vmem:[#allocation2 + $0xb8] sm:$0xff]
        %v987 = vld [vmem:[#allocation2 + $0xc0] sm:$0xff]
        %v988 = vld [vmem:[#allocation2 + $0xc8] sm:$0xff]
        %v989 = vld [vmem:[#allocation2 + $0xd0] sm:$0xff]
        %v990 = vld [vmem:[#allocation2 + $0xd8] sm:$0xff]
        %v991 = vld [vmem:[#allocation2 + $0xe0] sm:$0xff]
        %v992 = vld [vmem:[#allocation2 + $0xe8] sm:$0xff]
        %v993 = vld [vmem:[#allocation2 + $0xf0] sm:$0xff]
        %v994 = vld [vmem:[#allocation2 + $0xf8] sm:$0xff]
        %v995 = vld [vmem:[#allocation2 + $0x100] sm:$0xff]
        %v996 = vld [vmem:[#allocation2 + $0x108] sm:$0xff]
        %v997 = vld [vmem:[#allocation2 + $0x110] sm:$0xff]
        %v998 = vld [vmem:[#allocation2 + $0x118] sm:$0xff]
        %v999 = vld [vmem:[#allocation2 + $0x120] sm:$0xff]
        %v1000 = vld [vmem:[#allocation2 + $0x128] sm:$0xff]
        %v1001 = vld [vmem:[#allocation2 + $0x130] sm:$0xff]
        %v1002 = vld [vmem:[#allocation2 + $0x138] sm:$0xff]
        %v1003 = vld [vmem:[#allocation2 + $0x140] sm:$0xff]
        %v1004 = vld [vmem:[#allocation2 + $0x148] sm:$0xff]
        %v1005 = vld [vmem:[#allocation2 + $0x150] sm:$0xff]
        %v1006 = vld [vmem:[#allocation2 + $0x158] sm:$0xff]
        %v1007 = vld [vmem:[#allocation2 + $0x160] sm:$0xff]
        %v1008 = vld [vmem:[#allocation2 + $0x168] sm:$0xff]
        %v1009 = vld [vmem:[#allocation2 + $0x170] sm:$0xff]
        %v1010 = vld [vmem:[#allocation2 + $0x178] sm:$0xff]
        %v1011 = vld [vmem:[#allocation2 + $0x180] sm:$0xff]
        %v1012 = vld [vmem:[#allocation2 + $0x188] sm:$0xff]
        %v1013 = vld [vmem:[#allocation2 + $0x190] sm:$0xff]
        %v1014 = vld [vmem:[#allocation2 + $0x198] sm:$0xff]
        %v1015 = vld [vmem:[#allocation2 + $0x1a0] sm:$0xff]
        %v1016 = vld [vmem:[#allocation2 + $0x1a8] sm:$0xff]
        %v1017 = vld [vmem:[#allocation2 + $0x1b0] sm:$0xff]
        %v1018 = vld [vmem:[#allocation2 + $0x1b8] sm:$0xff]
        %v1019 = vld [vmem:[#allocation2 + $0x1c0] sm:$0xff]
        %v1020 = vld [vmem:[#allocation2 + $0x1c8] sm:$0xff]
        %v1021 = vld [vmem:[#allocation2 + $0x1d0] sm:$0xff]
        %v1022 = vld [vmem:[#allocation2 + $0x1d8] sm:$0xff]
        %v1023 = vld [vmem:[#allocation2 + $0x1e0] sm:$0xff]
        %v1024 = vld [vmem:[#allocation2 + $0x1e8] sm:$0xff]
        %v1025 = vld [vmem:[#allocation2 + $0x1f0] sm:$0xff]
        %v1026 = vld [vmem:[#allocation2 + $0x1f8] sm:$0xff]
        %v1027 = vld [vmem:[#allocation2 + $0x200] sm:$0xff]
        %v1028 = vld [vmem:[#allocation2 + $0x208] sm:$0xff]
        %v1029 = vld [vmem:[#allocation2 + $0x210] sm:$0xff]
        %v1030 = vld [vmem:[#allocation2 + $0x218] sm:$0xff]
        %v1031 = vld [vmem:[#allocation2 + $0x220] sm:$0xff]
        %v1032 = vld [vmem:[#allocation2 + $0x228] sm:$0xff]
        %v1033 = vld [vmem:[#allocation2 + $0x230] sm:$0xff]
        %v1034 = vld [vmem:[#allocation2 + $0x238] sm:$0xff]
        %v1035 = vld [vmem:[#allocation2 + $0x240] sm:$0xff]
        %v1036 = vld [vmem:[#allocation2 + $0x248] sm:$0xff]
        %v1037 = vld [vmem:[#allocation2 + $0x250] sm:$0xff]
        %v1038 = vld [vmem:[#allocation2 + $0x258] sm:$0xff]
        %v1039 = vld [vmem:[#allocation2 + $0x260] sm:$0xff]
        %v1040 = vld [vmem:[#allocation2 + $0x268] sm:$0xff]
        %v1041 = vld [vmem:[#allocation2 + $0x270] sm:$0xff]
        %v1042 = vld [vmem:[#allocation2 + $0x278] sm:$0xff]
        %v1043 = vld [vmem:[#allocation2 + $0x280] sm:$0xff]
        %v1044 = vld [vmem:[#allocation2 + $0x288] sm:$0xff]
        %v1045 = vld [vmem:[#allocation2 + $0x290] sm:$0xff]
        %v1046 = vld [vmem:[#allocation2 + $0x298] sm:$0xff]
        %v1047 = vld [vmem:[#allocation2 + $0x2a0] sm:$0xff]
        %v1048 = vld [vmem:[#allocation2 + $0x2a8] sm:$0xff]
        %v1049 = vld [vmem:[#allocation2 + $0x2b0] sm:$0xff]
        %v1050 = vld [vmem:[#allocation2 + $0x2b8] sm:$0xff]
        %v1051 = vld [vmem:[#allocation2 + $0x2c0] sm:$0xff]
        %v1052 = vld [vmem:[#allocation2 + $0x2c8] sm:$0xff]
        %v1053 = vld [vmem:[#allocation2 + $0x2d0] sm:$0xff]
        %v1054 = vld [vmem:[#allocation2 + $0x2d8] sm:$0xff]
        %v1055 = vld [vmem:[#allocation2 + $0x2e0] sm:$0xff]
        %v1056 = vld [vmem:[#allocation2 + $0x2e8] sm:$0xff]
        %v1057 = vld [vmem:[#allocation2 + $0x2f0] sm:$0xff]
        %v1058 = vld [vmem:[#allocation2 + $0x2f8] sm:$0xff]
        %v1059 = vld [vmem:[#allocation2 + $0x300] sm:$0xff]
        %v1060 = vld [vmem:[#allocation2 + $0x308] sm:$0xff]
        %v1061 = vld [vmem:[#allocation2 + $0x310] sm:$0xff]
        %v1062 = vld [vmem:[#allocation2 + $0x318] sm:$0xff]
        %v1063 = vld [vmem:[%s2] sm:$0xff]
        %v1064 = vld [vmem:[%s2 + $0x8] sm:$0xff]
        %v1065 = vld [vmem:[%s2 + $0x10] sm:$0xff]
        %v1066 = vld [vmem:[%s2 + $0x18] sm:$0xff]
        %1068 = vset.pattern.permute.xlu0 0
        %1069 = vperm.xlu0 %1068, %v1063
        %v1070 = vpop.permute.xlu0 %1069
        %1073 = vset.pattern.permute.xlu0 0
        %1074 = vperm.xlu0 %1073, %v1064
        %v1075 = vpop.permute.xlu0 %1074
        %1078 = vset.pattern.permute.xlu0 0
        %1079 = vperm.xlu0 %1078, %v1065
        %v1080 = vpop.permute.xlu0 %1079
        %1083 = vset.pattern.permute.xlu0 0
        %1084 = vperm.xlu0 %1083, %v1066
        %v1085 = vpop.permute.xlu0 %1084
        %v1103 = vunpack.c.l.b16 %v947
        %v1104 = vunpack.c.h.b16 %v947
        %v1105 = vunpack.c.l.b16 %v948
        %v1106 = vunpack.c.h.b16 %v948
        %v1107 = vunpack.c.l.b16 %v949
        %v1108 = vunpack.c.h.b16 %v949
        %v1109 = vunpack.c.l.b16 %v950
        %v1110 = vunpack.c.l.b16 %v951
        %v1111 = vunpack.c.h.b16 %v951
        %v1112 = vunpack.c.l.b16 %v952
        %v1113 = vunpack.c.h.b16 %v952
        %v1114 = vunpack.c.l.b16 %v953
        %v1115 = vunpack.c.h.b16 %v953
        %v1116 = vunpack.c.l.b16 %v954
        %v1117 = vunpack.c.l.b16 %v955
        %v1118 = vunpack.c.h.b16 %v955
        %v1119 = vunpack.c.l.b16 %v956
        %v1120 = vunpack.c.h.b16 %v956
        %v1121 = vunpack.c.l.b16 %v957
        %v1122 = vunpack.c.h.b16 %v957
        %v1123 = vunpack.c.l.b16 %v958
        %v1124 = vunpack.c.l.b16 %v959
        %v1125 = vunpack.c.h.b16 %v959
        %v1126 = vunpack.c.l.b16 %v960
        %v1127 = vunpack.c.h.b16 %v960
        %v1128 = vunpack.c.l.b16 %v961
        %v1129 = vunpack.c.h.b16 %v961
        %v1130 = vunpack.c.l.b16 %v962
        %v1131 = vpack.c.b16 %v1110, %v1103
        %v1132 = vpack.c.b16 %v1111, %v1104
        %v1133 = vpack.c.b16 %v1112, %v1105
        %v1134 = vpack.c.b16 %v1113, %v1106
        %v1135 = vpack.c.b16 %v1114, %v1107
        %v1136 = vpack.c.b16 %v1115, %v1108
        %v1137 = vpack.c.b16 %v1116, %v1109
        %v1138 = vpack.c.b16 %v1124, %v1117
        %v1139 = vpack.c.b16 %v1125, %v1118
        %v1140 = vpack.c.b16 %v1126, %v1119
        %v1141 = vpack.c.b16 %v1127, %v1120
        %v1142 = vpack.c.b16 %v1128, %v1121
        %v1143 = vpack.c.b16 %v1129, %v1122
        %v1144 = vpack.c.b16 %v1130, %v1123
        %v1257 = vunpack.c.l.b16 %v963
        %v1258 = vunpack.c.h.b16 %v963
        %v1259 = vunpack.c.l.b16 %v964
        %v1260 = vunpack.c.h.b16 %v964
        %v1261 = vunpack.c.l.b16 %v965
        %v1262 = vunpack.c.h.b16 %v965
        %v1263 = vunpack.c.l.b16 %v966
        %v1264 = vunpack.c.h.b16 %v966
        %v1265 = vunpack.c.l.b16 %v967
        %v1266 = vunpack.c.h.b16 %v967
        %v1267 = vunpack.c.l.b16 %v968
        %v1268 = vunpack.c.h.b16 %v968
        %v1269 = vunpack.c.l.b16 %v969
        %v1270 = vunpack.c.h.b16 %v969
        %v1271 = vunpack.c.l.b16 %v970
        %v1272 = vunpack.c.h.b16 %v970
        %v1273 = vunpack.c.l.b16 %v971
        %v1274 = vunpack.c.h.b16 %v971
        %v1275 = vunpack.c.l.b16 %v972
        %v1276 = vunpack.c.h.b16 %v972
        %v1277 = vunpack.c.l.b16 %v973
        %v1278 = vunpack.c.h.b16 %v973
        %v1279 = vunpack.c.l.b16 %v974
        %v1280 = vunpack.c.h.b16 %v974
        %v1281 = vunpack.c.l.b16 %v975
        %v1282 = vunpack.c.h.b16 %v975
        %v1283 = vunpack.c.l.b16 %v976
        %v1284 = vunpack.c.h.b16 %v976
        %v1285 = vunpack.c.l.b16 %v977
        %v1286 = vunpack.c.h.b16 %v977
        %v1287 = vunpack.c.l.b16 %v978
        %v1288 = vunpack.c.h.b16 %v978
        %v1289 = vunpack.c.l.b16 %v979
        %v1290 = vunpack.c.h.b16 %v979
        %v1291 = vunpack.c.l.b16 %v980
        %v1292 = vunpack.c.h.b16 %v980
        %v1293 = vunpack.c.l.b16 %v981
        %v1294 = vunpack.c.h.b16 %v981
        %v1295 = vunpack.c.l.b16 %v982
        %v1296 = vunpack.c.h.b16 %v982
        %v1297 = vunpack.c.l.b16 %v983
        %v1298 = vunpack.c.h.b16 %v983
        %v1299 = vunpack.c.l.b16 %v984
        %v1300 = vunpack.c.h.b16 %v984
        %v1301 = vunpack.c.l.b16 %v985
        %v1302 = vunpack.c.h.b16 %v985
        %v1303 = vunpack.c.l.b16 %v986
        %v1304 = vunpack.c.h.b16 %v986
        %v1305 = vunpack.c.l.b16 %v987
        %v1306 = vunpack.c.h.b16 %v987
        %v1307 = vunpack.c.l.b16 %v988
        %v1308 = vunpack.c.h.b16 %v988
        %v1309 = vunpack.c.l.b16 %v989
        %v1310 = vunpack.c.h.b16 %v989
        %v1311 = vunpack.c.l.b16 %v990
        %v1312 = vunpack.c.h.b16 %v990
        %v1313 = vunpack.c.l.b16 %v991
        %v1314 = vunpack.c.h.b16 %v991
        %v1315 = vunpack.c.l.b16 %v992
        %v1316 = vunpack.c.h.b16 %v992
        %v1317 = vunpack.c.l.b16 %v993
        %v1318 = vunpack.c.h.b16 %v993
        %v1319 = vunpack.c.l.b16 %v994
        %v1320 = vunpack.c.h.b16 %v994
        %v1321 = vunpack.c.l.b16 %v995
        %v1322 = vunpack.c.h.b16 %v995
        %v1323 = vunpack.c.l.b16 %v996
        %v1324 = vunpack.c.h.b16 %v996
        %v1325 = vunpack.c.l.b16 %v997
        %v1326 = vunpack.c.h.b16 %v997
        %v1327 = vunpack.c.l.b16 %v998
        %v1328 = vunpack.c.h.b16 %v998
        %v1329 = vunpack.c.l.b16 %v999
        %v1330 = vunpack.c.h.b16 %v999
        %v1331 = vunpack.c.l.b16 %v1000
        %v1332 = vunpack.c.h.b16 %v1000
        %v1333 = vunpack.c.l.b16 %v1001
        %v1334 = vunpack.c.h.b16 %v1001
        %v1335 = vunpack.c.l.b16 %v1002
        %v1336 = vunpack.c.h.b16 %v1002
        %v1337 = vunpack.c.l.b16 %v1003
        %v1338 = vunpack.c.h.b16 %v1003
        %v1339 = vunpack.c.l.b16 %v1004
        %v1340 = vunpack.c.h.b16 %v1004
        %v1341 = vunpack.c.l.b16 %v1005
        %v1342 = vunpack.c.h.b16 %v1005
        %v1343 = vunpack.c.l.b16 %v1006
        %v1344 = vunpack.c.h.b16 %v1006
        %v1345 = vunpack.c.l.b16 %v1007
        %v1346 = vunpack.c.h.b16 %v1007
        %v1347 = vunpack.c.l.b16 %v1008
        %v1348 = vunpack.c.h.b16 %v1008
        %v1349 = vunpack.c.l.b16 %v1009
        %v1350 = vunpack.c.h.b16 %v1009
        %v1351 = vunpack.c.l.b16 %v1010
        %v1352 = vunpack.c.h.b16 %v1010
        %v1353 = vunpack.c.l.b16 %v1011
        %v1354 = vunpack.c.h.b16 %v1011
        %v1355 = vunpack.c.l.b16 %v1012
        %v1356 = vunpack.c.h.b16 %v1012
        %v1357 = vunpack.c.l.b16 %v1013
        %v1358 = vunpack.c.h.b16 %v1013
        %v1359 = vunpack.c.l.b16 %v1014
        %v1360 = vunpack.c.h.b16 %v1014
        %v1361 = vunpack.c.l.b16 %v1015
        %v1362 = vunpack.c.h.b16 %v1015
        %v1363 = vunpack.c.l.b16 %v1016
        %v1364 = vunpack.c.h.b16 %v1016
        %v1365 = vunpack.c.l.b16 %v1017
        %v1366 = vunpack.c.h.b16 %v1017
        %v1367 = vunpack.c.l.b16 %v1018
        %v1368 = vunpack.c.h.b16 %v1018
        %v1369 = vunpack.c.l.b16 %v1019
        %v1370 = vunpack.c.h.b16 %v1019
        %v1371 = vunpack.c.l.b16 %v1020
        %v1372 = vunpack.c.h.b16 %v1020
        %v1373 = vunpack.c.l.b16 %v1021
        %v1374 = vunpack.c.h.b16 %v1021
        %v1375 = vunpack.c.l.b16 %v1022
        %v1376 = vunpack.c.h.b16 %v1022
        %v1377 = vunpack.c.l.b16 %v1023
        %v1378 = vunpack.c.h.b16 %v1023
        %v1379 = vunpack.c.l.b16 %v1024
        %v1380 = vunpack.c.h.b16 %v1024
        %v1381 = vunpack.c.l.b16 %v1025
        %v1382 = vunpack.c.h.b16 %v1025
        %v1383 = vunpack.c.l.b16 %v1026
        %v1384 = vunpack.c.h.b16 %v1026
        %v1385 = vunpack.c.l.b16 %v1027
        %v1386 = vunpack.c.h.b16 %v1027
        %v1387 = vunpack.c.l.b16 %v1028
        %v1388 = vunpack.c.h.b16 %v1028
        %v1389 = vunpack.c.l.b16 %v1029
        %v1390 = vunpack.c.h.b16 %v1029
        %v1391 = vunpack.c.l.b16 %v1030
        %v1392 = vunpack.c.h.b16 %v1030
        %v1393 = vunpack.c.l.b16 %v1031
        %v1394 = vunpack.c.h.b16 %v1031
        %v1395 = vunpack.c.l.b16 %v1032
        %v1396 = vunpack.c.h.b16 %v1032
        %v1397 = vunpack.c.l.b16 %v1033
        %v1398 = vunpack.c.h.b16 %v1033
        %v1399 = vunpack.c.l.b16 %v1034
        %v1400 = vunpack.c.h.b16 %v1034
        %v1401 = vunpack.c.l.b16 %v1035
        %v1402 = vunpack.c.h.b16 %v1035
        %v1403 = vunpack.c.l.b16 %v1036
        %v1404 = vunpack.c.h.b16 %v1036
        %v1405 = vunpack.c.l.b16 %v1037
        %v1406 = vunpack.c.h.b16 %v1037
        %v1407 = vunpack.c.l.b16 %v1038
        %v1408 = vunpack.c.h.b16 %v1038
        %v1409 = vunpack.c.l.b16 %v1039
        %v1410 = vunpack.c.h.b16 %v1039
        %v1411 = vunpack.c.l.b16 %v1040
        %v1412 = vunpack.c.h.b16 %v1040
        %v1413 = vunpack.c.l.b16 %v1041
        %v1414 = vunpack.c.h.b16 %v1041
        %v1415 = vunpack.c.l.b16 %v1042
        %v1416 = vunpack.c.h.b16 %v1042
        %v1417 = vunpack.c.l.b16 %v1043
        %v1418 = vunpack.c.h.b16 %v1043
        %v1419 = vunpack.c.l.b16 %v1044
        %v1420 = vunpack.c.h.b16 %v1044
        %v1421 = vunpack.c.l.b16 %v1045
        %v1422 = vunpack.c.h.b16 %v1045
        %v1423 = vunpack.c.l.b16 %v1046
        %v1424 = vunpack.c.h.b16 %v1046
        %v1425 = vunpack.c.l.b16 %v1047
        %v1426 = vunpack.c.h.b16 %v1047
        %v1427 = vunpack.c.l.b16 %v1048
        %v1428 = vunpack.c.h.b16 %v1048
        %v1429 = vunpack.c.l.b16 %v1049
        %v1430 = vunpack.c.h.b16 %v1049
        %v1431 = vunpack.c.l.b16 %v1050
        %v1432 = vunpack.c.h.b16 %v1050
        %v1433 = vunpack.c.l.b16 %v1051
        %v1434 = vunpack.c.h.b16 %v1051
        %v1435 = vunpack.c.l.b16 %v1052
        %v1436 = vunpack.c.h.b16 %v1052
        %v1437 = vunpack.c.l.b16 %v1053
        %v1438 = vunpack.c.h.b16 %v1053
        %v1439 = vunpack.c.l.b16 %v1054
        %v1440 = vunpack.c.h.b16 %v1054
        %v1441 = vunpack.c.l.b16 %v1055
        %v1442 = vunpack.c.h.b16 %v1055
        %v1443 = vunpack.c.l.b16 %v1056
        %v1444 = vunpack.c.h.b16 %v1056
        %v1445 = vunpack.c.l.b16 %v1057
        %v1446 = vunpack.c.h.b16 %v1057
        %v1447 = vunpack.c.l.b16 %v1058
        %v1448 = vunpack.c.h.b16 %v1058
        %v1449 = vunpack.c.l.b16 %v1059
        %v1450 = vunpack.c.h.b16 %v1059
        %v1451 = vunpack.c.l.b16 %v1060
        %v1452 = vunpack.c.h.b16 %v1060
        %v1453 = vunpack.c.l.b16 %v1061
        %v1454 = vunpack.c.h.b16 %v1061
        %v1455 = vunpack.c.l.b16 %v1062
        %v1456 = vunpack.c.h.b16 %v1062
        %v1457 = vpack.c.b16 %v1259, %v1257
        %v1458 = vpack.c.b16 %v1260, %v1258
        %v1459 = vpack.c.b16 %v1263, %v1261
        %v1460 = vpack.c.b16 %v1264, %v1262
        %v1461 = vpack.c.b16 %v1267, %v1265
        %v1462 = vpack.c.b16 %v1268, %v1266
        %v1463 = vpack.c.b16 %v1271, %v1269
        %v1464 = vpack.c.b16 %v1272, %v1270
        %v1465 = vpack.c.b16 %v1275, %v1273
        %v1466 = vpack.c.b16 %v1276, %v1274
        %v1467 = vpack.c.b16 %v1279, %v1277
        %v1468 = vpack.c.b16 %v1280, %v1278
        %v1469 = vpack.c.b16 %v1283, %v1281
        %v1470 = vpack.c.b16 %v1284, %v1282
        %v1471 = vpack.c.b16 %v1287, %v1285
        %v1472 = vpack.c.b16 %v1288, %v1286
        %v1473 = vpack.c.b16 %v1291, %v1289
        %v1474 = vpack.c.b16 %v1292, %v1290
        %v1475 = vpack.c.b16 %v1295, %v1293
        %v1476 = vpack.c.b16 %v1296, %v1294
        %v1477 = vpack.c.b16 %v1299, %v1297
        %v1478 = vpack.c.b16 %v1300, %v1298
        %v1479 = vpack.c.b16 %v1303, %v1301
        %v1480 = vpack.c.b16 %v1304, %v1302
        %v1481 = vpack.c.b16 %v1307, %v1305
        %v1482 = vpack.c.b16 %v1308, %v1306
        %v1483 = vpack.c.b16 %v1311, %v1309
        %v1484 = vpack.c.b16 %v1312, %v1310
        %v1485 = vpack.c.b16 %v1315, %v1313
        %v1486 = vpack.c.b16 %v1316, %v1314
        %v1487 = vpack.c.b16 %v1319, %v1317
        %v1488 = vpack.c.b16 %v1320, %v1318
        %v1489 = vpack.c.b16 %v1323, %v1321
        %v1490 = vpack.c.b16 %v1324, %v1322
        %v1491 = vpack.c.b16 %v1327, %v1325
        %v1492 = vpack.c.b16 %v1328, %v1326
        %v1493 = vpack.c.b16 %v1331, %v1329
        %v1494 = vpack.c.b16 %v1332, %v1330
        %v1495 = vpack.c.b16 %v1335, %v1333
        %v1496 = vpack.c.b16 %v1336, %v1334
        %v1497 = vpack.c.b16 %v1339, %v1337
        %v1498 = vpack.c.b16 %v1340, %v1338
        %v1499 = vpack.c.b16 %v1343, %v1341
        %v1500 = vpack.c.b16 %v1344, %v1342
        %v1501 = vpack.c.b16 %v1347, %v1345
        %v1502 = vpack.c.b16 %v1348, %v1346
        %v1503 = vpack.c.b16 %v1351, %v1349
        %v1504 = vpack.c.b16 %v1352, %v1350
        %v1505 = vpack.c.b16 %v1355, %v1353
        %v1506 = vpack.c.b16 %v1356, %v1354
        %v1507 = vpack.c.b16 %v1359, %v1357
        %v1508 = vpack.c.b16 %v1360, %v1358
        %v1509 = vpack.c.b16 %v1363, %v1361
        %v1510 = vpack.c.b16 %v1364, %v1362
        %v1511 = vpack.c.b16 %v1367, %v1365
        %v1512 = vpack.c.b16 %v1368, %v1366
        %v1513 = vpack.c.b16 %v1371, %v1369
        %v1514 = vpack.c.b16 %v1372, %v1370
        %v1515 = vpack.c.b16 %v1375, %v1373
        %v1516 = vpack.c.b16 %v1376, %v1374
        %v1517 = vpack.c.b16 %v1379, %v1377
        %v1518 = vpack.c.b16 %v1380, %v1378
        %v1519 = vpack.c.b16 %v1383, %v1381
        %v1520 = vpack.c.b16 %v1384, %v1382
        %v1521 = vpack.c.b16 %v1387, %v1385
        %v1522 = vpack.c.b16 %v1388, %v1386
        %v1523 = vpack.c.b16 %v1391, %v1389
        %v1524 = vpack.c.b16 %v1392, %v1390
        %v1525 = vpack.c.b16 %v1395, %v1393
        %v1526 = vpack.c.b16 %v1396, %v1394
        %v1527 = vpack.c.b16 %v1399, %v1397
        %v1528 = vpack.c.b16 %v1400, %v1398
        %v1529 = vpack.c.b16 %v1403, %v1401
        %v1530 = vpack.c.b16 %v1404, %v1402
        %v1531 = vpack.c.b16 %v1407, %v1405
        %v1532 = vpack.c.b16 %v1408, %v1406
        %v1533 = vpack.c.b16 %v1411, %v1409
        %v1534 = vpack.c.b16 %v1412, %v1410
        %v1535 = vpack.c.b16 %v1415, %v1413
        %v1536 = vpack.c.b16 %v1416, %v1414
        %v1537 = vpack.c.b16 %v1419, %v1417
        %v1538 = vpack.c.b16 %v1420, %v1418
        %v1539 = vpack.c.b16 %v1423, %v1421
        %v1540 = vpack.c.b16 %v1424, %v1422
        %v1541 = vpack.c.b16 %v1427, %v1425
        %v1542 = vpack.c.b16 %v1428, %v1426
        %v1543 = vpack.c.b16 %v1431, %v1429
        %v1544 = vpack.c.b16 %v1432, %v1430
        %v1545 = vpack.c.b16 %v1435, %v1433
        %v1546 = vpack.c.b16 %v1436, %v1434
        %v1547 = vpack.c.b16 %v1439, %v1437
        %v1548 = vpack.c.b16 %v1440, %v1438
        %v1549 = vpack.c.b16 %v1443, %v1441
        %v1550 = vpack.c.b16 %v1444, %v1442
        %v1551 = vpack.c.b16 %v1447, %v1445
        %v1552 = vpack.c.b16 %v1448, %v1446
        %v1553 = vpack.c.b16 %v1451, %v1449
        %v1554 = vpack.c.b16 %v1452, %v1450
        %v1555 = vpack.c.b16 %v1455, %v1453
        %v1556 = vpack.c.b16 %v1456, %v1454
        %vm1657 = vcmask 261120
        %v1659 = vsel %vm1657, %v1137, 0
        %v1662 = vsel %vm1657, %v1144, 0
        %1664 = vmatprep.subr.bf16.mxu0 %v1472
        %1665 = vmatpush1.bf16.msra.mxu0 %v1471
        %1666 = vmatprep.subr.bf16.mxu0 %v1470
        %1667 = vmatpush1.bf16.msra.mxu0 %v1469
        %1668 = vmatprep.subr.bf16.mxu0 %v1468
        %1669 = vmatpush1.bf16.msra.mxu0 %v1467
        %1670 = vmatprep.subr.bf16.mxu0 %v1466
        %1671 = vmatpush1.bf16.msra.mxu0 %v1465
        %1672 = vmatprep.subr.bf16.mxu0 %v1464
        %1673 = vmatpush1.bf16.msra.mxu0 %v1463
        %1674 = vmatprep.subr.bf16.mxu0 %v1462
        %1675 = vmatpush1.bf16.msra.mxu0 %v1461
        %1676 = vmatprep.subr.bf16.mxu0 %v1460
        %1677 = vmatpush1.bf16.msra.mxu0 %v1459
        %1678 = vmatprep.subr.bf16.mxu0 %v1458
        %1679 = vmatpush1.bf16.msra.mxu0 %v1457
        %1680 = vmatprep.subr.bf16.mxu0 %v1488
        %1681 = vmatpush2.bf16.msra.mxu0 %v1487
        %1682 = vmatprep.subr.bf16.mxu0 %v1486
        %1683 = vmatpush2.bf16.msra.mxu0 %v1485
        %1684 = vmatprep.subr.bf16.mxu0 %v1484
        %1685 = vmatpush2.bf16.msra.mxu0 %v1483
        %1686 = vmatprep.subr.bf16.mxu0 %v1482
        %1687 = vmatpush2.bf16.msra.mxu0 %v1481
        %1688 = vmatprep.subr.bf16.mxu0 %v1480
        %1689 = vmatpush2.bf16.msra.mxu0 %v1479
        %1690 = vmatprep.subr.bf16.mxu0 %v1478
        %1691 = vmatpush2.bf16.msra.mxu0 %v1477
        %1692 = vmatprep.subr.bf16.mxu0 %v1476
        %1693 = vmatpush2.bf16.msra.mxu0 %v1475
        %1694 = vmatprep.subr.bf16.mxu0 %v1474
        %1695 = vmatpush2.bf16.msra.mxu0 %v1473
        %1696 = vmatprep.mubr.bf16.mxu0 %v1132
        %1697 = vmatmul.mubr.bf16.gmra.mxu0 %v1131
        %v1698 = vpop.f32.mrf.mxu0
        %v1699 = vadd.f32 %v1070, %v1698
        %v1700 = vpop.f32.mrf.mxu0
        %v1701 = vadd.f32 %v1070, %v1700
        %v1702 = vpop.f32.mrf.mxu0
        %v1703 = vadd.f32 %v1075, %v1702
        %v1704 = vpop.f32.mrf.mxu0
        %v1705 = vadd.f32 %v1075, %v1704
        %1706 = vmatprep.mubr.bf16.mxu0 %v1139
        %1707 = vmatmul.mubr.bf16.gmra.mxu0 %v1138
        %v1708 = vpop.f32.mrf.mxu0
        %v1709 = vadd.f32 %v1080, %v1708
        %v1710 = vpop.f32.mrf.mxu0
        %v1711 = vadd.f32 %v1080, %v1710
        %v1712 = vpop.f32.mrf.mxu0
        %v1713 = vadd.f32 %v1085, %v1712
        %v1714 = vpop.f32.mrf.mxu0
        %v1715 = vadd.f32 %v1085, %v1714
        %1716 = vdwg.mxu0
        %1717 = vmatprep.subr.bf16.mxu0 %v1504
        %1718 = vmatpush1.bf16.msra.mxu0 %v1503
        %1719 = vmatprep.subr.bf16.mxu0 %v1502
        %1720 = vmatpush1.bf16.msra.mxu0 %v1501
        %1721 = vmatprep.subr.bf16.mxu0 %v1500
        %1722 = vmatpush1.bf16.msra.mxu0 %v1499
        %1723 = vmatprep.subr.bf16.mxu0 %v1498
        %1724 = vmatpush1.bf16.msra.mxu0 %v1497
        %1725 = vmatprep.subr.bf16.mxu0 %v1496
        %1726 = vmatpush1.bf16.msra.mxu0 %v1495
        %1727 = vmatprep.subr.bf16.mxu0 %v1494
        %1728 = vmatpush1.bf16.msra.mxu0 %v1493
        %1729 = vmatprep.subr.bf16.mxu0 %v1492
        %1730 = vmatpush1.bf16.msra.mxu0 %v1491
        %1731 = vmatprep.subr.bf16.mxu0 %v1490
        %1732 = vmatpush1.bf16.msra.mxu0 %v1489
        %1733 = vmatprep.subr.bf16.mxu0 %v1520
        %1734 = vmatpush2.bf16.msra.mxu0 %v1519
        %1735 = vmatprep.subr.bf16.mxu0 %v1518
        %1736 = vmatpush2.bf16.msra.mxu0 %v1517
        %1737 = vmatprep.subr.bf16.mxu0 %v1516
        %1738 = vmatpush2.bf16.msra.mxu0 %v1515
        %1739 = vmatprep.subr.bf16.mxu0 %v1514
        %1740 = vmatpush2.bf16.msra.mxu0 %v1513
        %1741 = vmatprep.subr.bf16.mxu0 %v1512
        %1742 = vmatpush2.bf16.msra.mxu0 %v1511
        %1743 = vmatprep.subr.bf16.mxu0 %v1510
        %1744 = vmatpush2.bf16.msra.mxu0 %v1509
        %1745 = vmatprep.subr.bf16.mxu0 %v1508
        %1746 = vmatpush2.bf16.msra.mxu0 %v1507
        %1747 = vmatprep.subr.bf16.mxu0 %v1506
        %1748 = vmatpush2.bf16.msra.mxu0 %v1505
        %1749 = vmatprep.mubr.bf16.mxu0 %v1134
        %1750 = vmatmul.mubr.bf16.gmra.mxu0 %v1133
        %v1751 = vpop.f32.mrf.mxu0
        %v1752 = vadd.f32 %v1699, %v1751
        %v1753 = vpop.f32.mrf.mxu0
        %v1754 = vadd.f32 %v1701, %v1753
        %v1755 = vpop.f32.mrf.mxu0
        %v1756 = vadd.f32 %v1703, %v1755
        %v1757 = vpop.f32.mrf.mxu0
        %v1758 = vadd.f32 %v1705, %v1757
        %1759 = vmatprep.mubr.bf16.mxu0 %v1141
        %1760 = vmatmul.mubr.bf16.gmra.mxu0 %v1140
        %v1761 = vpop.f32.mrf.mxu0
        %v1762 = vadd.f32 %v1709, %v1761
        %v1763 = vpop.f32.mrf.mxu0
        %v1764 = vadd.f32 %v1711, %v1763
        %v1765 = vpop.f32.mrf.mxu0
        %v1766 = vadd.f32 %v1713, %v1765
        %v1767 = vpop.f32.mrf.mxu0
        %v1768 = vadd.f32 %v1715, %v1767
        %1769 = vdwg.mxu0
        %1770 = vmatprep.subr.bf16.mxu0 %v1536
        %1771 = vmatpush1.bf16.msra.mxu0 %v1535
        %1772 = vmatprep.subr.bf16.mxu0 %v1534
        %1773 = vmatpush1.bf16.msra.mxu0 %v1533
        %1774 = vmatprep.subr.bf16.mxu0 %v1532
        %1775 = vmatpush1.bf16.msra.mxu0 %v1531
        %1776 = vmatprep.subr.bf16.mxu0 %v1530
        %1777 = vmatpush1.bf16.msra.mxu0 %v1529
        %1778 = vmatprep.subr.bf16.mxu0 %v1528
        %1779 = vmatpush1.bf16.msra.mxu0 %v1527
        %1780 = vmatprep.subr.bf16.mxu0 %v1526
        %1781 = vmatpush1.bf16.msra.mxu0 %v1525
        %1782 = vmatprep.subr.bf16.mxu0 %v1524
        %1783 = vmatpush1.bf16.msra.mxu0 %v1523
        %1784 = vmatprep.subr.bf16.mxu0 %v1522
        %1785 = vmatpush1.bf16.msra.mxu0 %v1521
        %1786 = vmatprep.subr.bf16.mxu0 %v1552
        %1787 = vmatpush2.bf16.msra.mxu0 %v1551
        %1788 = vmatprep.subr.bf16.mxu0 %v1550
        %1789 = vmatpush2.bf16.msra.mxu0 %v1549
        %1790 = vmatprep.subr.bf16.mxu0 %v1548
        %1791 = vmatpush2.bf16.msra.mxu0 %v1547
        %1792 = vmatprep.subr.bf16.mxu0 %v1546
        %1793 = vmatpush2.bf16.msra.mxu0 %v1545
        %1794 = vmatprep.subr.bf16.mxu0 %v1544
        %1795 = vmatpush2.bf16.msra.mxu0 %v1543
        %1796 = vmatprep.subr.bf16.mxu0 %v1542
        %1797 = vmatpush2.bf16.msra.mxu0 %v1541
        %1798 = vmatprep.subr.bf16.mxu0 %v1540
        %1799 = vmatpush2.bf16.msra.mxu0 %v1539
        %1800 = vmatprep.subr.bf16.mxu0 %v1538
        %1801 = vmatpush2.bf16.msra.mxu0 %v1537
        %1802 = vmatprep.mubr.bf16.mxu0 %v1136
        %1803 = vmatmul.mubr.bf16.gmra.mxu0 %v1135
        %v1804 = vpop.f32.mrf.mxu0
        %v1805 = vadd.f32 %v1752, %v1804
        %v1806 = vpop.f32.mrf.mxu0
        %v1807 = vadd.f32 %v1754, %v1806
        %v1808 = vpop.f32.mrf.mxu0
        %v1809 = vadd.f32 %v1756, %v1808
        %v1810 = vpop.f32.mrf.mxu0
        %v1811 = vadd.f32 %v1758, %v1810
        %1812 = vmatprep.mubr.bf16.mxu0 %v1143
        %1813 = vmatmul.mubr.bf16.gmra.mxu0 %v1142
        %v1814 = vpop.f32.mrf.mxu0
        %v1815 = vadd.f32 %v1762, %v1814
        %v1816 = vpop.f32.mrf.mxu0
        %v1817 = vadd.f32 %v1764, %v1816
        %v1818 = vpop.f32.mrf.mxu0
        %v1819 = vadd.f32 %v1766, %v1818
        %v1820 = vpop.f32.mrf.mxu0
        %v1821 = vadd.f32 %v1768, %v1820
        %1822 = vdwg.mxu0
        %1823 = vmatprep.subr.bf16.mxu0 0
        %1824 = vmatpush1.bf16.msra.mxu0 0
        %1825 = vmatprep.subr.bf16.mxu0 0
        %1826 = vmatpush1.bf16.msra.mxu0 0
        %1827 = vmatprep.subr.bf16.mxu0 0
        %1828 = vmatpush1.bf16.msra.mxu0 0
        %1829 = vmatprep.subr.bf16.mxu0 0
        %1830 = vmatpush1.bf16.msra.mxu0 0
        %1831 = vmatprep.subr.bf16.mxu0 0
        %1832 = vmatpush1.bf16.msra.mxu0 0
        %1833 = vmatprep.subr.bf16.mxu0 0
        %1834 = vmatpush1.bf16.msra.mxu0 0
        %1835 = vmatprep.subr.bf16.mxu0 %v1556
        %1836 = vmatpush1.bf16.msra.mxu0 %v1555
        %1837 = vmatprep.subr.bf16.mxu0 %v1554
        %1838 = vmatpush1.bf16.msra.mxu0 %v1553
        %1839 = vmatprep.subr.bf16.mxu0 0
        %1840 = vmatpush2.bf16.msra.mxu0 0
        %1841 = vmatprep.subr.bf16.mxu0 0
        %1842 = vmatpush2.bf16.msra.mxu0 0
        %1843 = vmatprep.subr.bf16.mxu0 0
        %1844 = vmatpush2.bf16.msra.mxu0 0
        %1845 = vmatprep.subr.bf16.mxu0 0
        %1846 = vmatpush2.bf16.msra.mxu0 0
        %1847 = vmatprep.subr.bf16.mxu0 0
        %1848 = vmatpush2.bf16.msra.mxu0 0
        %1849 = vmatprep.subr.bf16.mxu0 0
        %1850 = vmatpush2.bf16.msra.mxu0 0
        %1851 = vmatprep.subr.bf16.mxu0 0
        %1852 = vmatpush2.bf16.msra.mxu0 0
        %1853 = vmatprep.subr.bf16.mxu0 0
        %1854 = vmatpush2.bf16.msra.mxu0 0
        %1855 = vmatprep.mubr.bf16.mxu0 0
        %1856 = vmatmul.mubr.bf16.gmra.mxu0 %v1659
        %v1857 = vpop.f32.mrf.mxu0
        %v1858 = vadd.f32 %v1805, %v1857
        %v1859 = vpop.f32.mrf.mxu0
        %v1860 = vadd.f32 %v1807, %v1859
        %v1861 = vpop.f32.mrf.mxu0
        %v1862 = vadd.f32 %v1809, %v1861
        %v1863 = vpop.f32.mrf.mxu0
        %v1864 = vadd.f32 %v1811, %v1863
        %1865 = vmatprep.mubr.bf16.mxu0 0
        %1866 = vmatmul.mubr.bf16.gmra.mxu0 %v1662
        %v1867 = vpop.f32.mrf.mxu0
        %v1868 = vadd.f32 %v1815, %v1867
        %v1869 = vpop.f32.mrf.mxu0
        %v1870 = vadd.f32 %v1817, %v1869
        %v1871 = vpop.f32.mrf.mxu0
        %v1872 = vadd.f32 %v1819, %v1871
        %v1873 = vpop.f32.mrf.mxu0
        %v1874 = vadd.f32 %v1821, %v1873
        %1875 = vdwg.mxu0
        %v1876 = vmax.f32 %v1858, 0.0
        %v1877 = vmax.f32 %v1860, 0.0
        %v1878 = vmax.f32 %v1862, 0.0
        %v1879 = vmax.f32 %v1864, 0.0
        %v1880 = vmax.f32 %v1868, 0.0
        %v1881 = vmax.f32 %v1870, 0.0
        %v1882 = vmax.f32 %v1872, 0.0
        %v1883 = vmax.f32 %v1874, 0.0
        %v1884 = vpack.c.bf16 %v1878, %v1876
        %v1885 = vpack.c.bf16 %v1879, %v1877
        %v1886 = vpack.c.bf16 %v1882, %v1880
        %v1887 = vpack.c.bf16 %v1883, %v1881
        %v1890 = vunpack.c.l.b16 %v1884
        %v1891 = vunpack.c.h.b16 %v1884
        %v1892 = vunpack.c.l.b16 %v1886
        %v1893 = vunpack.c.h.b16 %v1886
        %v1894 = vpack.c.b16 %v1890, %v1890
        %v1895 = vpack.c.b16 %v1891, %v1891
        %v1896 = vpack.c.b16 %v1892, %v1892
        %v1897 = vpack.c.b16 %v1893, %v1893
        %vm1902 = vcmask 977920
        %1903 = vst.msk [vmem:[#allocation3] sm:$0xf] %vm1902, %v1894
        %1904 = vst.msk [vmem:[#allocation3 + $0x4] sm:$0xf] %vm1902, %v1895
        %1905 = vst.msk [vmem:[#allocation3 + $0x8] sm:$0xf] %vm1902, %v1896
        %1906 = vst.msk [vmem:[#allocation3 + $0xc] sm:$0xf] %vm1902, %v1897
        %1907 = vrot.lane.b32.xlu0 %v1894, 127
        %v1908 = vpop.permute.xlu0 %1907
        %1909 = vrot.lane.b32.xlu0 %v1895, 127
        %v1910 = vpop.permute.xlu0 %1909
        %1911 = vrot.lane.b32.xlu0 %v1896, 127
        %v1912 = vpop.permute.xlu0 %1911
        %1913 = vrot.lane.b32.xlu0 %v1897, 127
        %v1914 = vpop.permute.xlu0 %1913
        %1919 = vst.msk [vmem:[#allocation3 + $0x10] sm:$0xf] %vm1902, %v1908
        %1920 = vst.msk [vmem:[#allocation3 + $0x14] sm:$0xf] %vm1902, %v1910
        %1921 = vst.msk [vmem:[#allocation3 + $0x18] sm:$0xf] %vm1902, %v1912
        %1922 = vst.msk [vmem:[#allocation3 + $0x1c] sm:$0xf] %vm1902, %v1914
        %1923 = vrot.lane.b32.xlu0 %v1894, 126
        %v1924 = vpop.permute.xlu0 %1923
        %1925 = vrot.lane.b32.xlu0 %v1895, 126
        %v1926 = vpop.permute.xlu0 %1925
        %1927 = vrot.lane.b32.xlu0 %v1896, 126
        %v1928 = vpop.permute.xlu0 %1927
        %1929 = vrot.lane.b32.xlu0 %v1897, 126
        %v1930 = vpop.permute.xlu0 %1929
        %1935 = vst.msk [vmem:[#allocation3 + $0x20] sm:$0xf] %vm1902, %v1924
        %1936 = vst.msk [vmem:[#allocation3 + $0x24] sm:$0xf] %vm1902, %v1926
        %1937 = vst.msk [vmem:[#allocation3 + $0x28] sm:$0xf] %vm1902, %v1928
        %1938 = vst.msk [vmem:[#allocation3 + $0x2c] sm:$0xf] %vm1902, %v1930
        %1939 = vrot.lane.b32.xlu0 %v1894, 125
        %v1940 = vpop.permute.xlu0 %1939
        %1941 = vrot.lane.b32.xlu0 %v1895, 125
        %v1942 = vpop.permute.xlu0 %1941
        %1943 = vrot.lane.b32.xlu0 %v1896, 125
        %v1944 = vpop.permute.xlu0 %1943
        %1945 = vrot.lane.b32.xlu0 %v1897, 125
        %v1946 = vpop.permute.xlu0 %1945
        %1951 = vst.msk [vmem:[#allocation3 + $0x30] sm:$0xf] %vm1902, %v1940
        %1952 = vst.msk [vmem:[#allocation3 + $0x34] sm:$0xf] %vm1902, %v1942
        %1953 = vst.msk [vmem:[#allocation3 + $0x38] sm:$0xf] %vm1902, %v1944
        %1954 = vst.msk [vmem:[#allocation3 + $0x3c] sm:$0xf] %vm1902, %v1946
        %1955 = vrot.lane.b32.xlu0 %v1894, 124
        %v1956 = vpop.permute.xlu0 %1955
        %1957 = vrot.lane.b32.xlu0 %v1895, 124
        %v1958 = vpop.permute.xlu0 %1957
        %1959 = vrot.lane.b32.xlu0 %v1896, 124
        %v1960 = vpop.permute.xlu0 %1959
        %1961 = vrot.lane.b32.xlu0 %v1897, 124
        %v1962 = vpop.permute.xlu0 %1961
        %1967 = vst.msk [vmem:[#allocation3 + $0x40] sm:$0xf] %vm1902, %v1956
        %1968 = vst.msk [vmem:[#allocation3 + $0x44] sm:$0xf] %vm1902, %v1958
        %1969 = vst.msk [vmem:[#allocation3 + $0x48] sm:$0xf] %vm1902, %v1960
        %1970 = vst.msk [vmem:[#allocation3 + $0x4c] sm:$0xf] %vm1902, %v1962
        %v1973 = vunpack.c.l.b16 %v1885
        %v1974 = vunpack.c.h.b16 %v1885
        %v1975 = vunpack.c.l.b16 %v1887
        %v1976 = vunpack.c.h.b16 %v1887
        %v1977 = vpack.c.b16 %v1973, %v1890
        %v1978 = vpack.c.b16 %v1974, %v1891
        %v1979 = vpack.c.b16 %v1975, %v1892
        %v1980 = vpack.c.b16 %v1976, %v1893
        %1981 = vrot.lane.b32.xlu0 %v1977, 112
        %v1982 = vpop.permute.xlu0 %1981
        %1983 = vrot.lane.b32.xlu0 %v1978, 112
        %v1984 = vpop.permute.xlu0 %1983
        %1985 = vrot.lane.b32.xlu0 %v1979, 112
        %v1986 = vpop.permute.xlu0 %1985
        %1987 = vrot.lane.b32.xlu0 %v1980, 112
        %v1988 = vpop.permute.xlu0 %1987
        %v1989 = vrot.slane %v1982, 4
        %v1990 = vrot.slane %v1984, 4
        %v1991 = vrot.slane %v1986, 4
        %v1992 = vrot.slane %v1988, 4
        %v1993 = vsel %vm459, %v1982, %v1989
        %v1994 = vsel %vm459, %v1984, %v1990
        %v1995 = vsel %vm459, %v1986, %v1991
        %v1996 = vsel %vm459, %v1988, %v1992
        %2001 = vst.msk [vmem:[#allocation3 + $0x50] sm:$0xf] %vm1902, %v1993
        %2002 = vst.msk [vmem:[#allocation3 + $0x54] sm:$0xf] %vm1902, %v1994
        %2003 = vst.msk [vmem:[#allocation3 + $0x58] sm:$0xf] %vm1902, %v1995
        %2004 = vst.msk [vmem:[#allocation3 + $0x5c] sm:$0xf] %vm1902, %v1996
        %2005 = vrot.lane.b32.xlu0 %v1977, 111
        %v2006 = vpop.permute.xlu0 %2005
        %2007 = vrot.lane.b32.xlu0 %v1978, 111
        %v2008 = vpop.permute.xlu0 %2007
        %2009 = vrot.lane.b32.xlu0 %v1979, 111
        %v2010 = vpop.permute.xlu0 %2009
        %2011 = vrot.lane.b32.xlu0 %v1980, 111
        %v2012 = vpop.permute.xlu0 %2011
        %v2013 = vrot.slane %v2006, 4
        %v2014 = vrot.slane %v2008, 4
        %v2015 = vrot.slane %v2010, 4
        %v2016 = vrot.slane %v2012, 4
        %v2017 = vsel %vm484, %v2006, %v2013
        %v2018 = vsel %vm484, %v2008, %v2014
        %v2019 = vsel %vm484, %v2010, %v2015
        %v2020 = vsel %vm484, %v2012, %v2016
        %2025 = vst.msk [vmem:[#allocation3 + $0x60] sm:$0xf] %vm1902, %v2017
        %2026 = vst.msk [vmem:[#allocation3 + $0x64] sm:$0xf] %vm1902, %v2018
        %2027 = vst.msk [vmem:[#allocation3 + $0x68] sm:$0xf] %vm1902, %v2019
        %2028 = vst.msk [vmem:[#allocation3 + $0x6c] sm:$0xf] %vm1902, %v2020
        %2029 = vrot.lane.b32.xlu0 %v1977, 110
        %v2030 = vpop.permute.xlu0 %2029
        %2031 = vrot.lane.b32.xlu0 %v1978, 110
        %v2032 = vpop.permute.xlu0 %2031
        %2033 = vrot.lane.b32.xlu0 %v1979, 110
        %v2034 = vpop.permute.xlu0 %2033
        %2035 = vrot.lane.b32.xlu0 %v1980, 110
        %v2036 = vpop.permute.xlu0 %2035
        %v2037 = vrot.slane %v2030, 4
        %v2038 = vrot.slane %v2032, 4
        %v2039 = vrot.slane %v2034, 4
        %v2040 = vrot.slane %v2036, 4
        %v2041 = vsel %vm509, %v2030, %v2037
        %v2042 = vsel %vm509, %v2032, %v2038
        %v2043 = vsel %vm509, %v2034, %v2039
        %v2044 = vsel %vm509, %v2036, %v2040
        %2049 = vst.msk [vmem:[#allocation3 + $0x70] sm:$0xf] %vm1902, %v2041
        %2050 = vst.msk [vmem:[#allocation3 + $0x74] sm:$0xf] %vm1902, %v2042
        %2051 = vst.msk [vmem:[#allocation3 + $0x78] sm:$0xf] %vm1902, %v2043
        %2052 = vst.msk [vmem:[#allocation3 + $0x7c] sm:$0xf] %vm1902, %v2044
        %2053 = vrot.lane.b32.xlu0 %v1977, 109
        %v2054 = vpop.permute.xlu0 %2053
        %2055 = vrot.lane.b32.xlu0 %v1978, 109
        %v2056 = vpop.permute.xlu0 %2055
        %2057 = vrot.lane.b32.xlu0 %v1979, 109
        %v2058 = vpop.permute.xlu0 %2057
        %2059 = vrot.lane.b32.xlu0 %v1980, 109
        %v2060 = vpop.permute.xlu0 %2059
        %v2061 = vrot.slane %v2054, 4
        %v2062 = vrot.slane %v2056, 4
        %v2063 = vrot.slane %v2058, 4
        %v2064 = vrot.slane %v2060, 4
        %v2065 = vsel %vm534, %v2054, %v2061
        %v2066 = vsel %vm534, %v2056, %v2062
        %v2067 = vsel %vm534, %v2058, %v2063
        %v2068 = vsel %vm534, %v2060, %v2064
        %2073 = vst.msk [vmem:[#allocation3 + $0x80] sm:$0xf] %vm1902, %v2065
        %2074 = vst.msk [vmem:[#allocation3 + $0x84] sm:$0xf] %vm1902, %v2066
        %2075 = vst.msk [vmem:[#allocation3 + $0x88] sm:$0xf] %vm1902, %v2067
        %2076 = vst.msk [vmem:[#allocation3 + $0x8c] sm:$0xf] %vm1902, %v2068
        %2077 = vrot.lane.b32.xlu0 %v1977, 108
        %v2078 = vpop.permute.xlu0 %2077
        %2079 = vrot.lane.b32.xlu0 %v1978, 108
        %v2080 = vpop.permute.xlu0 %2079
        %2081 = vrot.lane.b32.xlu0 %v1979, 108
        %v2082 = vpop.permute.xlu0 %2081
        %2083 = vrot.lane.b32.xlu0 %v1980, 108
        %v2084 = vpop.permute.xlu0 %2083
        %v2085 = vrot.slane %v2078, 4
        %v2086 = vrot.slane %v2080, 4
        %v2087 = vrot.slane %v2082, 4
        %v2088 = vrot.slane %v2084, 4
        %v2089 = vsel %vm559, %v2078, %v2085
        %v2090 = vsel %vm559, %v2080, %v2086
        %v2091 = vsel %vm559, %v2082, %v2087
        %v2092 = vsel %vm559, %v2084, %v2088
        %2097 = vst.msk [vmem:[#allocation3 + $0x90] sm:$0xf] %vm1902, %v2089
        %2098 = vst.msk [vmem:[#allocation3 + $0x94] sm:$0xf] %vm1902, %v2090
        %2099 = vst.msk [vmem:[#allocation3 + $0x98] sm:$0xf] %vm1902, %v2091
        %2100 = vst.msk [vmem:[#allocation3 + $0x9c] sm:$0xf] %vm1902, %v2092
        %2101 = vrot.lane.b32.xlu0 %v1977, 96
        %v2102 = vpop.permute.xlu0 %2101
        %2103 = vrot.lane.b32.xlu0 %v1978, 96
        %v2104 = vpop.permute.xlu0 %2103
        %2105 = vrot.lane.b32.xlu0 %v1979, 96
        %v2106 = vpop.permute.xlu0 %2105
        %2107 = vrot.lane.b32.xlu0 %v1980, 96
        %v2108 = vpop.permute.xlu0 %2107
        %v2109 = vrot.slane %v2102, 4
        %v2110 = vrot.slane %v2104, 4
        %v2111 = vrot.slane %v2106, 4
        %v2112 = vrot.slane %v2108, 4
        %v2113 = vsel %vm584, %v2102, %v2109
        %v2114 = vsel %vm584, %v2104, %v2110
        %v2115 = vsel %vm584, %v2106, %v2111
        %v2116 = vsel %vm584, %v2108, %v2112
        %2121 = vst.msk [vmem:[#allocation3 + $0xa0] sm:$0xf] %vm1902, %v2113
        %2122 = vst.msk [vmem:[#allocation3 + $0xa4] sm:$0xf] %vm1902, %v2114
        %2123 = vst.msk [vmem:[#allocation3 + $0xa8] sm:$0xf] %vm1902, %v2115
        %2124 = vst.msk [vmem:[#allocation3 + $0xac] sm:$0xf] %vm1902, %v2116
        %2125 = vrot.lane.b32.xlu0 %v1977, 95
        %v2126 = vpop.permute.xlu0 %2125
        %2127 = vrot.lane.b32.xlu0 %v1978, 95
        %v2128 = vpop.permute.xlu0 %2127
        %2129 = vrot.lane.b32.xlu0 %v1979, 95
        %v2130 = vpop.permute.xlu0 %2129
        %2131 = vrot.lane.b32.xlu0 %v1980, 95
        %v2132 = vpop.permute.xlu0 %2131
        %v2133 = vrot.slane %v2126, 4
        %v2134 = vrot.slane %v2128, 4
        %v2135 = vrot.slane %v2130, 4
        %v2136 = vrot.slane %v2132, 4
        %v2137 = vsel %vm609, %v2126, %v2133
        %v2138 = vsel %vm609, %v2128, %v2134
        %v2139 = vsel %vm609, %v2130, %v2135
        %v2140 = vsel %vm609, %v2132, %v2136
        %2145 = vst.msk [vmem:[#allocation3 + $0xb0] sm:$0xf] %vm1902, %v2137
        %2146 = vst.msk [vmem:[#allocation3 + $0xb4] sm:$0xf] %vm1902, %v2138
        %2147 = vst.msk [vmem:[#allocation3 + $0xb8] sm:$0xf] %vm1902, %v2139
        %2148 = vst.msk [vmem:[#allocation3 + $0xbc] sm:$0xf] %vm1902, %v2140
        %2149 = vrot.lane.b32.xlu0 %v1977, 94
        %v2150 = vpop.permute.xlu0 %2149
        %2151 = vrot.lane.b32.xlu0 %v1978, 94
        %v2152 = vpop.permute.xlu0 %2151
        %2153 = vrot.lane.b32.xlu0 %v1979, 94
        %v2154 = vpop.permute.xlu0 %2153
        %2155 = vrot.lane.b32.xlu0 %v1980, 94
        %v2156 = vpop.permute.xlu0 %2155
        %v2157 = vrot.slane %v2150, 4
        %v2158 = vrot.slane %v2152, 4
        %v2159 = vrot.slane %v2154, 4
        %v2160 = vrot.slane %v2156, 4
        %v2161 = vsel %vm634, %v2150, %v2157
        %v2162 = vsel %vm634, %v2152, %v2158
        %v2163 = vsel %vm634, %v2154, %v2159
        %v2164 = vsel %vm634, %v2156, %v2160
        %2169 = vst.msk [vmem:[#allocation3 + $0xc0] sm:$0xf] %vm1902, %v2161
        %2170 = vst.msk [vmem:[#allocation3 + $0xc4] sm:$0xf] %vm1902, %v2162
        %2171 = vst.msk [vmem:[#allocation3 + $0xc8] sm:$0xf] %vm1902, %v2163
        %2172 = vst.msk [vmem:[#allocation3 + $0xcc] sm:$0xf] %vm1902, %v2164
        %2173 = vrot.lane.b32.xlu0 %v1977, 93
        %v2174 = vpop.permute.xlu0 %2173
        %2175 = vrot.lane.b32.xlu0 %v1978, 93
        %v2176 = vpop.permute.xlu0 %2175
        %2177 = vrot.lane.b32.xlu0 %v1979, 93
        %v2178 = vpop.permute.xlu0 %2177
        %2179 = vrot.lane.b32.xlu0 %v1980, 93
        %v2180 = vpop.permute.xlu0 %2179
        %v2181 = vrot.slane %v2174, 4
        %v2182 = vrot.slane %v2176, 4
        %v2183 = vrot.slane %v2178, 4
        %v2184 = vrot.slane %v2180, 4
        %v2185 = vsel %vm659, %v2174, %v2181
        %v2186 = vsel %vm659, %v2176, %v2182
        %v2187 = vsel %vm659, %v2178, %v2183
        %v2188 = vsel %vm659, %v2180, %v2184
        %2193 = vst.msk [vmem:[#allocation3 + $0xd0] sm:$0xf] %vm1902, %v2185
        %2194 = vst.msk [vmem:[#allocation3 + $0xd4] sm:$0xf] %vm1902, %v2186
        %2195 = vst.msk [vmem:[#allocation3 + $0xd8] sm:$0xf] %vm1902, %v2187
        %2196 = vst.msk [vmem:[#allocation3 + $0xdc] sm:$0xf] %vm1902, %v2188
        %2197 = vrot.lane.b32.xlu0 %v1977, 92
        %v2198 = vpop.permute.xlu0 %2197
        %2199 = vrot.lane.b32.xlu0 %v1978, 92
        %v2200 = vpop.permute.xlu0 %2199
        %2201 = vrot.lane.b32.xlu0 %v1979, 92
        %v2202 = vpop.permute.xlu0 %2201
        %2203 = vrot.lane.b32.xlu0 %v1980, 92
        %v2204 = vpop.permute.xlu0 %2203
        %v2205 = vrot.slane %v2198, 4
        %v2206 = vrot.slane %v2200, 4
        %v2207 = vrot.slane %v2202, 4
        %v2208 = vrot.slane %v2204, 4
        %v2209 = vsel %vm684, %v2198, %v2205
        %v2210 = vsel %vm684, %v2200, %v2206
        %v2211 = vsel %vm684, %v2202, %v2207
        %v2212 = vsel %vm684, %v2204, %v2208
        %2217 = vst.msk [vmem:[#allocation3 + $0xe0] sm:$0xf] %vm1902, %v2209
        %2218 = vst.msk [vmem:[#allocation3 + $0xe4] sm:$0xf] %vm1902, %v2210
        %2219 = vst.msk [vmem:[#allocation3 + $0xe8] sm:$0xf] %vm1902, %v2211
        %2220 = vst.msk [vmem:[#allocation3 + $0xec] sm:$0xf] %vm1902, %v2212
        %2221 = vrot.lane.b32.xlu0 %v1977, 80
        %v2222 = vpop.permute.xlu0 %2221
        %2223 = vrot.lane.b32.xlu0 %v1978, 80
        %v2224 = vpop.permute.xlu0 %2223
        %2225 = vrot.lane.b32.xlu0 %v1979, 80
        %v2226 = vpop.permute.xlu0 %2225
        %2227 = vrot.lane.b32.xlu0 %v1980, 80
        %v2228 = vpop.permute.xlu0 %2227
        %v2229 = vrot.slane %v2222, 4
        %v2230 = vrot.slane %v2224, 4
        %v2231 = vrot.slane %v2226, 4
        %v2232 = vrot.slane %v2228, 4
        %v2233 = vsel %vm709, %v2222, %v2229
        %v2234 = vsel %vm709, %v2224, %v2230
        %v2235 = vsel %vm709, %v2226, %v2231
        %v2236 = vsel %vm709, %v2228, %v2232
        %2241 = vst.msk [vmem:[#allocation3 + $0xf0] sm:$0xf] %vm1902, %v2233
        %2242 = vst.msk [vmem:[#allocation3 + $0xf4] sm:$0xf] %vm1902, %v2234
        %2243 = vst.msk [vmem:[#allocation3 + $0xf8] sm:$0xf] %vm1902, %v2235
        %2244 = vst.msk [vmem:[#allocation3 + $0xfc] sm:$0xf] %vm1902, %v2236
        %2245 = vrot.lane.b32.xlu0 %v1977, 79
        %v2246 = vpop.permute.xlu0 %2245
        %2247 = vrot.lane.b32.xlu0 %v1978, 79
        %v2248 = vpop.permute.xlu0 %2247
        %2249 = vrot.lane.b32.xlu0 %v1979, 79
        %v2250 = vpop.permute.xlu0 %2249
        %2251 = vrot.lane.b32.xlu0 %v1980, 79
        %v2252 = vpop.permute.xlu0 %2251
        %v2253 = vrot.slane %v2246, 4
        %v2254 = vrot.slane %v2248, 4
        %v2255 = vrot.slane %v2250, 4
        %v2256 = vrot.slane %v2252, 4
        %v2257 = vsel %vm734, %v2246, %v2253
        %v2258 = vsel %vm734, %v2248, %v2254
        %v2259 = vsel %vm734, %v2250, %v2255
        %v2260 = vsel %vm734, %v2252, %v2256
        %2265 = vst.msk [vmem:[#allocation3 + $0x100] sm:$0xf] %vm1902, %v2257
        %2266 = vst.msk [vmem:[#allocation3 + $0x104] sm:$0xf] %vm1902, %v2258
        %2267 = vst.msk [vmem:[#allocation3 + $0x108] sm:$0xf] %vm1902, %v2259
        %2268 = vst.msk [vmem:[#allocation3 + $0x10c] sm:$0xf] %vm1902, %v2260
        %2269 = vrot.lane.b32.xlu0 %v1977, 78
        %v2270 = vpop.permute.xlu0 %2269
        %2271 = vrot.lane.b32.xlu0 %v1978, 78
        %v2272 = vpop.permute.xlu0 %2271
        %2273 = vrot.lane.b32.xlu0 %v1979, 78
        %v2274 = vpop.permute.xlu0 %2273
        %2275 = vrot.lane.b32.xlu0 %v1980, 78
        %v2276 = vpop.permute.xlu0 %2275
        %v2277 = vrot.slane %v2270, 4
        %v2278 = vrot.slane %v2272, 4
        %v2279 = vrot.slane %v2274, 4
        %v2280 = vrot.slane %v2276, 4
        %v2281 = vsel %vm759, %v2270, %v2277
        %v2282 = vsel %vm759, %v2272, %v2278
        %v2283 = vsel %vm759, %v2274, %v2279
        %v2284 = vsel %vm759, %v2276, %v2280
        %2289 = vst.msk [vmem:[#allocation3 + $0x110] sm:$0xf] %vm1902, %v2281
        %2290 = vst.msk [vmem:[#allocation3 + $0x114] sm:$0xf] %vm1902, %v2282
        %2291 = vst.msk [vmem:[#allocation3 + $0x118] sm:$0xf] %vm1902, %v2283
        %2292 = vst.msk [vmem:[#allocation3 + $0x11c] sm:$0xf] %vm1902, %v2284
        %2293 = vrot.lane.b32.xlu0 %v1977, 77
        %v2294 = vpop.permute.xlu0 %2293
        %2295 = vrot.lane.b32.xlu0 %v1978, 77
        %v2296 = vpop.permute.xlu0 %2295
        %2297 = vrot.lane.b32.xlu0 %v1979, 77
        %v2298 = vpop.permute.xlu0 %2297
        %2299 = vrot.lane.b32.xlu0 %v1980, 77
        %v2300 = vpop.permute.xlu0 %2299
        %v2301 = vrot.slane %v2294, 4
        %v2302 = vrot.slane %v2296, 4
        %v2303 = vrot.slane %v2298, 4
        %v2304 = vrot.slane %v2300, 4
        %v2305 = vsel %vm784, %v2294, %v2301
        %v2306 = vsel %vm784, %v2296, %v2302
        %v2307 = vsel %vm784, %v2298, %v2303
        %v2308 = vsel %vm784, %v2300, %v2304
        %2313 = vst.msk [vmem:[#allocation3 + $0x120] sm:$0xf] %vm1902, %v2305
        %2314 = vst.msk [vmem:[#allocation3 + $0x124] sm:$0xf] %vm1902, %v2306
        %2315 = vst.msk [vmem:[#allocation3 + $0x128] sm:$0xf] %vm1902, %v2307
        %2316 = vst.msk [vmem:[#allocation3 + $0x12c] sm:$0xf] %vm1902, %v2308
        %2317 = vrot.lane.b32.xlu0 %v1977, 76
        %v2318 = vpop.permute.xlu0 %2317
        %2319 = vrot.lane.b32.xlu0 %v1978, 76
        %v2320 = vpop.permute.xlu0 %2319
        %2321 = vrot.lane.b32.xlu0 %v1979, 76
        %v2322 = vpop.permute.xlu0 %2321
        %2323 = vrot.lane.b32.xlu0 %v1980, 76
        %v2324 = vpop.permute.xlu0 %2323
        %v2325 = vrot.slane %v2318, 4
        %v2326 = vrot.slane %v2320, 4
        %v2327 = vrot.slane %v2322, 4
        %v2328 = vrot.slane %v2324, 4
        %v2329 = vsel %vm809, %v2318, %v2325
        %v2330 = vsel %vm809, %v2320, %v2326
        %v2331 = vsel %vm809, %v2322, %v2327
        %v2332 = vsel %vm809, %v2324, %v2328
        %2337 = vst.msk [vmem:[#allocation3 + $0x130] sm:$0xf] %vm1902, %v2329
        %2338 = vst.msk [vmem:[#allocation3 + $0x134] sm:$0xf] %vm1902, %v2330
        %2339 = vst.msk [vmem:[#allocation3 + $0x138] sm:$0xf] %vm1902, %v2331
        %2340 = vst.msk [vmem:[#allocation3 + $0x13c] sm:$0xf] %vm1902, %v2332
        %2341 = vrot.lane.b32.xlu0 %v1977, 64
        %v2342 = vpop.permute.xlu0 %2341
        %2343 = vrot.lane.b32.xlu0 %v1978, 64
        %v2344 = vpop.permute.xlu0 %2343
        %2345 = vrot.lane.b32.xlu0 %v1979, 64
        %v2346 = vpop.permute.xlu0 %2345
        %2347 = vrot.lane.b32.xlu0 %v1980, 64
        %v2348 = vpop.permute.xlu0 %2347
        %v2349 = vrot.slane %v2342, 4
        %v2350 = vrot.slane %v2344, 4
        %v2351 = vrot.slane %v2346, 4
        %v2352 = vrot.slane %v2348, 4
        %v2353 = vsel %vm834, %v2342, %v2349
        %v2354 = vsel %vm834, %v2344, %v2350
        %v2355 = vsel %vm834, %v2346, %v2351
        %v2356 = vsel %vm834, %v2348, %v2352
        %2361 = vst.msk [vmem:[#allocation3 + $0x140] sm:$0xf] %vm1902, %v2353
        %2362 = vst.msk [vmem:[#allocation3 + $0x144] sm:$0xf] %vm1902, %v2354
        %2363 = vst.msk [vmem:[#allocation3 + $0x148] sm:$0xf] %vm1902, %v2355
        %2364 = vst.msk [vmem:[#allocation3 + $0x14c] sm:$0xf] %vm1902, %v2356
        %2365 = vrot.lane.b32.xlu0 %v1977, 63
        %v2366 = vpop.permute.xlu0 %2365
        %2367 = vrot.lane.b32.xlu0 %v1978, 63
        %v2368 = vpop.permute.xlu0 %2367
        %2369 = vrot.lane.b32.xlu0 %v1979, 63
        %v2370 = vpop.permute.xlu0 %2369
        %2371 = vrot.lane.b32.xlu0 %v1980, 63
        %v2372 = vpop.permute.xlu0 %2371
        %v2373 = vrot.slane %v2366, 4
        %v2374 = vrot.slane %v2368, 4
        %v2375 = vrot.slane %v2370, 4
        %v2376 = vrot.slane %v2372, 4
        %v2377 = vsel %vm859, %v2366, %v2373
        %v2378 = vsel %vm859, %v2368, %v2374
        %v2379 = vsel %vm859, %v2370, %v2375
        %v2380 = vsel %vm859, %v2372, %v2376
        %2385 = vst.msk [vmem:[#allocation3 + $0x150] sm:$0xf] %vm1902, %v2377
        %2386 = vst.msk [vmem:[#allocation3 + $0x154] sm:$0xf] %vm1902, %v2378
        %2387 = vst.msk [vmem:[#allocation3 + $0x158] sm:$0xf] %vm1902, %v2379
        %2388 = vst.msk [vmem:[#allocation3 + $0x15c] sm:$0xf] %vm1902, %v2380
        %2389 = vrot.lane.b32.xlu0 %v1977, 62
        %v2390 = vpop.permute.xlu0 %2389
        %2391 = vrot.lane.b32.xlu0 %v1978, 62
        %v2392 = vpop.permute.xlu0 %2391
        %2393 = vrot.lane.b32.xlu0 %v1979, 62
        %v2394 = vpop.permute.xlu0 %2393
        %2395 = vrot.lane.b32.xlu0 %v1980, 62
        %v2396 = vpop.permute.xlu0 %2395
        %v2397 = vrot.slane %v2390, 4
        %v2398 = vrot.slane %v2392, 4
        %v2399 = vrot.slane %v2394, 4
        %v2400 = vrot.slane %v2396, 4
        %v2401 = vsel %vm884, %v2390, %v2397
        %v2402 = vsel %vm884, %v2392, %v2398
        %v2403 = vsel %vm884, %v2394, %v2399
        %v2404 = vsel %vm884, %v2396, %v2400
        %2409 = vst.msk [vmem:[#allocation3 + $0x160] sm:$0xf] %vm1902, %v2401
        %2410 = vst.msk [vmem:[#allocation3 + $0x164] sm:$0xf] %vm1902, %v2402
        %2411 = vst.msk [vmem:[#allocation3 + $0x168] sm:$0xf] %vm1902, %v2403
        %2412 = vst.msk [vmem:[#allocation3 + $0x16c] sm:$0xf] %vm1902, %v2404
        %2413 = vrot.lane.b32.xlu0 %v1977, 61
        %v2414 = vpop.permute.xlu0 %2413
        %2415 = vrot.lane.b32.xlu0 %v1978, 61
        %v2416 = vpop.permute.xlu0 %2415
        %2417 = vrot.lane.b32.xlu0 %v1979, 61
        %v2418 = vpop.permute.xlu0 %2417
        %2419 = vrot.lane.b32.xlu0 %v1980, 61
        %v2420 = vpop.permute.xlu0 %2419
        %v2421 = vrot.slane %v2414, 4
        %v2422 = vrot.slane %v2416, 4
        %v2423 = vrot.slane %v2418, 4
        %v2424 = vrot.slane %v2420, 4
        %v2425 = vsel %vm909, %v2414, %v2421
        %v2426 = vsel %vm909, %v2416, %v2422
        %v2427 = vsel %vm909, %v2418, %v2423
        %v2428 = vsel %vm909, %v2420, %v2424
        %2433 = vst.msk [vmem:[#allocation3 + $0x170] sm:$0xf] %vm1902, %v2425
        %2434 = vst.msk [vmem:[#allocation3 + $0x174] sm:$0xf] %vm1902, %v2426
        %2435 = vst.msk [vmem:[#allocation3 + $0x178] sm:$0xf] %vm1902, %v2427
        %2436 = vst.msk [vmem:[#allocation3 + $0x17c] sm:$0xf] %vm1902, %v2428
        %2437 = vrot.lane.b32.xlu0 %v1977, 60
        %v2438 = vpop.permute.xlu0 %2437
        %2439 = vrot.lane.b32.xlu0 %v1978, 60
        %v2440 = vpop.permute.xlu0 %2439
        %2441 = vrot.lane.b32.xlu0 %v1979, 60
        %v2442 = vpop.permute.xlu0 %2441
        %2443 = vrot.lane.b32.xlu0 %v1980, 60
        %v2444 = vpop.permute.xlu0 %2443
        %v2445 = vrot.slane %v2438, 4
        %v2446 = vrot.slane %v2440, 4
        %v2447 = vrot.slane %v2442, 4
        %v2448 = vrot.slane %v2444, 4
        %v2449 = vsel %vm934, %v2438, %v2445
        %v2450 = vsel %vm934, %v2440, %v2446
        %v2451 = vsel %vm934, %v2442, %v2447
        %v2452 = vsel %vm934, %v2444, %v2448
        %2457 = vst.msk [vmem:[#allocation3 + $0x180] sm:$0xf] %vm1902, %v2449
        %2458 = vst.msk [vmem:[#allocation3 + $0x184] sm:$0xf] %vm1902, %v2450
        %2459 = vst.msk [vmem:[#allocation3 + $0x188] sm:$0xf] %vm1902, %v2451
        %2460 = vst.msk [vmem:[#allocation3 + $0x18c] sm:$0xf] %vm1902, %v2452
        %v2461 = vld [vmem:[#allocation7] sm:$0xff]
        %v2462 = vld [vmem:[#allocation7 + $0x8] sm:$0xff]
        %v2463 = vld [vmem:[#allocation7 + $0x10] sm:$0xff]
        %v2464 = vld [vmem:[#allocation7 + $0x18] sm:$0xf]
        %v2465 = vld [vmem:[#allocation7 + $0x1c] sm:$0xff]
        %v2466 = vld [vmem:[#allocation7 + $0x24] sm:$0xff]
        %v2467 = vld [vmem:[#allocation7 + $0x2c] sm:$0xff]
        %v2468 = vld [vmem:[#allocation7 + $0x34] sm:$0xf]
        %v2469 = vld [vmem:[#allocation7 + $0x38] sm:$0xff]
        %v2470 = vld [vmem:[#allocation7 + $0x40] sm:$0xff]
        %v2471 = vld [vmem:[#allocation7 + $0x48] sm:$0xff]
        %v2472 = vld [vmem:[#allocation7 + $0x50] sm:$0xf]
        %v2473 = vld [vmem:[#allocation7 + $0x54] sm:$0xff]
        %v2474 = vld [vmem:[#allocation7 + $0x5c] sm:$0xff]
        %v2475 = vld [vmem:[#allocation7 + $0x64] sm:$0xff]
        %v2476 = vld [vmem:[#allocation7 + $0x6c] sm:$0xf]
        %v2477 = vld [vmem:[#allocation3] sm:$0xf]
        %v2478 = vld [vmem:[#allocation3 + $0x4] sm:$0xf]
        %v2479 = vld [vmem:[#allocation3 + $0x8] sm:$0xf]
        %v2480 = vld [vmem:[#allocation3 + $0xc] sm:$0xf]
        %v2481 = vld [vmem:[#allocation3 + $0x10] sm:$0xf]
        %v2482 = vld [vmem:[#allocation3 + $0x14] sm:$0xf]
        %v2483 = vld [vmem:[#allocation3 + $0x18] sm:$0xf]
        %v2484 = vld [vmem:[#allocation3 + $0x1c] sm:$0xf]
        %v2485 = vld [vmem:[#allocation3 + $0x20] sm:$0xf]
        %v2486 = vld [vmem:[#allocation3 + $0x24] sm:$0xf]
        %v2487 = vld [vmem:[#allocation3 + $0x28] sm:$0xf]
        %v2488 = vld [vmem:[#allocation3 + $0x2c] sm:$0xf]
        %v2489 = vld [vmem:[#allocation3 + $0x30] sm:$0xf]
        %v2490 = vld [vmem:[#allocation3 + $0x34] sm:$0xf]
        %v2491 = vld [vmem:[#allocation3 + $0x38] sm:$0xf]
        %v2492 = vld [vmem:[#allocation3 + $0x3c] sm:$0xf]
        %v2493 = vld [vmem:[#allocation3 + $0x40] sm:$0xf]
        %v2494 = vld [vmem:[#allocation3 + $0x44] sm:$0xf]
        %v2495 = vld [vmem:[#allocation3 + $0x48] sm:$0xf]
        %v2496 = vld [vmem:[#allocation3 + $0x4c] sm:$0xf]
        %v2497 = vld [vmem:[#allocation3 + $0x50] sm:$0xf]
        %v2498 = vld [vmem:[#allocation3 + $0x54] sm:$0xf]
        %v2499 = vld [vmem:[#allocation3 + $0x58] sm:$0xf]
        %v2500 = vld [vmem:[#allocation3 + $0x5c] sm:$0xf]
        %v2501 = vld [vmem:[#allocation3 + $0x60] sm:$0xf]
        %v2502 = vld [vmem:[#allocation3 + $0x64] sm:$0xf]
        %v2503 = vld [vmem:[#allocation3 + $0x68] sm:$0xf]
        %v2504 = vld [vmem:[#allocation3 + $0x6c] sm:$0xf]
        %v2505 = vld [vmem:[#allocation3 + $0x70] sm:$0xf]
        %v2506 = vld [vmem:[#allocation3 + $0x74] sm:$0xf]
        %v2507 = vld [vmem:[#allocation3 + $0x78] sm:$0xf]
        %v2508 = vld [vmem:[#allocation3 + $0x7c] sm:$0xf]
        %v2509 = vld [vmem:[#allocation3 + $0x80] sm:$0xf]
        %v2510 = vld [vmem:[#allocation3 + $0x84] sm:$0xf]
        %v2511 = vld [vmem:[#allocation3 + $0x88] sm:$0xf]
        %v2512 = vld [vmem:[#allocation3 + $0x8c] sm:$0xf]
        %v2513 = vld [vmem:[#allocation3 + $0x90] sm:$0xf]
        %v2514 = vld [vmem:[#allocation3 + $0x94] sm:$0xf]
        %v2515 = vld [vmem:[#allocation3 + $0x98] sm:$0xf]
        %v2516 = vld [vmem:[#allocation3 + $0x9c] sm:$0xf]
        %v2517 = vld [vmem:[#allocation3 + $0xa0] sm:$0xf]
        %v2518 = vld [vmem:[#allocation3 + $0xa4] sm:$0xf]
        %v2519 = vld [vmem:[#allocation3 + $0xa8] sm:$0xf]
        %v2520 = vld [vmem:[#allocation3 + $0xac] sm:$0xf]
        %v2521 = vld [vmem:[#allocation3 + $0xb0] sm:$0xf]
        %v2522 = vld [vmem:[#allocation3 + $0xb4] sm:$0xf]
        %v2523 = vld [vmem:[#allocation3 + $0xb8] sm:$0xf]
        %v2524 = vld [vmem:[#allocation3 + $0xbc] sm:$0xf]
        %v2525 = vld [vmem:[#allocation3 + $0xc0] sm:$0xf]
        %v2526 = vld [vmem:[#allocation3 + $0xc4] sm:$0xf]
        %v2527 = vld [vmem:[#allocation3 + $0xc8] sm:$0xf]
        %v2528 = vld [vmem:[#allocation3 + $0xcc] sm:$0xf]
        %v2529 = vld [vmem:[#allocation3 + $0xd0] sm:$0xf]
        %v2530 = vld [vmem:[#allocation3 + $0xd4] sm:$0xf]
        %v2531 = vld [vmem:[#allocation3 + $0xd8] sm:$0xf]
        %v2532 = vld [vmem:[#allocation3 + $0xdc] sm:$0xf]
        %v2533 = vld [vmem:[#allocation3 + $0xe0] sm:$0xf]
        %v2534 = vld [vmem:[#allocation3 + $0xe4] sm:$0xf]
        %v2535 = vld [vmem:[#allocation3 + $0xe8] sm:$0xf]
        %v2536 = vld [vmem:[#allocation3 + $0xec] sm:$0xf]
        %v2537 = vld [vmem:[#allocation3 + $0xf0] sm:$0xf]
        %v2538 = vld [vmem:[#allocation3 + $0xf4] sm:$0xf]
        %v2539 = vld [vmem:[#allocation3 + $0xf8] sm:$0xf]
        %v2540 = vld [vmem:[#allocation3 + $0xfc] sm:$0xf]
        %v2541 = vld [vmem:[#allocation3 + $0x100] sm:$0xf]
        %v2542 = vld [vmem:[#allocation3 + $0x104] sm:$0xf]
        %v2543 = vld [vmem:[#allocation3 + $0x108] sm:$0xf]
        %v2544 = vld [vmem:[#allocation3 + $0x10c] sm:$0xf]
        %v2545 = vld [vmem:[#allocation3 + $0x110] sm:$0xf]
        %v2546 = vld [vmem:[#allocation3 + $0x114] sm:$0xf]
        %v2547 = vld [vmem:[#allocation3 + $0x118] sm:$0xf]
        %v2548 = vld [vmem:[#allocation3 + $0x11c] sm:$0xf]
        %v2549 = vld [vmem:[#allocation3 + $0x120] sm:$0xf]
        %v2550 = vld [vmem:[#allocation3 + $0x124] sm:$0xf]
        %v2551 = vld [vmem:[#allocation3 + $0x128] sm:$0xf]
        %v2552 = vld [vmem:[#allocation3 + $0x12c] sm:$0xf]
        %v2553 = vld [vmem:[#allocation3 + $0x130] sm:$0xf]
        %v2554 = vld [vmem:[#allocation3 + $0x134] sm:$0xf]
        %v2555 = vld [vmem:[#allocation3 + $0x138] sm:$0xf]
        %v2556 = vld [vmem:[#allocation3 + $0x13c] sm:$0xf]
        %v2557 = vld [vmem:[#allocation3 + $0x140] sm:$0xf]
        %v2558 = vld [vmem:[#allocation3 + $0x144] sm:$0xf]
        %v2559 = vld [vmem:[#allocation3 + $0x148] sm:$0xf]
        %v2560 = vld [vmem:[#allocation3 + $0x14c] sm:$0xf]
        %v2561 = vld [vmem:[#allocation3 + $0x150] sm:$0xf]
        %v2562 = vld [vmem:[#allocation3 + $0x154] sm:$0xf]
        %v2563 = vld [vmem:[#allocation3 + $0x158] sm:$0xf]
        %v2564 = vld [vmem:[#allocation3 + $0x15c] sm:$0xf]
        %v2565 = vld [vmem:[#allocation3 + $0x160] sm:$0xf]
        %v2566 = vld [vmem:[#allocation3 + $0x164] sm:$0xf]
        %v2567 = vld [vmem:[#allocation3 + $0x168] sm:$0xf]
        %v2568 = vld [vmem:[#allocation3 + $0x16c] sm:$0xf]
        %v2569 = vld [vmem:[#allocation3 + $0x170] sm:$0xf]
        %v2570 = vld [vmem:[#allocation3 + $0x174] sm:$0xf]
        %v2571 = vld [vmem:[#allocation3 + $0x178] sm:$0xf]
        %v2572 = vld [vmem:[#allocation3 + $0x17c] sm:$0xf]
        %v2573 = vld [vmem:[#allocation3 + $0x180] sm:$0xf]
        %v2574 = vld [vmem:[#allocation3 + $0x184] sm:$0xf]
        %v2575 = vld [vmem:[#allocation3 + $0x188] sm:$0xf]
        %v2576 = vld [vmem:[#allocation3 + $0x18c] sm:$0xf]
        %v2577 = vld [vmem:[%s4] sm:$0xff]
        %v2578 = vld [vmem:[%s4 + $0x8] sm:$0xff]
        %v2579 = vld [vmem:[%s4 + $0x10] sm:$0xff]
        %v2580 = vld [vmem:[%s4 + $0x18] sm:$0xff]
        %2582 = vset.pattern.permute.xlu0 0
        %2583 = vperm.xlu0 %2582, %v2577
        %v2584 = vpop.permute.xlu0 %2583
        %2587 = vset.pattern.permute.xlu0 0
        %2588 = vperm.xlu0 %2587, %v2578
        %v2589 = vpop.permute.xlu0 %2588
        %2592 = vset.pattern.permute.xlu0 0
        %2593 = vperm.xlu0 %2592, %v2579
        %v2594 = vpop.permute.xlu0 %2593
        %2597 = vset.pattern.permute.xlu0 0
        %2598 = vperm.xlu0 %2597, %v2580
        %v2599 = vpop.permute.xlu0 %2598
        %v2617 = vunpack.c.l.b16 %v2461
        %v2618 = vunpack.c.h.b16 %v2461
        %v2619 = vunpack.c.l.b16 %v2462
        %v2620 = vunpack.c.h.b16 %v2462
        %v2621 = vunpack.c.l.b16 %v2463
        %v2622 = vunpack.c.h.b16 %v2463
        %v2623 = vunpack.c.l.b16 %v2464
        %v2624 = vunpack.c.l.b16 %v2465
        %v2625 = vunpack.c.h.b16 %v2465
        %v2626 = vunpack.c.l.b16 %v2466
        %v2627 = vunpack.c.h.b16 %v2466
        %v2628 = vunpack.c.l.b16 %v2467
        %v2629 = vunpack.c.h.b16 %v2467
        %v2630 = vunpack.c.l.b16 %v2468
        %v2631 = vunpack.c.l.b16 %v2469
        %v2632 = vunpack.c.h.b16 %v2469
        %v2633 = vunpack.c.l.b16 %v2470
        %v2634 = vunpack.c.h.b16 %v2470
        %v2635 = vunpack.c.l.b16 %v2471
        %v2636 = vunpack.c.h.b16 %v2471
        %v2637 = vunpack.c.l.b16 %v2472
        %v2638 = vunpack.c.l.b16 %v2473
        %v2639 = vunpack.c.h.b16 %v2473
        %v2640 = vunpack.c.l.b16 %v2474
        %v2641 = vunpack.c.h.b16 %v2474
        %v2642 = vunpack.c.l.b16 %v2475
        %v2643 = vunpack.c.h.b16 %v2475
        %v2644 = vunpack.c.l.b16 %v2476
        %v2645 = vpack.c.b16 %v2624, %v2617
        %v2646 = vpack.c.b16 %v2625, %v2618
        %v2647 = vpack.c.b16 %v2626, %v2619
        %v2648 = vpack.c.b16 %v2627, %v2620
        %v2649 = vpack.c.b16 %v2628, %v2621
        %v2650 = vpack.c.b16 %v2629, %v2622
        %v2651 = vpack.c.b16 %v2630, %v2623
        %v2652 = vpack.c.b16 %v2638, %v2631
        %v2653 = vpack.c.b16 %v2639, %v2632
        %v2654 = vpack.c.b16 %v2640, %v2633
        %v2655 = vpack.c.b16 %v2641, %v2634
        %v2656 = vpack.c.b16 %v2642, %v2635
        %v2657 = vpack.c.b16 %v2643, %v2636
        %v2658 = vpack.c.b16 %v2644, %v2637
        %v2771 = vunpack.c.l.b16 %v2477
        %v2772 = vunpack.c.l.b16 %v2478
        %v2773 = vunpack.c.l.b16 %v2479
        %v2774 = vunpack.c.l.b16 %v2480
        %v2775 = vunpack.c.l.b16 %v2481
        %v2776 = vunpack.c.l.b16 %v2482
        %v2777 = vunpack.c.l.b16 %v2483
        %v2778 = vunpack.c.l.b16 %v2484
        %v2779 = vunpack.c.l.b16 %v2485
        %v2780 = vunpack.c.l.b16 %v2486
        %v2781 = vunpack.c.l.b16 %v2487
        %v2782 = vunpack.c.l.b16 %v2488
        %v2783 = vunpack.c.l.b16 %v2489
        %v2784 = vunpack.c.l.b16 %v2490
        %v2785 = vunpack.c.l.b16 %v2491
        %v2786 = vunpack.c.l.b16 %v2492
        %v2787 = vunpack.c.l.b16 %v2493
        %v2788 = vunpack.c.l.b16 %v2494
        %v2789 = vunpack.c.l.b16 %v2495
        %v2790 = vunpack.c.l.b16 %v2496
        %v2791 = vunpack.c.l.b16 %v2497
        %v2792 = vunpack.c.l.b16 %v2498
        %v2793 = vunpack.c.l.b16 %v2499
        %v2794 = vunpack.c.l.b16 %v2500
        %v2795 = vunpack.c.l.b16 %v2501
        %v2796 = vunpack.c.l.b16 %v2502
        %v2797 = vunpack.c.l.b16 %v2503
        %v2798 = vunpack.c.l.b16 %v2504
        %v2799 = vunpack.c.l.b16 %v2505
        %v2800 = vunpack.c.l.b16 %v2506
        %v2801 = vunpack.c.l.b16 %v2507
        %v2802 = vunpack.c.l.b16 %v2508
        %v2803 = vunpack.c.l.b16 %v2509
        %v2804 = vunpack.c.l.b16 %v2510
        %v2805 = vunpack.c.l.b16 %v2511
        %v2806 = vunpack.c.l.b16 %v2512
        %v2807 = vunpack.c.l.b16 %v2513
        %v2808 = vunpack.c.l.b16 %v2514
        %v2809 = vunpack.c.l.b16 %v2515
        %v2810 = vunpack.c.l.b16 %v2516
        %v2811 = vunpack.c.l.b16 %v2517
        %v2812 = vunpack.c.l.b16 %v2518
        %v2813 = vunpack.c.l.b16 %v2519
        %v2814 = vunpack.c.l.b16 %v2520
        %v2815 = vunpack.c.l.b16 %v2521
        %v2816 = vunpack.c.l.b16 %v2522
        %v2817 = vunpack.c.l.b16 %v2523
        %v2818 = vunpack.c.l.b16 %v2524
        %v2819 = vunpack.c.l.b16 %v2525
        %v2820 = vunpack.c.l.b16 %v2526
        %v2821 = vunpack.c.l.b16 %v2527
        %v2822 = vunpack.c.l.b16 %v2528
        %v2823 = vunpack.c.l.b16 %v2529
        %v2824 = vunpack.c.l.b16 %v2530
        %v2825 = vunpack.c.l.b16 %v2531
        %v2826 = vunpack.c.l.b16 %v2532
        %v2827 = vunpack.c.l.b16 %v2533
        %v2828 = vunpack.c.l.b16 %v2534
        %v2829 = vunpack.c.l.b16 %v2535
        %v2830 = vunpack.c.l.b16 %v2536
        %v2831 = vunpack.c.l.b16 %v2537
        %v2832 = vunpack.c.l.b16 %v2538
        %v2833 = vunpack.c.l.b16 %v2539
        %v2834 = vunpack.c.l.b16 %v2540
        %v2835 = vunpack.c.l.b16 %v2541
        %v2836 = vunpack.c.l.b16 %v2542
        %v2837 = vunpack.c.l.b16 %v2543
        %v2838 = vunpack.c.l.b16 %v2544
        %v2839 = vunpack.c.l.b16 %v2545
        %v2840 = vunpack.c.l.b16 %v2546
        %v2841 = vunpack.c.l.b16 %v2547
        %v2842 = vunpack.c.l.b16 %v2548
        %v2843 = vunpack.c.l.b16 %v2549
        %v2844 = vunpack.c.l.b16 %v2550
        %v2845 = vunpack.c.l.b16 %v2551
        %v2846 = vunpack.c.l.b16 %v2552
        %v2847 = vunpack.c.l.b16 %v2553
        %v2848 = vunpack.c.l.b16 %v2554
        %v2849 = vunpack.c.l.b16 %v2555
        %v2850 = vunpack.c.l.b16 %v2556
        %v2851 = vunpack.c.l.b16 %v2557
        %v2852 = vunpack.c.l.b16 %v2558
        %v2853 = vunpack.c.l.b16 %v2559
        %v2854 = vunpack.c.l.b16 %v2560
        %v2855 = vunpack.c.l.b16 %v2561
        %v2856 = vunpack.c.l.b16 %v2562
        %v2857 = vunpack.c.l.b16 %v2563
        %v2858 = vunpack.c.l.b16 %v2564
        %v2859 = vunpack.c.l.b16 %v2565
        %v2860 = vunpack.c.l.b16 %v2566
        %v2861 = vunpack.c.l.b16 %v2567
        %v2862 = vunpack.c.l.b16 %v2568
        %v2863 = vunpack.c.l.b16 %v2569
        %v2864 = vunpack.c.l.b16 %v2570
        %v2865 = vunpack.c.l.b16 %v2571
        %v2866 = vunpack.c.l.b16 %v2572
        %v2867 = vunpack.c.l.b16 %v2573
        %v2868 = vunpack.c.l.b16 %v2574
        %v2869 = vunpack.c.l.b16 %v2575
        %v2870 = vunpack.c.l.b16 %v2576
        %v2871 = vpack.c.b16 %v2772, %v2771
        %v2872 = vpack.c.b16 %v2774, %v2773
        %v2873 = vpack.c.b16 %v2776, %v2775
        %v2874 = vpack.c.b16 %v2778, %v2777
        %v2875 = vpack.c.b16 %v2780, %v2779
        %v2876 = vpack.c.b16 %v2782, %v2781
        %v2877 = vpack.c.b16 %v2784, %v2783
        %v2878 = vpack.c.b16 %v2786, %v2785
        %v2879 = vpack.c.b16 %v2788, %v2787
        %v2880 = vpack.c.b16 %v2790, %v2789
        %v2881 = vpack.c.b16 %v2792, %v2791
        %v2882 = vpack.c.b16 %v2794, %v2793
        %v2883 = vpack.c.b16 %v2796, %v2795
        %v2884 = vpack.c.b16 %v2798, %v2797
        %v2885 = vpack.c.b16 %v2800, %v2799
        %v2886 = vpack.c.b16 %v2802, %v2801
        %v2887 = vpack.c.b16 %v2804, %v2803
        %v2888 = vpack.c.b16 %v2806, %v2805
        %v2889 = vpack.c.b16 %v2808, %v2807
        %v2890 = vpack.c.b16 %v2810, %v2809
        %v2891 = vpack.c.b16 %v2812, %v2811
        %v2892 = vpack.c.b16 %v2814, %v2813
        %v2893 = vpack.c.b16 %v2816, %v2815
        %v2894 = vpack.c.b16 %v2818, %v2817
        %v2895 = vpack.c.b16 %v2820, %v2819
        %v2896 = vpack.c.b16 %v2822, %v2821
        %v2897 = vpack.c.b16 %v2824, %v2823
        %v2898 = vpack.c.b16 %v2826, %v2825
        %v2899 = vpack.c.b16 %v2828, %v2827
        %v2900 = vpack.c.b16 %v2830, %v2829
        %v2901 = vpack.c.b16 %v2832, %v2831
        %v2902 = vpack.c.b16 %v2834, %v2833
        %v2903 = vpack.c.b16 %v2836, %v2835
        %v2904 = vpack.c.b16 %v2838, %v2837
        %v2905 = vpack.c.b16 %v2840, %v2839
        %v2906 = vpack.c.b16 %v2842, %v2841
        %v2907 = vpack.c.b16 %v2844, %v2843
        %v2908 = vpack.c.b16 %v2846, %v2845
        %v2909 = vpack.c.b16 %v2848, %v2847
        %v2910 = vpack.c.b16 %v2850, %v2849
        %v2911 = vpack.c.b16 %v2852, %v2851
        %v2912 = vpack.c.b16 %v2854, %v2853
        %v2913 = vpack.c.b16 %v2856, %v2855
        %v2914 = vpack.c.b16 %v2858, %v2857
        %v2915 = vpack.c.b16 %v2860, %v2859
        %v2916 = vpack.c.b16 %v2862, %v2861
        %v2917 = vpack.c.b16 %v2864, %v2863
        %v2918 = vpack.c.b16 %v2866, %v2865
        %v2919 = vpack.c.b16 %v2868, %v2867
        %v2920 = vpack.c.b16 %v2870, %v2869
        %v2972 = vsel %vm1657, %v2651, 0
        %v2975 = vsel %vm1657, %v2658, 0
        %2977 = vmatprep.subr.bf16.mxu0 0
        %2978 = vmatpush1.bf16.msra.mxu0 %v2878
        %2979 = vmatprep.subr.bf16.mxu0 0
        %2980 = vmatpush1.bf16.msra.mxu0 %v2877
        %2981 = vmatprep.subr.bf16.mxu0 0
        %2982 = vmatpush1.bf16.msra.mxu0 %v2876
        %2983 = vmatprep.subr.bf16.mxu0 0
        %2984 = vmatpush1.bf16.msra.mxu0 %v2875
        %2985 = vmatprep.subr.bf16.mxu0 0
        %2986 = vmatpush1.bf16.msra.mxu0 %v2874
        %2987 = vmatprep.subr.bf16.mxu0 0
        %2988 = vmatpush1.bf16.msra.mxu0 %v2873
        %2989 = vmatprep.subr.bf16.mxu0 0
        %2990 = vmatpush1.bf16.msra.mxu0 %v2872
        %2991 = vmatprep.subr.bf16.mxu0 0
        %2992 = vmatpush1.bf16.msra.mxu0 %v2871
        %2993 = vmatprep.subr.bf16.mxu0 0
        %2994 = vmatpush2.bf16.msra.mxu0 %v2886
        %2995 = vmatprep.subr.bf16.mxu0 0
        %2996 = vmatpush2.bf16.msra.mxu0 %v2885
        %2997 = vmatprep.subr.bf16.mxu0 0
        %2998 = vmatpush2.bf16.msra.mxu0 %v2884
        %2999 = vmatprep.subr.bf16.mxu0 0
        %3000 = vmatpush2.bf16.msra.mxu0 %v2883
        %3001 = vmatprep.subr.bf16.mxu0 0
        %3002 = vmatpush2.bf16.msra.mxu0 %v2882
        %3003 = vmatprep.subr.bf16.mxu0 0
        %3004 = vmatpush2.bf16.msra.mxu0 %v2881
        %3005 = vmatprep.subr.bf16.mxu0 0
        %3006 = vmatpush2.bf16.msra.mxu0 %v2880
        %3007 = vmatprep.subr.bf16.mxu0 0
        %3008 = vmatpush2.bf16.msra.mxu0 %v2879
        %3009 = vmatprep.mubr.bf16.mxu0 %v2646
        %3010 = vmatmul.mubr.bf16.gmra.mxu0 %v2645
        %v3011 = vpop.f32.mrf.mxu0
        %v3012 = vadd.f32 %v2584, %v3011
        %v3013 = vpop.f32.mrf.mxu0
        %v3014 = vpop.f32.mrf.mxu0
        %v3015 = vadd.f32 %v2589, %v3014
        %v3016 = vpop.f32.mrf.mxu0
        %3017 = vmatprep.mubr.bf16.mxu0 %v2653
        %3018 = vmatmul.mubr.bf16.gmra.mxu0 %v2652
        %v3019 = vpop.f32.mrf.mxu0
        %v3020 = vadd.f32 %v2594, %v3019
        %v3021 = vpop.f32.mrf.mxu0
        %v3022 = vpop.f32.mrf.mxu0
        %v3023 = vadd.f32 %v2599, %v3022
        %v3024 = vpop.f32.mrf.mxu0
        %3025 = vdwg.mxu0
        %3026 = vmatprep.subr.bf16.mxu0 0
        %3027 = vmatpush1.bf16.msra.mxu0 %v2894
        %3028 = vmatprep.subr.bf16.mxu0 0
        %3029 = vmatpush1.bf16.msra.mxu0 %v2893
        %3030 = vmatprep.subr.bf16.mxu0 0
        %3031 = vmatpush1.bf16.msra.mxu0 %v2892
        %3032 = vmatprep.subr.bf16.mxu0 0
        %3033 = vmatpush1.bf16.msra.mxu0 %v2891
        %3034 = vmatprep.subr.bf16.mxu0 0
        %3035 = vmatpush1.bf16.msra.mxu0 %v2890
        %3036 = vmatprep.subr.bf16.mxu0 0
        %3037 = vmatpush1.bf16.msra.mxu0 %v2889
        %3038 = vmatprep.subr.bf16.mxu0 0
        %3039 = vmatpush1.bf16.msra.mxu0 %v2888
        %3040 = vmatprep.subr.bf16.mxu0 0
        %3041 = vmatpush1.bf16.msra.mxu0 %v2887
        %3042 = vmatprep.subr.bf16.mxu0 0
        %3043 = vmatpush2.bf16.msra.mxu0 %v2902
        %3044 = vmatprep.subr.bf16.mxu0 0
        %3045 = vmatpush2.bf16.msra.mxu0 %v2901
        %3046 = vmatprep.subr.bf16.mxu0 0
        %3047 = vmatpush2.bf16.msra.mxu0 %v2900
        %3048 = vmatprep.subr.bf16.mxu0 0
        %3049 = vmatpush2.bf16.msra.mxu0 %v2899
        %3050 = vmatprep.subr.bf16.mxu0 0
        %3051 = vmatpush2.bf16.msra.mxu0 %v2898
        %3052 = vmatprep.subr.bf16.mxu0 0
        %3053 = vmatpush2.bf16.msra.mxu0 %v2897
        %3054 = vmatprep.subr.bf16.mxu0 0
        %3055 = vmatpush2.bf16.msra.mxu0 %v2896
        %3056 = vmatprep.subr.bf16.mxu0 0
        %3057 = vmatpush2.bf16.msra.mxu0 %v2895
        %3058 = vmatprep.mubr.bf16.mxu0 %v2648
        %3059 = vmatmul.mubr.bf16.gmra.mxu0 %v2647
        %v3060 = vpop.f32.mrf.mxu0
        %v3061 = vadd.f32 %v3012, %v3060
        %v3062 = vpop.f32.mrf.mxu0
        %v3063 = vpop.f32.mrf.mxu0
        %v3064 = vadd.f32 %v3015, %v3063
        %v3065 = vpop.f32.mrf.mxu0
        %3066 = vmatprep.mubr.bf16.mxu0 %v2655
        %3067 = vmatmul.mubr.bf16.gmra.mxu0 %v2654
        %v3068 = vpop.f32.mrf.mxu0
        %v3069 = vadd.f32 %v3020, %v3068
        %v3070 = vpop.f32.mrf.mxu0
        %v3071 = vpop.f32.mrf.mxu0
        %v3072 = vadd.f32 %v3023, %v3071
        %v3073 = vpop.f32.mrf.mxu0
        %3074 = vdwg.mxu0
        %3075 = vmatprep.subr.bf16.mxu0 0
        %3076 = vmatpush1.bf16.msra.mxu0 %v2910
        %3077 = vmatprep.subr.bf16.mxu0 0
        %3078 = vmatpush1.bf16.msra.mxu0 %v2909
        %3079 = vmatprep.subr.bf16.mxu0 0
        %3080 = vmatpush1.bf16.msra.mxu0 %v2908
        %3081 = vmatprep.subr.bf16.mxu0 0
        %3082 = vmatpush1.bf16.msra.mxu0 %v2907
        %3083 = vmatprep.subr.bf16.mxu0 0
        %3084 = vmatpush1.bf16.msra.mxu0 %v2906
        %3085 = vmatprep.subr.bf16.mxu0 0
        %3086 = vmatpush1.bf16.msra.mxu0 %v2905
        %3087 = vmatprep.subr.bf16.mxu0 0
        %3088 = vmatpush1.bf16.msra.mxu0 %v2904
        %3089 = vmatprep.subr.bf16.mxu0 0
        %3090 = vmatpush1.bf16.msra.mxu0 %v2903
        %3091 = vmatprep.subr.bf16.mxu0 0
        %3092 = vmatpush2.bf16.msra.mxu0 %v2918
        %3093 = vmatprep.subr.bf16.mxu0 0
        %3094 = vmatpush2.bf16.msra.mxu0 %v2917
        %3095 = vmatprep.subr.bf16.mxu0 0
        %3096 = vmatpush2.bf16.msra.mxu0 %v2916
        %3097 = vmatprep.subr.bf16.mxu0 0
        %3098 = vmatpush2.bf16.msra.mxu0 %v2915
        %3099 = vmatprep.subr.bf16.mxu0 0
        %3100 = vmatpush2.bf16.msra.mxu0 %v2914
        %3101 = vmatprep.subr.bf16.mxu0 0
        %3102 = vmatpush2.bf16.msra.mxu0 %v2913
        %3103 = vmatprep.subr.bf16.mxu0 0
        %3104 = vmatpush2.bf16.msra.mxu0 %v2912
        %3105 = vmatprep.subr.bf16.mxu0 0
        %3106 = vmatpush2.bf16.msra.mxu0 %v2911
        %3107 = vmatprep.mubr.bf16.mxu0 %v2650
        %3108 = vmatmul.mubr.bf16.gmra.mxu0 %v2649
        %v3109 = vpop.f32.mrf.mxu0
        %v3110 = vadd.f32 %v3061, %v3109
        %v3111 = vpop.f32.mrf.mxu0
        %v3112 = vpop.f32.mrf.mxu0
        %v3113 = vadd.f32 %v3064, %v3112
        %v3114 = vpop.f32.mrf.mxu0
        %3115 = vmatprep.mubr.bf16.mxu0 %v2657
        %3116 = vmatmul.mubr.bf16.gmra.mxu0 %v2656
        %v3117 = vpop.f32.mrf.mxu0
        %v3118 = vadd.f32 %v3069, %v3117
        %v3119 = vpop.f32.mrf.mxu0
        %v3120 = vpop.f32.mrf.mxu0
        %v3121 = vadd.f32 %v3072, %v3120
        %v3122 = vpop.f32.mrf.mxu0
        %3123 = vdwg.mxu0
        %3124 = vmatprep.subr.bf16.mxu0 0
        %3125 = vmatpush1.bf16.msra.mxu0 0
        %3126 = vmatprep.subr.bf16.mxu0 0
        %3127 = vmatpush1.bf16.msra.mxu0 0
        %3128 = vmatprep.subr.bf16.mxu0 0
        %3129 = vmatpush1.bf16.msra.mxu0 0
        %3130 = vmatprep.subr.bf16.mxu0 0
        %3131 = vmatpush1.bf16.msra.mxu0 0
        %3132 = vmatprep.subr.bf16.mxu0 0
        %3133 = vmatpush1.bf16.msra.mxu0 0
        %3134 = vmatprep.subr.bf16.mxu0 0
        %3135 = vmatpush1.bf16.msra.mxu0 0
        %3136 = vmatprep.subr.bf16.mxu0 0
        %3137 = vmatpush1.bf16.msra.mxu0 %v2920
        %3138 = vmatprep.subr.bf16.mxu0 0
        %3139 = vmatpush1.bf16.msra.mxu0 %v2919
        %3140 = vmatprep.subr.bf16.mxu0 0
        %3141 = vmatpush2.bf16.msra.mxu0 0
        %3142 = vmatprep.subr.bf16.mxu0 0
        %3143 = vmatpush2.bf16.msra.mxu0 0
        %3144 = vmatprep.subr.bf16.mxu0 0
        %3145 = vmatpush2.bf16.msra.mxu0 0
        %3146 = vmatprep.subr.bf16.mxu0 0
        %3147 = vmatpush2.bf16.msra.mxu0 0
        %3148 = vmatprep.subr.bf16.mxu0 0
        %3149 = vmatpush2.bf16.msra.mxu0 0
        %3150 = vmatprep.subr.bf16.mxu0 0
        %3151 = vmatpush2.bf16.msra.mxu0 0
        %3152 = vmatprep.subr.bf16.mxu0 0
        %3153 = vmatpush2.bf16.msra.mxu0 0
        %3154 = vmatprep.subr.bf16.mxu0 0
        %3155 = vmatpush2.bf16.msra.mxu0 0
        %3156 = vmatprep.mubr.bf16.mxu0 0
        %3157 = vmatmul.mubr.bf16.gmra.mxu0 %v2972
        %v3158 = vpop.f32.mrf.mxu0
        %v3159 = vadd.f32 %v3110, %v3158
        %v3160 = vpop.f32.mrf.mxu0
        %v3161 = vpop.f32.mrf.mxu0
        %v3162 = vadd.f32 %v3113, %v3161
        %v3163 = vpop.f32.mrf.mxu0
        %3164 = vmatprep.mubr.bf16.mxu0 0
        %3165 = vmatmul.mubr.bf16.gmra.mxu0 %v2975
        %v3166 = vpop.f32.mrf.mxu0
        %v3167 = vadd.f32 %v3118, %v3166
        %v3168 = vpop.f32.mrf.mxu0
        %v3169 = vpop.f32.mrf.mxu0
        %v3170 = vadd.f32 %v3121, %v3169
        %v3171 = vpop.f32.mrf.mxu0
        %3172 = vdwg.mxu0
        %v3173 = vlaneseq
        %v3174 = vand.u32 %v3173, 127
        %vm3175 = vcmp.lt.s32.totalorder %v3174, 0
        %v3176 = vsub.s32 0, %v3174
        %v3177 = vsel %vm3175, %v3176, %v3174
        %v3178 = vshrl.u32 %v3177, 4
        %v3179 = vand.u32 %v3177, 15
        %v3180 = vsub.s32 0, %v3179
        %v3181 = vsel %vm3175, %v3180, %v3179
        %vm3182 = vcmp.ne.s32.totalorder %v3181, 0
        %vm3183 = vcmp.lt.s32.totalorder %v3181, 0
        %vm3184 = vmand %vm3183, %vm3182
        %v3185 = vadd.s32 %v3181, 16
        %v3186 = vsel %vm3184, %v3185, %v3181
        %vm3187 = vcmp.lt.s32.totalorder %v3186, 8
        %v3188 = vsel %vm3187, 1, 0
        %vm3189 = vcmp.eq.s32.totalorder %v3188, 1
        %v3190 = vsel %vm3189, %v3159, 0.0
        %v3191 = vsel %vm3189, %v3162, 0.0
        %v3192 = vsel %vm3189, %v3167, 0.0
        %v3193 = vsel %vm3189, %v3170, 0.0
        %vm3194 = vcmask 982016
        %v3195 = vsel %vm3194, %v3190, 0.0
        %3196 = vadd.xlane.f32.xlu0 %v3195
        %v3197 = vpop.xlane.xlu0 %3196
        %v3198 = vsel %vm3194, %v3191, 0.0
        %3199 = vadd.xlane.f32.xlu0 %v3198
        %v3200 = vpop.xlane.xlu0 %3199
        %v3201 = vsel %vm3194, %v3192, 0.0
        %3202 = vadd.xlane.f32.xlu0 %v3201
        %v3203 = vpop.xlane.xlu0 %3202
        %v3204 = vsel %vm3194, %v3193, 0.0
        %3205 = vadd.xlane.f32.xlu0 %v3204
        %v3206 = vpop.xlane.xlu0 %3205
        %v3207 = vmul.f32 %v3197, 0.015625
        %v3208 = vmul.f32 %v3200, 0.015625
        %v3209 = vmul.f32 %v3203, 0.015625
        %v3210 = vmul.f32 %v3206, 0.015625
        %v3211 = vld [vmem:[%s5] sm:$0xff]
        %v3212 = vld [vmem:[%s5 + $0x8] sm:$0xff]
        %v3213 = vld [vmem:[%s5 + $0x10] sm:$0xff]
        %v3214 = vld [vmem:[%s5 + $0x18] sm:$0xff]
        %v3215 = vmul.f32 %v3211, %v3207
        %v3216 = vmul.f32 %v3212, %v3208
        %v3217 = vmul.f32 %v3213, %v3209
        %v3218 = vmul.f32 %v3214, %v3210
        %vm3219 = vcmask 15360
        %v3220 = vsel %vm3219, %v3215, 0.0
        %v3221 = vsel %vm3219, %v3216, 0.0
        %v3222 = vadd.f32 %v3220, %v3221
        %v3223 = vsel %vm3219, %v3217, 0.0
        %v3224 = vadd.f32 %v3222, %v3223
        %v3225 = vsel %vm3219, %v3218, 0.0
        %v3226 = vadd.f32 %v3224, %v3225
        %v3227 = vrot.slane %v3226, 4
        %v3228 = vadd.f32 %v3226, %v3227
        %v3229 = vrot.slane %v3228, 2
        %v3230 = vadd.f32 %v3228, %v3229
        %v3231 = vrot.slane %v3230, 1
        %v3232 = vadd.f32 %v3230, %v3231
        %v3233 = vmax.f32 %v3232, 0.0
        %v3234 = vld [vmem:[%s6] sm:$0xff]
        %v3235 = vld [vmem:[%s6 + $0x8] sm:$0xff]
        %v3236 = vld [vmem:[%s6 + $0x10] sm:$0xff]
        %v3237 = vld [vmem:[%s6 + $0x18] sm:$0xff]
        %v3238 = vmul.f32 %v3234, %v3233
        %v3239 = vmul.f32 %v3235, %v3233
        %v3240 = vmul.f32 %v3236, %v3233
        %v3241 = vmul.f32 %v3237, %v3233
        %v3242 = vsel %vm3219, %v3238, 0.0
        %3243 = vadd.xlane.f32.xlu0 %v3242
        %v3244 = vpop.xlane.xlu0 %3243
        %v3245 = vsel %vm3219, %v3239, 0.0
        %3246 = vadd.xlane.f32.xlu0 %v3245
        %v3247 = vpop.xlane.xlu0 %3246
        %v3248 = vsel %vm3219, %v3240, 0.0
        %3249 = vadd.xlane.f32.xlu0 %v3248
        %v3250 = vpop.xlane.xlu0 %3249
        %v3251 = vsel %vm3219, %v3241, 0.0
        %3252 = vadd.xlane.f32.xlu0 %v3251
        %v3253 = vpop.xlane.xlu0 %3252
        %v3254 = vxor.u32 %v3244, 2147483648
        %v3255 = vxor.u32 %v3247, 2147483648
        %v3256 = vxor.u32 %v3250, 2147483648
        %v3257 = vxor.u32 %v3253, 2147483648
        %v3258 = vmul.f32 %v3254, 1.442695
        %v3259 = vpow.pop %v3258
        %v3260 = vmul.f32 %v3255, 1.442695
        %v3261 = vpow.pop %v3260
        %v3262 = vmul.f32 %v3256, 1.442695
        %v3263 = vpow.pop %v3262
        %v3264 = vmul.f32 %v3257, 1.442695
        %v3265 = vpow.pop %v3264
        %v3266 = vadd.f32 %v3259, 1.0
        %v3267 = vadd.f32 %v3261, 1.0
        %v3268 = vadd.f32 %v3263, 1.0
        %v3269 = vadd.f32 %v3265, 1.0
        %v3270 = vrcp.pop %v3266
        %v3271 = vmul.f32 1.0, %v3270
        %v3272 = vrcp.pop %v3267
        %v3273 = vmul.f32 1.0, %v3272
        %v3274 = vrcp.pop %v3268
        %v3275 = vmul.f32 1.0, %v3274
        %v3276 = vrcp.pop %v3269
        %v3277 = vmul.f32 1.0, %v3276
        %v3278 = vmul.f32 %v308, %v3271
        %v3279 = vmul.f32 %v309, %v3271
        %v3280 = vmul.f32 %v310, %v3273
        %v3281 = vmul.f32 %v311, %v3273
        %v3282 = vmul.f32 %v312, %v3275
        %v3283 = vmul.f32 %v313, %v3275
        %v3284 = vmul.f32 %v314, %v3277
        %v3285 = vmul.f32 %v315, %v3277
        %3286 = vst [vmem:[%s301] sm:$0xff] %v3278
        %3287 = vst [vmem:[%s301 + $0x8] sm:$0xff] %v3279
        %3288 = vst [vmem:[%s301 + $0x10] sm:$0xff] %v3280
        %3289 = vst [vmem:[%s301 + $0x18] sm:$0xff] %v3281
        %3290 = vst [vmem:[%s301 + $0x20] sm:$0xff] %v3282
        %3291 = vst [vmem:[%s301 + $0x28] sm:$0xff] %v3283
        %3292 = vst [vmem:[%s301 + $0x30] sm:$0xff] %v3284
        %3293 = vst [vmem:[%s301 + $0x38] sm:$0xff] %v3285
        %s3294 = sand.u32 %s183, 1
        %s3295 = scalar_lea.sflag [#allocation6], %s3294
        %s3296 = sand.u32 %s183, 1
        %s3297 = smul.addr %s3296, 64
        %s3298 = scalar_lea.vmem [#allocation9], %s3297
        // Predicated region
        $region57: #{tpu_custom_call.1} parent=47 // pred_check
          %p3299 = pneg %p193
        $region58: #{tpu_custom_call.1} parent=47 // pred_check_branch
          %3301 = sbr.rel (%p3299) target = $region60
        $region59: #{tpu_custom_call.1} parent=47 // pred_region
          %s3303 = ssub.s32 1024, 1024
          %3304 = vsyncadd %s3295, %s3303
          %s3305 = smul.addr %s23, 8
          %s3306 = smul.addr %s3305, 128
          %s3307 = scalar_lea.hbm %s7, %s3306
          %s3308 = sshll.u32 %s3298, 4
          %s3309 = int_to_ptr.vmem [resolvable:$true] %s3308
          %3314 = dma.vmem_to_hbm [thread:$0]  %s3309, 1024, %s3307, %s3295, 256, 256, 16
        $region60: #{tpu_custom_call.1} parent=47 // pred_fallthru
          _
      $region48: #{tpu_custom_call.1} parent=5 // pred_fallthru
        _
      %p3315 = scmp.le.s32.totalorder 2, %s18
      // Predicated region
      $region61: #{tpu_custom_call.1} parent=5 // pred_check
        %p3316 = pneg %p3315
      $region62: #{tpu_custom_call.1} parent=5 // pred_check_branch
        %3318 = sbr.rel (%p3316) target = $region64
      $region63: #{tpu_custom_call.1} parent=5 // pred_region
        %s3319 = ssub.s32 %s18, 2
        // Predicated region
        $region65: #{tpu_custom_call.1} parent=63 // pred_check
          %p3320 = pneg %p199
        $region66: #{tpu_custom_call.1} parent=63 // pred_check_branch
          %3322 = sbr.rel (%p3320) target = $region68
        $region67: #{tpu_custom_call.1} parent=63 // pred_region
          %s3323 = sand.u32 %s184, 1
          %s3324 = scalar_lea.sflag [#allocation6], %s3323
          %s3325 = sand.u32 %s184, 1
          %s3326 = smul.addr %s3325, 64
          %s3327 = scalar_lea.vmem [#allocation9], %s3326
          %3328 = dma.done %s3324, 1024
        $region68: #{tpu_custom_call.1} parent=63 // pred_fallthru
          _
      $region64: #{tpu_custom_call.1} parent=5 // pred_fallthru
        _
    $region6: #{tpu_custom_call.1} parent=1 // loop_footer
      %s22 = sadd.s32 1, %s18
    $region7: #{tpu_custom_call.1} parent=1 // loop_footer_branch
      %17 = sbr.rel target = $region3
    $region8: #{tpu_custom_call.1} parent=1 // loop_exit
      _
    %3329 = vsyncpa [#allocation5], 1
    %s3330 = scalar_lea.sflag [#allocation5], 1
    %3331 = vsyncpa %s3330, 1
    %3332 = vsyncpa [#allocation8], 1
    %3333 = vsyncpa [#allocation6], 1
    %s3334 = scalar_lea.sflag [#allocation6], 1
    %3335 = vsyncpa %s3334, 1

</llo_original>
